<compile_context>
chip_gen: v7x
topology: tpu7x:2x2x1
jax: 0.10.0
libtpu: 0.0.40
codegen_flags: <defaults>
</compile_context>

<pallas_src>
import functools

import numpy as np

import jax
import jax.numpy as jnp
from jax import lax
from jax.experimental import pallas as pl
from jax.experimental.pallas import tpu as pltpu

START_TAG = "<START>"
STOP_TAG = "<STOP>"


def birnn_crf_kernel(start_idx,
                     x_ref, wih_ref, whh_ref, bias_ref, h0_ref,
                     wtag_ref, btag_ref, trans_ref, tstop_ref,
                     feats_ref, score_ref, path_ref):
    T, Bt, E = x_ref.shape
    H2 = whh_ref.shape[0]                # 2 * Hh
    Hh = H2 // 2
    NTAG = trans_ref.shape[0]
    f32 = jnp.float32

    # ---------------- hoisted loop-invariant loads / constants ----------------
    wih = wih_ref[...]                                   # (E, 2Hh)   [fwd | bwd]
    whh = whh_ref[...]                                   # (2Hh, 2Hh) block-diagonal
    bias = bias_ref[...]                                 # (1, 2Hh)
    wtag = wtag_ref[...]                                 # (2Hh, NTAG)
    btag = btag_ref[...]                                 # (1, NTAG)
    trans = trans_ref[...]                               # (NTAG, NTAG)  trans[nt, prev]
    tstop = tstop_ref[...]                               # (1, NTAG)

    lane_h = lax.broadcasted_iota(jnp.int32, (1, H2), 1)
    fwd_mask = jnp.broadcast_to(lane_h < Hh, (Bt, H2))   # first Hh lanes = forward dir
    lane_n = lax.broadcasted_iota(jnp.int32, (Bt, NTAG), 1)
    lane_t = lax.broadcasted_iota(jnp.int32, (Bt, T), 1)
    big_idx = jnp.full((Bt, NTAG), NTAG, jnp.int32)
    zero_f = jnp.zeros((Bt, NTAG), f32)
    zero_i = jnp.zeros((Bt, NTAG), jnp.int32)
    zero_ti = jnp.zeros((Bt, T), jnp.int32)
    neg_inf = jnp.full((Bt, NTAG), -10000.0, f32)
    tag_masks = [lane_n == nt for nt in range(NTAG)]
    col_masks = [lane_t == t for t in range(T)]
    # per-tag transition rows, pre-broadcast across the batch sublanes (hoisted)
    trows = [jnp.broadcast_to(trans[nt:nt + 1, :], (Bt, NTAG)) for nt in range(NTAG)]

    # ------------- hoisted input projection: ONE MXU matmul for all steps & dirs -------------
    x_all = jnp.concatenate([x_ref[t] for t in range(T)], axis=0)           # (T*Bt, E)
    pre = jnp.dot(x_all, wih, preferred_element_type=f32) + bias            # (T*Bt, 2Hh)
    pre_t = [pre[s * Bt:(s + 1) * Bt, :] for s in range(T)]                 # aligned slices

    # ------------- fused bidirectional vanilla RNN (tanh), batch on sublanes -------------
    h = jnp.broadcast_to(h0_ref[...], (Bt, H2))          # [h0_f | h0_b] shared by all sentences
    hs = []
    for s in range(T):                                   # fully unrolled, T static & small
        # fwd half consumes timestep s, bwd half consumes timestep T-1-s
        xrow = jnp.where(fwd_mask, pre_t[s], pre_t[T - 1 - s])
        # TODO(synk): relies on Mosaic keeping the loop-invariant Whh staged in the MXU;
        # not hand-driven via pltpu.matmul_push_rhs / matmul_acc_lhs.
        h = jnp.tanh(xrow + jnp.dot(h, whh, preferred_element_type=f32))
        hs.append(h)                                     # hidden states stay in vregs

    # ------------- hidden2tag: ONE fused (T*Bt, 2Hh) @ (2Hh, NTAG) emission matmul -------------
    # output position t = [h_f(t) | h_b(t)]; h_b(t) was produced at loop step T-1-t.
    act = [jnp.where(fwd_mask, hs[t], hs[T - 1 - t]) for t in range(T)]
    act_all = jnp.concatenate(act, axis=0)                                  # (T*Bt, 2Hh)
    feats_all = jnp.dot(act_all, wtag, preferred_element_type=f32) + btag   # (T*Bt, NTAG)
    feats_t = []
    for t in range(T):
        ft = feats_all[t * Bt:(t + 1) * Bt, :]
        feats_t.append(ft)
        feats_ref[t] = ft

    # ------------- Viterbi forward pass (batched on sublanes, lane-only reductions) -------------
    fvar = jnp.where(tag_masks[start_idx], zero_f, neg_inf)                 # (Bt, NTAG)
    bp_rows = []
    for t in range(T):                                   # fully unrolled
        vrow = zero_f
        brow = zero_i
        for nt in range(NTAG):                           # NTAG static & tiny
            cand = fvar + trows[nt]                                         # (Bt, NTAG)
            m = jnp.max(cand, axis=1, keepdims=True)                        # (Bt, 1)
            bp = jnp.min(jnp.where(cand == m, lane_n, big_idx),
                         axis=1, keepdims=True)                             # first argmax
            vrow = jnp.where(tag_masks[nt], m, vrow)
            brow = jnp.where(tag_masks[nt], bp, brow)
        fvar = vrow + feats_t[t]
        bp_rows.append(brow)

    term = fvar + tstop                                                     # (Bt, NTAG)
    best_score = jnp.max(term, axis=1, keepdims=True)                       # (Bt, 1)
    best = jnp.min(jnp.where(term == best_score, lane_n, big_idx),
                   axis=1, keepdims=True)                                   # (Bt, 1) int32
    score_ref[...] = best_score

    # ------------- backtrace (vectorized over the whole batch tile) -------------
    # TODO(synk): no in-kernel equivalent of the module's `assert start == START_TAG`;
    # it is verified host-side against the reference Viterbi.
    path_mat = jnp.where(col_masks[T - 1], best, zero_ti)
    for t in range(T - 1, 0, -1):
        prev = jnp.sum(jnp.where(lane_n == best, bp_rows[t], zero_i),
                       axis=1, keepdims=True)                               # (Bt, 1)
        path_mat = jnp.where(col_masks[t - 1], prev, path_mat)
        best = prev
    path_ref[...] = path_mat


def make_params(key, vocab_size, embedding_dim, hidden_dim, ntag, start_idx, stop_idx):
    Hh = hidden_dim // 2
    ks = jax.random.split(key, 13)
    k = 1.0 / np.sqrt(Hh)

    def u(kk, shape):
        return jax.random.uniform(kk, shape, jnp.float32, -k, k)

    params = dict(
        emb=jax.random.normal(ks[0], (vocab_size, embedding_dim), jnp.float32),
        wih_f=u(ks[1], (Hh, embedding_dim)),
        whh_f=u(ks[2], (Hh, Hh)),
        bih_f=u(ks[3], (Hh,)),
        bhh_f=u(ks[4], (Hh,)),
        wih_b=u(ks[5], (Hh, embedding_dim)),
        whh_b=u(ks[6], (Hh, Hh)),
        bih_b=u(ks[7], (Hh,)),
        bhh_b=u(ks[8], (Hh,)),
        wtag=u(ks[9], (ntag, hidden_dim)),
        btag=u(ks[10], (ntag,)),
    )
    trans = jax.random.normal(ks[11], (ntag, ntag), jnp.float32)
    trans = trans.at[start_idx, :].set(-10000.0)
    trans = trans.at[:, stop_idx].set(-10000.0)
    params["trans"] = trans
    # TODO(synk): the reference module passes an (h, c) tuple (fresh torch.randn each call)
    # to nn.RNN, which nn.RNN does not accept; we use a deterministic (2, 1, Hh) h0 instead.
    params["h0"] = jax.random.normal(ks[12], (2, 1, Hh), jnp.float32)
    return params


def birnn_crf_forward(sentences, params, start_idx, stop_idx, batch_tile=8):
    B, T = sentences.shape
    x = params["emb"][sentences]                          # (B, T, E) embedding gather (glue)
    x = jnp.transpose(x, (1, 0, 2))                       # (T, B, E) sequence-major
    E = x.shape[-1]
    Hh = params["whh_f"].shape[0]
    H2 = 2 * Hh
    NTAG = params["trans"].shape[0]
    f32 = jnp.float32
    Bt = batch_tile
    assert B % Bt == 0, "batch must be a multiple of the batch tile"

    # Pre-transposed / fused weights so every in-kernel matmul is row-major on the MXU.
    wih = jnp.concatenate([params["wih_f"].T, params["wih_b"].T], axis=1)   # (E, 2Hh)
    whh = jnp.zeros((H2, H2), f32)                                          # block-diag Whh
    whh = whh.at[:Hh, :Hh].set(params["whh_f"].T)
    whh = whh.at[Hh:, Hh:].set(params["whh_b"].T)
    bias = jnp.concatenate([params["bih_f"] + params["bhh_f"],
                            params["bih_b"] + params["bhh_b"]]).reshape(1, H2)
    h0 = jnp.concatenate([params["h0"][0], params["h0"][1]], axis=1)        # (1, 2Hh)
    wtag = params["wtag"].T                                                 # (2Hh, NTAG) fused
    btag = params["btag"].reshape(1, NTAG)
    trans = params["trans"]                                                 # trans[nt, prev]
    tstop = trans[stop_idx:stop_idx + 1, :]                                 # (1, NTAG)

    kernel = functools.partial(birnn_crf_kernel, start_idx)

    def full(shape):
        return pl.BlockSpec(shape, lambda i: tuple(0 for _ in shape))

    feats_k, score, path = pl.pallas_call(
        kernel,
        grid=(B // Bt,),
        out_shape=(jax.ShapeDtypeStruct((T, B, NTAG), f32),    # emission feats
                   jax.ShapeDtypeStruct((B, 1), f32),          # viterbi path score
                   jax.ShapeDtypeStruct((B, T), jnp.int32)),   # best tag sequences
        in_specs=[pl.BlockSpec((T, Bt, E), lambda i: (0, i, 0)),
                  full((E, H2)), full((H2, H2)), full((1, H2)), full((1, H2)),
                  full((H2, NTAG)), full((1, NTAG)), full((NTAG, NTAG)), full((1, NTAG))],
        out_specs=(pl.BlockSpec((T, Bt, NTAG), lambda i: (0, i, 0)),
                   pl.BlockSpec((Bt, 1), lambda i: (i, 0)),
                   pl.BlockSpec((Bt, T), lambda i: (i, 0))),
        compiler_params=pltpu.CompilerParams(
            dimension_semantics=("parallel",),          # v7x: split batch over both TCs
            vmem_limit_bytes=32 * 1024 * 1024),
    )(x, wih, whh, bias, h0, wtag, btag, trans, tstop)

    feats = jnp.transpose(feats_k, (1, 0, 2))             # (B, T, NTAG)
    return score[:, 0], path, feats


# ----------------------------- pure-numpy references -----------------------------
def ref_rnn_feats_np(x_emb, p):
    T = x_emb.shape[0]
    bf = p["bih_f"] + p["bhh_f"]
    bb = p["bih_b"] + p["bhh_b"]
    hf = []
    h = p["h0"][0]
    for t in range(T):
        h = np.tanh(x_emb[t:t + 1] @ p["wih_f"].T + h @ p["whh_f"].T + bf)
        hf.append(h)
    hb = [None] * T
    h = p["h0"][1]
    for t in range(T - 1, -1, -1):
        h = np.tanh(x_emb[t:t + 1] @ p["wih_b"].T + h @ p["whh_b"].T + bb)
        hb[t] = h
    rnn_out = np.concatenate([np.concatenate(hf, 0), np.concatenate(hb, 0)], axis=1)
    return rnn_out @ p["wtag"].T + p["btag"]


def ref_viterbi(feats, trans, start_idx, stop_idx):
    T, N = feats.shape
    fvar = np.full((N,), -10000.0, np.float32)
    fvar[start_idx] = 0.0
    bps = []
    for t in range(T):
        bpt = np.zeros(N, np.int32)
        vv = np.zeros(N, np.float32)
        for nt in range(N):
            row = fvar + trans[nt]
            b = int(np.argmax(row))
            bpt[nt] = b
            vv[nt] = row[b]
        fvar = vv + feats[t]
        bps.append(bpt)
    term = fvar + trans[stop_idx]
    best = int(np.argmax(term))
    score = float(term[best])
    path = [best]
    for bpt in reversed(bps):
        best = int(bpt[best])
        path.append(best)
    start = path.pop()
    assert start == start_idx
    path.reverse()
    return score, np.array(path, np.int32)


if __name__ == "__main__":
    tag_to_ix = {"B": 0, "I": 1, "O": 2, START_TAG: 3, STOP_TAG: 4}
    VOCAB, EMB_DIM, HIDDEN_DIM, SEQ_LEN, BATCH = 20, 32, 32, 8, 16
    NTAG = len(tag_to_ix)
    start_idx, stop_idx = tag_to_ix[START_TAG], tag_to_ix[STOP_TAG]

    key = jax.random.PRNGKey(0)
    kp, ksent = jax.random.split(key)
    params = make_params(kp, VOCAB, EMB_DIM, HIDDEN_DIM, NTAG, start_idx, stop_idx)
    sentences = jax.random.randint(ksent, (BATCH, SEQ_LEN), 0, VOCAB, dtype=jnp.int32)

    score, path, feats = birnn_crf_forward(sentences, params, start_idx, stop_idx,
                                           batch_tile=8)
    jax.block_until_ready((score, path, feats))

    # correctness checks against a pure-numpy reference, per sentence
    p_np = {k: np.asarray(v) for k, v in params.items()}
    emb_np = p_np["emb"][np.asarray(sentences)]           # (B, T, E)
    feats_np = np.asarray(feats)
    path_np = np.asarray(path)
    score_np = np.asarray(score)
    for b_i in range(BATCH):
        f_ref = ref_rnn_feats_np(emb_np[b_i], p_np)
        np.testing.assert_allclose(feats_np[b_i], f_ref, atol=3e-2, rtol=3e-2)
        s_ref, p_ref = ref_viterbi(feats_np[b_i], p_np["trans"], start_idx, stop_idx)
        assert np.array_equal(path_np[b_i], p_ref), (b_i, path_np[b_i], p_ref)
        np.testing.assert_allclose(float(score_np[b_i]), s_ref, atol=1e-3, rtol=1e-4)

    print("KERNEL_OK")
</pallas_src>

<mosaic_0001>
module attributes {stable_mosaic.version = 11 : i64} {
  func.func @birnn_crf_kernel(%arg0: i32, %arg1: memref<8x8x32xf32, #tpu.memory_space<vmem>>, %arg2: memref<32x32xf32, #tpu.memory_space<vmem>>, %arg3: memref<32x32xf32, #tpu.memory_space<vmem>>, %arg4: memref<1x32xf32, #tpu.memory_space<vmem>>, %arg5: memref<1x32xf32, #tpu.memory_space<vmem>>, %arg6: memref<32x5xf32, #tpu.memory_space<vmem>>, %arg7: memref<1x5xf32, #tpu.memory_space<vmem>>, %arg8: memref<5x5xf32, #tpu.memory_space<vmem>>, %arg9: memref<1x5xf32, #tpu.memory_space<vmem>>, %arg10: memref<8x8x5xf32, #tpu.memory_space<vmem>>, %arg11: memref<8x1xf32, #tpu.memory_space<vmem>>, %arg12: memref<8x8xi32, #tpu.memory_space<vmem>>) attributes {dimension_semantics = [#tpu.dimension_semantics<parallel>], iteration_bounds = array<i64: 2>, scalar_prefetch = 0 : i64, scratch_operands = 0 : i64, tpu.core_type = #tpu.core_type<tc>, window_params = [{transform_indices = @transform_0, window_bounds = array<i64: 8, 8, 32>}, {pipeline_mode = #tpu.pipeline_mode<synchronous>, transform_indices = @transform_1, window_bounds = array<i64: 32, 32>}, {pipeline_mode = #tpu.pipeline_mode<synchronous>, transform_indices = @transform_2, window_bounds = array<i64: 32, 32>}, {pipeline_mode = #tpu.pipeline_mode<synchronous>, transform_indices = @transform_3, window_bounds = array<i64: 1, 32>}, {pipeline_mode = #tpu.pipeline_mode<synchronous>, transform_indices = @transform_4, window_bounds = array<i64: 1, 32>}, {pipeline_mode = #tpu.pipeline_mode<synchronous>, transform_indices = @transform_5, window_bounds = array<i64: 32, 5>}, {pipeline_mode = #tpu.pipeline_mode<synchronous>, transform_indices = @transform_6, window_bounds = array<i64: 1, 5>}, {pipeline_mode = #tpu.pipeline_mode<synchronous>, transform_indices = @transform_7, window_bounds = array<i64: 5, 5>}, {pipeline_mode = #tpu.pipeline_mode<synchronous>, transform_indices = @transform_8, window_bounds = array<i64: 1, 5>}, {transform_indices = @transform_9, window_bounds = array<i64: 8, 8, 5>}, {transform_indices = @transform_10, window_bounds = array<i64: 8, 1>}, {transform_indices = @transform_11, window_bounds = array<i64: 8, 8>}]} {
    %c0 = arith.constant 0 : index
    %c0_0 = arith.constant 0 : index
    %0 = vector.load %arg2[%c0, %c0_0] : memref<32x32xf32, #tpu.memory_space<vmem>>, vector<32x32xf32>
    %c0_1 = arith.constant 0 : index
    %c0_2 = arith.constant 0 : index
    %1 = vector.load %arg3[%c0_1, %c0_2] : memref<32x32xf32, #tpu.memory_space<vmem>>, vector<32x32xf32>
    %c0_3 = arith.constant 0 : index
    %c0_4 = arith.constant 0 : index
    %2 = vector.load %arg4[%c0_3, %c0_4] : memref<1x32xf32, #tpu.memory_space<vmem>>, vector<1x32xf32>
    %c0_5 = arith.constant 0 : index
    %c0_6 = arith.constant 0 : index
    %3 = vector.load %arg6[%c0_5, %c0_6] : memref<32x5xf32, #tpu.memory_space<vmem>>, vector<32x5xf32>
    %c0_7 = arith.constant 0 : index
    %c0_8 = arith.constant 0 : index
    %4 = vector.load %arg7[%c0_7, %c0_8] : memref<1x5xf32, #tpu.memory_space<vmem>>, vector<1x5xf32>
    %c0_9 = arith.constant 0 : index
    %c0_10 = arith.constant 0 : index
    %5 = vector.load %arg8[%c0_9, %c0_10] : memref<5x5xf32, #tpu.memory_space<vmem>>, vector<5x5xf32>
    %c0_11 = arith.constant 0 : index
    %c0_12 = arith.constant 0 : index
    %6 = vector.load %arg9[%c0_11, %c0_12] : memref<1x5xf32, #tpu.memory_space<vmem>>, vector<1x5xf32>
    %7 = tpu.iota {dimensions = array<i32: 1>} : vector<1x32xi32>
    %c16_i32 = arith.constant 16 : i32
    %8 = vector.broadcast %c16_i32 : i32 to vector<1x32xi32>
    %9 = arith.cmpi slt, %7, %8 : vector<1x32xi32>
    %10 = vector.shape_cast %9 : vector<1x32xi1> to vector<1x32xi1>
    %11 = vector.broadcast %10 : vector<1x32xi1> to vector<8x32xi1>
    %12 = tpu.iota {dimensions = array<i32: 1>} : vector<8x5xi32>
    %13 = tpu.iota {dimensions = array<i32: 1>} : vector<8x8xi32>
    %c5_i32 = arith.constant 5 : i32
    %14 = vector.broadcast %c5_i32 : i32 to vector<8x5xi32>
    %cst = arith.constant 0.000000e+00 : f32
    %15 = vector.broadcast %cst : f32 to vector<8x5xf32>
    %c0_i32 = arith.constant 0 : i32
    %16 = vector.broadcast %c0_i32 : i32 to vector<8x5xi32>
    %c0_i32_13 = arith.constant 0 : i32
    %17 = vector.broadcast %c0_i32_13 : i32 to vector<8x8xi32>
    %cst_14 = arith.constant -1.000000e+04 : f32
    %18 = vector.broadcast %cst_14 : f32 to vector<8x5xf32>
    %c0_i32_15 = arith.constant 0 : i32
    %19 = vector.broadcast %c0_i32_15 : i32 to vector<8x5xi32>
    %20 = arith.cmpi eq, %12, %19 : vector<8x5xi32>
    %c1_i32 = arith.constant 1 : i32
    %21 = vector.broadcast %c1_i32 : i32 to vector<8x5xi32>
    %22 = arith.cmpi eq, %12, %21 : vector<8x5xi32>
    %c2_i32 = arith.constant 2 : i32
    %23 = vector.broadcast %c2_i32 : i32 to vector<8x5xi32>
    %24 = arith.cmpi eq, %12, %23 : vector<8x5xi32>
    %c3_i32 = arith.constant 3 : i32
    %25 = vector.broadcast %c3_i32 : i32 to vector<8x5xi32>
    %26 = arith.cmpi eq, %12, %25 : vector<8x5xi32>
    %c4_i32 = arith.constant 4 : i32
    %27 = vector.broadcast %c4_i32 : i32 to vector<8x5xi32>
    %28 = arith.cmpi eq, %12, %27 : vector<8x5xi32>
    %c0_i32_16 = arith.constant 0 : i32
    %29 = vector.broadcast %c0_i32_16 : i32 to vector<8x8xi32>
    %30 = arith.cmpi eq, %13, %29 : vector<8x8xi32>
    %c1_i32_17 = arith.constant 1 : i32
    %31 = vector.broadcast %c1_i32_17 : i32 to vector<8x8xi32>
    %32 = arith.cmpi eq, %13, %31 : vector<8x8xi32>
    %c2_i32_18 = arith.constant 2 : i32
    %33 = vector.broadcast %c2_i32_18 : i32 to vector<8x8xi32>
    %34 = arith.cmpi eq, %13, %33 : vector<8x8xi32>
    %c3_i32_19 = arith.constant 3 : i32
    %35 = vector.broadcast %c3_i32_19 : i32 to vector<8x8xi32>
    %36 = arith.cmpi eq, %13, %35 : vector<8x8xi32>
    %c4_i32_20 = arith.constant 4 : i32
    %37 = vector.broadcast %c4_i32_20 : i32 to vector<8x8xi32>
    %38 = arith.cmpi eq, %13, %37 : vector<8x8xi32>
    %c5_i32_21 = arith.constant 5 : i32
    %39 = vector.broadcast %c5_i32_21 : i32 to vector<8x8xi32>
    %40 = arith.cmpi eq, %13, %39 : vector<8x8xi32>
    %c6_i32 = arith.constant 6 : i32
    %41 = vector.broadcast %c6_i32 : i32 to vector<8x8xi32>
    %42 = arith.cmpi eq, %13, %41 : vector<8x8xi32>
    %c7_i32 = arith.constant 7 : i32
    %43 = vector.broadcast %c7_i32 : i32 to vector<8x8xi32>
    %44 = arith.cmpi eq, %13, %43 : vector<8x8xi32>
    %45 = vector.extract_strided_slice %5 {offsets = [0, 0], sizes = [1, 5], strides = [1, 1]} : vector<5x5xf32> to vector<1x5xf32>
    %46 = vector.shape_cast %45 : vector<1x5xf32> to vector<1x5xf32>
    %47 = vector.broadcast %46 : vector<1x5xf32> to vector<8x5xf32>
    %48 = vector.extract_strided_slice %5 {offsets = [1, 0], sizes = [1, 5], strides = [1, 1]} : vector<5x5xf32> to vector<1x5xf32>
    %49 = vector.shape_cast %48 : vector<1x5xf32> to vector<1x5xf32>
    %50 = vector.broadcast %49 : vector<1x5xf32> to vector<8x5xf32>
    %51 = vector.extract_strided_slice %5 {offsets = [2, 0], sizes = [1, 5], strides = [1, 1]} : vector<5x5xf32> to vector<1x5xf32>
    %52 = vector.shape_cast %51 : vector<1x5xf32> to vector<1x5xf32>
    %53 = vector.broadcast %52 : vector<1x5xf32> to vector<8x5xf32>
    %54 = vector.extract_strided_slice %5 {offsets = [3, 0], sizes = [1, 5], strides = [1, 1]} : vector<5x5xf32> to vector<1x5xf32>
    %55 = vector.shape_cast %54 : vector<1x5xf32> to vector<1x5xf32>
    %56 = vector.broadcast %55 : vector<1x5xf32> to vector<8x5xf32>
    %57 = vector.extract_strided_slice %5 {offsets = [4, 0], sizes = [1, 5], strides = [1, 1]} : vector<5x5xf32> to vector<1x5xf32>
    %58 = vector.shape_cast %57 : vector<1x5xf32> to vector<1x5xf32>
    %59 = vector.broadcast %58 : vector<1x5xf32> to vector<8x5xf32>
    %c0_22 = arith.constant 0 : index
    %c0_23 = arith.constant 0 : index
    %c0_24 = arith.constant 0 : index
    %60 = vector.load %arg1[%c0_22, %c0_23, %c0_24] : memref<8x8x32xf32, #tpu.memory_space<vmem>>, vector<1x8x32xf32>
    %61 = vector.shape_cast %60 : vector<1x8x32xf32> to vector<8x32xf32>
    %c1 = arith.constant 1 : index
    %c0_25 = arith.constant 0 : index
    %c0_26 = arith.constant 0 : index
    %62 = vector.load %arg1[%c1, %c0_25, %c0_26] : memref<8x8x32xf32, #tpu.memory_space<vmem>>, vector<1x8x32xf32>
    %63 = vector.shape_cast %62 : vector<1x8x32xf32> to vector<8x32xf32>
    %c2 = arith.constant 2 : index
    %c0_27 = arith.constant 0 : index
    %c0_28 = arith.constant 0 : index
    %64 = vector.load %arg1[%c2, %c0_27, %c0_28] : memref<8x8x32xf32, #tpu.memory_space<vmem>>, vector<1x8x32xf32>
    %65 = vector.shape_cast %64 : vector<1x8x32xf32> to vector<8x32xf32>
    %c3 = arith.constant 3 : index
    %c0_29 = arith.constant 0 : index
    %c0_30 = arith.constant 0 : index
    %66 = vector.load %arg1[%c3, %c0_29, %c0_30] : memref<8x8x32xf32, #tpu.memory_space<vmem>>, vector<1x8x32xf32>
    %67 = vector.shape_cast %66 : vector<1x8x32xf32> to vector<8x32xf32>
    %c4 = arith.constant 4 : index
    %c0_31 = arith.constant 0 : index
    %c0_32 = arith.constant 0 : index
    %68 = vector.load %arg1[%c4, %c0_31, %c0_32] : memref<8x8x32xf32, #tpu.memory_space<vmem>>, vector<1x8x32xf32>
    %69 = vector.shape_cast %68 : vector<1x8x32xf32> to vector<8x32xf32>
    %c5 = arith.constant 5 : index
    %c0_33 = arith.constant 0 : index
    %c0_34 = arith.constant 0 : index
    %70 = vector.load %arg1[%c5, %c0_33, %c0_34] : memref<8x8x32xf32, #tpu.memory_space<vmem>>, vector<1x8x32xf32>
    %71 = vector.shape_cast %70 : vector<1x8x32xf32> to vector<8x32xf32>
    %c6 = arith.constant 6 : index
    %c0_35 = arith.constant 0 : index
    %c0_36 = arith.constant 0 : index
    %72 = vector.load %arg1[%c6, %c0_35, %c0_36] : memref<8x8x32xf32, #tpu.memory_space<vmem>>, vector<1x8x32xf32>
    %73 = vector.shape_cast %72 : vector<1x8x32xf32> to vector<8x32xf32>
    %c7 = arith.constant 7 : index
    %c0_37 = arith.constant 0 : index
    %c0_38 = arith.constant 0 : index
    %74 = vector.load %arg1[%c7, %c0_37, %c0_38] : memref<8x8x32xf32, #tpu.memory_space<vmem>>, vector<1x8x32xf32>
    %75 = vector.shape_cast %74 : vector<1x8x32xf32> to vector<8x32xf32>
    %76 = tpu.concatenate %61, %63, %65, %67, %69, %71, %73, %75 in 0 : vector<8x32xf32>, vector<8x32xf32>, vector<8x32xf32>, vector<8x32xf32>, vector<8x32xf32>, vector<8x32xf32>, vector<8x32xf32>, vector<8x32xf32> -> vector<64x32xf32>
    %cst_39 = arith.constant dense<0.000000e+00> : vector<64x32xf32>
    %77 = tpu.matmul %76, %0, %cst_39 {dimension_numbers = #tpu.dot_dimension_numbers<[1], [0], [0], [1], [0, 0, 1, 1], [], []>} : vector<64x32xf32>, vector<32x32xf32>, vector<64x32xf32> -> vector<64x32xf32>
    %78 = vector.broadcast %2 : vector<1x32xf32> to vector<64x32xf32>
    %79 = arith.addf %77, %78 : vector<64x32xf32>
    %80 = vector.extract_strided_slice %79 {offsets = [0, 0], sizes = [8, 32], strides = [1, 1]} : vector<64x32xf32> to vector<8x32xf32>
    %81 = vector.extract_strided_slice %79 {offsets = [8, 0], sizes = [8, 32], strides = [1, 1]} : vector<64x32xf32> to vector<8x32xf32>
    %82 = vector.extract_strided_slice %79 {offsets = [16, 0], sizes = [8, 32], strides = [1, 1]} : vector<64x32xf32> to vector<8x32xf32>
    %83 = vector.extract_strided_slice %79 {offsets = [24, 0], sizes = [8, 32], strides = [1, 1]} : vector<64x32xf32> to vector<8x32xf32>
    %84 = vector.extract_strided_slice %79 {offsets = [32, 0], sizes = [8, 32], strides = [1, 1]} : vector<64x32xf32> to vector<8x32xf32>
    %85 = vector.extract_strided_slice %79 {offsets = [40, 0], sizes = [8, 32], strides = [1, 1]} : vector<64x32xf32> to vector<8x32xf32>
    %86 = vector.extract_strided_slice %79 {offsets = [48, 0], sizes = [8, 32], strides = [1, 1]} : vector<64x32xf32> to vector<8x32xf32>
    %87 = vector.extract_strided_slice %79 {offsets = [56, 0], sizes = [8, 32], strides = [1, 1]} : vector<64x32xf32> to vector<8x32xf32>
    %c0_40 = arith.constant 0 : index
    %c0_41 = arith.constant 0 : index
    %88 = vector.load %arg5[%c0_40, %c0_41] : memref<1x32xf32, #tpu.memory_space<vmem>>, vector<1x32xf32>
    %89 = vector.shape_cast %88 : vector<1x32xf32> to vector<1x32xf32>
    %90 = vector.broadcast %89 : vector<1x32xf32> to vector<8x32xf32>
    %91 = arith.select %11, %80, %87 : vector<8x32xi1>, vector<8x32xf32>
    %cst_42 = arith.constant dense<0.000000e+00> : vector<8x32xf32>
    %92 = tpu.matmul %90, %1, %cst_42 {dimension_numbers = #tpu.dot_dimension_numbers<[1], [0], [0], [1], [0, 0, 1, 1], [], []>} : vector<8x32xf32>, vector<32x32xf32>, vector<8x32xf32> -> vector<8x32xf32>
    %93 = arith.addf %91, %92 : vector<8x32xf32>
    %94 = math.tanh %93 : vector<8x32xf32>
    %95 = arith.select %11, %81, %86 : vector<8x32xi1>, vector<8x32xf32>
    %cst_43 = arith.constant dense<0.000000e+00> : vector<8x32xf32>
    %96 = tpu.matmul %94, %1, %cst_43 {dimension_numbers = #tpu.dot_dimension_numbers<[1], [0], [0], [1], [0, 0, 1, 1], [], []>} : vector<8x32xf32>, vector<32x32xf32>, vector<8x32xf32> -> vector<8x32xf32>
    %97 = arith.addf %95, %96 : vector<8x32xf32>
    %98 = math.tanh %97 : vector<8x32xf32>
    %99 = arith.select %11, %82, %85 : vector<8x32xi1>, vector<8x32xf32>
    %cst_44 = arith.constant dense<0.000000e+00> : vector<8x32xf32>
    %100 = tpu.matmul %98, %1, %cst_44 {dimension_numbers = #tpu.dot_dimension_numbers<[1], [0], [0], [1], [0, 0, 1, 1], [], []>} : vector<8x32xf32>, vector<32x32xf32>, vector<8x32xf32> -> vector<8x32xf32>
    %101 = arith.addf %99, %100 : vector<8x32xf32>
    %102 = math.tanh %101 : vector<8x32xf32>
    %103 = arith.select %11, %83, %84 : vector<8x32xi1>, vector<8x32xf32>
    %cst_45 = arith.constant dense<0.000000e+00> : vector<8x32xf32>
    %104 = tpu.matmul %102, %1, %cst_45 {dimension_numbers = #tpu.dot_dimension_numbers<[1], [0], [0], [1], [0, 0, 1, 1], [], []>} : vector<8x32xf32>, vector<32x32xf32>, vector<8x32xf32> -> vector<8x32xf32>
    %105 = arith.addf %103, %104 : vector<8x32xf32>
    %106 = math.tanh %105 : vector<8x32xf32>
    %107 = arith.select %11, %84, %83 : vector<8x32xi1>, vector<8x32xf32>
    %cst_46 = arith.constant dense<0.000000e+00> : vector<8x32xf32>
    %108 = tpu.matmul %106, %1, %cst_46 {dimension_numbers = #tpu.dot_dimension_numbers<[1], [0], [0], [1], [0, 0, 1, 1], [], []>} : vector<8x32xf32>, vector<32x32xf32>, vector<8x32xf32> -> vector<8x32xf32>
    %109 = arith.addf %107, %108 : vector<8x32xf32>
    %110 = math.tanh %109 : vector<8x32xf32>
    %111 = arith.select %11, %85, %82 : vector<8x32xi1>, vector<8x32xf32>
    %cst_47 = arith.constant dense<0.000000e+00> : vector<8x32xf32>
    %112 = tpu.matmul %110, %1, %cst_47 {dimension_numbers = #tpu.dot_dimension_numbers<[1], [0], [0], [1], [0, 0, 1, 1], [], []>} : vector<8x32xf32>, vector<32x32xf32>, vector<8x32xf32> -> vector<8x32xf32>
    %113 = arith.addf %111, %112 : vector<8x32xf32>
    %114 = math.tanh %113 : vector<8x32xf32>
    %115 = arith.select %11, %86, %81 : vector<8x32xi1>, vector<8x32xf32>
    %cst_48 = arith.constant dense<0.000000e+00> : vector<8x32xf32>
    %116 = tpu.matmul %114, %1, %cst_48 {dimension_numbers = #tpu.dot_dimension_numbers<[1], [0], [0], [1], [0, 0, 1, 1], [], []>} : vector<8x32xf32>, vector<32x32xf32>, vector<8x32xf32> -> vector<8x32xf32>
    %117 = arith.addf %115, %116 : vector<8x32xf32>
    %118 = math.tanh %117 : vector<8x32xf32>
    %119 = arith.select %11, %87, %80 : vector<8x32xi1>, vector<8x32xf32>
    %cst_49 = arith.constant dense<0.000000e+00> : vector<8x32xf32>
    %120 = tpu.matmul %118, %1, %cst_49 {dimension_numbers = #tpu.dot_dimension_numbers<[1], [0], [0], [1], [0, 0, 1, 1], [], []>} : vector<8x32xf32>, vector<32x32xf32>, vector<8x32xf32> -> vector<8x32xf32>
    %121 = arith.addf %119, %120 : vector<8x32xf32>
    %122 = math.tanh %121 : vector<8x32xf32>
    %123 = arith.select %11, %94, %122 : vector<8x32xi1>, vector<8x32xf32>
    %124 = arith.select %11, %98, %118 : vector<8x32xi1>, vector<8x32xf32>
    %125 = arith.select %11, %102, %114 : vector<8x32xi1>, vector<8x32xf32>
    %126 = arith.select %11, %106, %110 : vector<8x32xi1>, vector<8x32xf32>
    %127 = arith.select %11, %110, %106 : vector<8x32xi1>, vector<8x32xf32>
    %128 = arith.select %11, %114, %102 : vector<8x32xi1>, vector<8x32xf32>
    %129 = arith.select %11, %118, %98 : vector<8x32xi1>, vector<8x32xf32>
    %130 = arith.select %11, %122, %94 : vector<8x32xi1>, vector<8x32xf32>
    %131 = tpu.concatenate %123, %124, %125, %126, %127, %128, %129, %130 in 0 : vector<8x32xf32>, vector<8x32xf32>, vector<8x32xf32>, vector<8x32xf32>, vector<8x32xf32>, vector<8x32xf32>, vector<8x32xf32>, vector<8x32xf32> -> vector<64x32xf32>
    %cst_50 = arith.constant dense<0.000000e+00> : vector<64x5xf32>
    %132 = tpu.matmul %131, %3, %cst_50 {dimension_numbers = #tpu.dot_dimension_numbers<[1], [0], [0], [1], [0, 0, 1, 1], [], []>} : vector<64x32xf32>, vector<32x5xf32>, vector<64x5xf32> -> vector<64x5xf32>
    %133 = vector.broadcast %4 : vector<1x5xf32> to vector<64x5xf32>
    %134 = arith.addf %132, %133 : vector<64x5xf32>
    %135 = vector.extract_strided_slice %134 {offsets = [0, 0], sizes = [8, 5], strides = [1, 1]} : vector<64x5xf32> to vector<8x5xf32>
    %c0_51 = arith.constant 0 : index
    %c0_52 = arith.constant 0 : index
    %c0_53 = arith.constant 0 : index
    %136 = vector.load %arg10[%c0_51, %c0_52, %c0_53] : memref<8x8x5xf32, #tpu.memory_space<vmem>>, vector<1x8x5xf32>
    %137 = vector.shape_cast %136 : vector<1x8x5xf32> to vector<8x5xf32>
    %138 = vector.shape_cast %135 : vector<8x5xf32> to vector<1x8x5xf32>
    tpu.vector_store %arg10[%c0_51, %c0_52, %c0_53], %138 {strides = array<i32>} : memref<8x8x5xf32, #tpu.memory_space<vmem>>, vector<1x8x5xf32>,
    %139 = vector.extract_strided_slice %134 {offsets = [8, 0], sizes = [8, 5], strides = [1, 1]} : vector<64x5xf32> to vector<8x5xf32>
    %c1_54 = arith.constant 1 : index
    %c0_55 = arith.constant 0 : index
    %c0_56 = arith.constant 0 : index
    %140 = vector.load %arg10[%c1_54, %c0_55, %c0_56] : memref<8x8x5xf32, #tpu.memory_space<vmem>>, vector<1x8x5xf32>
    %141 = vector.shape_cast %140 : vector<1x8x5xf32> to vector<8x5xf32>
    %142 = vector.shape_cast %139 : vector<8x5xf32> to vector<1x8x5xf32>
    tpu.vector_store %arg10[%c1_54, %c0_55, %c0_56], %142 {strides = array<i32>} : memref<8x8x5xf32, #tpu.memory_space<vmem>>, vector<1x8x5xf32>,
    %143 = vector.extract_strided_slice %134 {offsets = [16, 0], sizes = [8, 5], strides = [1, 1]} : vector<64x5xf32> to vector<8x5xf32>
    %c2_57 = arith.constant 2 : index
    %c0_58 = arith.constant 0 : index
    %c0_59 = arith.constant 0 : index
    %144 = vector.load %arg10[%c2_57, %c0_58, %c0_59] : memref<8x8x5xf32, #tpu.memory_space<vmem>>, vector<1x8x5xf32>
    %145 = vector.shape_cast %144 : vector<1x8x5xf32> to vector<8x5xf32>
    %146 = vector.shape_cast %143 : vector<8x5xf32> to vector<1x8x5xf32>
    tpu.vector_store %arg10[%c2_57, %c0_58, %c0_59], %146 {strides = array<i32>} : memref<8x8x5xf32, #tpu.memory_space<vmem>>, vector<1x8x5xf32>,
    %147 = vector.extract_strided_slice %134 {offsets = [24, 0], sizes = [8, 5], strides = [1, 1]} : vector<64x5xf32> to vector<8x5xf32>
    %c3_60 = arith.constant 3 : index
    %c0_61 = arith.constant 0 : index
    %c0_62 = arith.constant 0 : index
    %148 = vector.load %arg10[%c3_60, %c0_61, %c0_62] : memref<8x8x5xf32, #tpu.memory_space<vmem>>, vector<1x8x5xf32>
    %149 = vector.shape_cast %148 : vector<1x8x5xf32> to vector<8x5xf32>
    %150 = vector.shape_cast %147 : vector<8x5xf32> to vector<1x8x5xf32>
    tpu.vector_store %arg10[%c3_60, %c0_61, %c0_62], %150 {strides = array<i32>} : memref<8x8x5xf32, #tpu.memory_space<vmem>>, vector<1x8x5xf32>,
    %151 = vector.extract_strided_slice %134 {offsets = [32, 0], sizes = [8, 5], strides = [1, 1]} : vector<64x5xf32> to vector<8x5xf32>
    %c4_63 = arith.constant 4 : index
    %c0_64 = arith.constant 0 : index
    %c0_65 = arith.constant 0 : index
    %152 = vector.load %arg10[%c4_63, %c0_64, %c0_65] : memref<8x8x5xf32, #tpu.memory_space<vmem>>, vector<1x8x5xf32>
    %153 = vector.shape_cast %152 : vector<1x8x5xf32> to vector<8x5xf32>
    %154 = vector.shape_cast %151 : vector<8x5xf32> to vector<1x8x5xf32>
    tpu.vector_store %arg10[%c4_63, %c0_64, %c0_65], %154 {strides = array<i32>} : memref<8x8x5xf32, #tpu.memory_space<vmem>>, vector<1x8x5xf32>,
    %155 = vector.extract_strided_slice %134 {offsets = [40, 0], sizes = [8, 5], strides = [1, 1]} : vector<64x5xf32> to vector<8x5xf32>
    %c5_66 = arith.constant 5 : index
    %c0_67 = arith.constant 0 : index
    %c0_68 = arith.constant 0 : index
    %156 = vector.load %arg10[%c5_66, %c0_67, %c0_68] : memref<8x8x5xf32, #tpu.memory_space<vmem>>, vector<1x8x5xf32>
    %157 = vector.shape_cast %156 : vector<1x8x5xf32> to vector<8x5xf32>
    %158 = vector.shape_cast %155 : vector<8x5xf32> to vector<1x8x5xf32>
    tpu.vector_store %arg10[%c5_66, %c0_67, %c0_68], %158 {strides = array<i32>} : memref<8x8x5xf32, #tpu.memory_space<vmem>>, vector<1x8x5xf32>,
    %159 = vector.extract_strided_slice %134 {offsets = [48, 0], sizes = [8, 5], strides = [1, 1]} : vector<64x5xf32> to vector<8x5xf32>
    %c6_69 = arith.constant 6 : index
    %c0_70 = arith.constant 0 : index
    %c0_71 = arith.constant 0 : index
    %160 = vector.load %arg10[%c6_69, %c0_70, %c0_71] : memref<8x8x5xf32, #tpu.memory_space<vmem>>, vector<1x8x5xf32>
    %161 = vector.shape_cast %160 : vector<1x8x5xf32> to vector<8x5xf32>
    %162 = vector.shape_cast %159 : vector<8x5xf32> to vector<1x8x5xf32>
    tpu.vector_store %arg10[%c6_69, %c0_70, %c0_71], %162 {strides = array<i32>} : memref<8x8x5xf32, #tpu.memory_space<vmem>>, vector<1x8x5xf32>,
    %163 = vector.extract_strided_slice %134 {offsets = [56, 0], sizes = [8, 5], strides = [1, 1]} : vector<64x5xf32> to vector<8x5xf32>
    %c7_72 = arith.constant 7 : index
    %c0_73 = arith.constant 0 : index
    %c0_74 = arith.constant 0 : index
    %164 = vector.load %arg10[%c7_72, %c0_73, %c0_74] : memref<8x8x5xf32, #tpu.memory_space<vmem>>, vector<1x8x5xf32>
    %165 = vector.shape_cast %164 : vector<1x8x5xf32> to vector<8x5xf32>
    %166 = vector.shape_cast %163 : vector<8x5xf32> to vector<1x8x5xf32>
    tpu.vector_store %arg10[%c7_72, %c0_73, %c0_74], %166 {strides = array<i32>} : memref<8x8x5xf32, #tpu.memory_space<vmem>>, vector<1x8x5xf32>,
    %167 = arith.select %26, %15, %18 : vector<8x5xi1>, vector<8x5xf32>
    %168 = arith.addf %167, %47 : vector<8x5xf32>
    %cst_75 = arith.constant dense<0xFF800000> : vector<8xf32>
    %169 = vector.multi_reduction <maximumf>, %168, %cst_75 [1] : vector<8x5xf32> to vector<8xf32>
    %170 = vector.shape_cast %169 : vector<8xf32> to vector<8x1xf32>
    %171 = vector.shape_cast %170 : vector<8x1xf32> to vector<8x1xf32>
    %172 = vector.broadcast %171 : vector<8x1xf32> to vector<8x5xf32>
    %173 = arith.select %20, %172, %15 : vector<8x5xi1>, vector<8x5xf32>
    %174 = arith.addf %167, %50 : vector<8x5xf32>
    %cst_76 = arith.constant dense<0xFF800000> : vector<8xf32>
    %175 = vector.multi_reduction <maximumf>, %174, %cst_76 [1] : vector<8x5xf32> to vector<8xf32>
    %176 = vector.shape_cast %175 : vector<8xf32> to vector<8x1xf32>
    %177 = vector.shape_cast %176 : vector<8x1xf32> to vector<8x1xf32>
    %178 = vector.broadcast %177 : vector<8x1xf32> to vector<8x5xf32>
    %179 = arith.select %22, %178, %173 : vector<8x5xi1>, vector<8x5xf32>
    %180 = arith.addf %167, %53 : vector<8x5xf32>
    %cst_77 = arith.constant dense<0xFF800000> : vector<8xf32>
    %181 = vector.multi_reduction <maximumf>, %180, %cst_77 [1] : vector<8x5xf32> to vector<8xf32>
    %182 = vector.shape_cast %181 : vector<8xf32> to vector<8x1xf32>
    %183 = vector.shape_cast %182 : vector<8x1xf32> to vector<8x1xf32>
    %184 = vector.broadcast %183 : vector<8x1xf32> to vector<8x5xf32>
    %185 = arith.select %24, %184, %179 : vector<8x5xi1>, vector<8x5xf32>
    %186 = arith.addf %167, %56 : vector<8x5xf32>
    %cst_78 = arith.constant dense<0xFF800000> : vector<8xf32>
    %187 = vector.multi_reduction <maximumf>, %186, %cst_78 [1] : vector<8x5xf32> to vector<8xf32>
    %188 = vector.shape_cast %187 : vector<8xf32> to vector<8x1xf32>
    %189 = vector.shape_cast %188 : vector<8x1xf32> to vector<8x1xf32>
    %190 = vector.broadcast %189 : vector<8x1xf32> to vector<8x5xf32>
    %191 = arith.select %26, %190, %185 : vector<8x5xi1>, vector<8x5xf32>
    %192 = arith.addf %167, %59 : vector<8x5xf32>
    %cst_79 = arith.constant dense<0xFF800000> : vector<8xf32>
    %193 = vector.multi_reduction <maximumf>, %192, %cst_79 [1] : vector<8x5xf32> to vector<8xf32>
    %194 = vector.shape_cast %193 : vector<8xf32> to vector<8x1xf32>
    %195 = vector.shape_cast %194 : vector<8x1xf32> to vector<8x1xf32>
    %196 = vector.broadcast %195 : vector<8x1xf32> to vector<8x5xf32>
    %197 = arith.select %28, %196, %191 : vector<8x5xi1>, vector<8x5xf32>
    %198 = arith.addf %197, %135 : vector<8x5xf32>
    %199 = arith.addf %198, %47 : vector<8x5xf32>
    %cst_80 = arith.constant dense<0xFF800000> : vector<8xf32>
    %200 = vector.multi_reduction <maximumf>, %199, %cst_80 [1] : vector<8x5xf32> to vector<8xf32>
    %201 = vector.shape_cast %200 : vector<8xf32> to vector<8x1xf32>
    %202 = vector.broadcast %201 : vector<8x1xf32> to vector<8x5xf32>
    %203 = arith.cmpf oeq, %199, %202 : vector<8x5xf32>
    %204 = arith.select %203, %12, %14 : vector<8x5xi1>, vector<8x5xi32>
    %cst_81 = arith.constant dense<2147483647> : vector<8xi32>
    %205 = vector.multi_reduction <minsi>, %204, %cst_81 [1] : vector<8x5xi32> to vector<8xi32>
    %206 = vector.shape_cast %205 : vector<8xi32> to vector<8x1xi32>
    %207 = vector.shape_cast %201 : vector<8x1xf32> to vector<8x1xf32>
    %208 = vector.broadcast %207 : vector<8x1xf32> to vector<8x5xf32>
    %209 = arith.select %20, %208, %15 : vector<8x5xi1>, vector<8x5xf32>
    %210 = vector.shape_cast %206 : vector<8x1xi32> to vector<8x1xi32>
    %211 = vector.broadcast %210 : vector<8x1xi32> to vector<8x5xi32>
    %212 = arith.select %20, %211, %16 : vector<8x5xi1>, vector<8x5xi32>
    %213 = arith.addf %198, %50 : vector<8x5xf32>
    %cst_82 = arith.constant dense<0xFF800000> : vector<8xf32>
    %214 = vector.multi_reduction <maximumf>, %213, %cst_82 [1] : vector<8x5xf32> to vector<8xf32>
    %215 = vector.shape_cast %214 : vector<8xf32> to vector<8x1xf32>
    %216 = vector.broadcast %215 : vector<8x1xf32> to vector<8x5xf32>
    %217 = arith.cmpf oeq, %213, %216 : vector<8x5xf32>
    %218 = arith.select %217, %12, %14 : vector<8x5xi1>, vector<8x5xi32>
    %cst_83 = arith.constant dense<2147483647> : vector<8xi32>
    %219 = vector.multi_reduction <minsi>, %218, %cst_83 [1] : vector<8x5xi32> to vector<8xi32>
    %220 = vector.shape_cast %219 : vector<8xi32> to vector<8x1xi32>
    %221 = vector.shape_cast %215 : vector<8x1xf32> to vector<8x1xf32>
    %222 = vector.broadcast %221 : vector<8x1xf32> to vector<8x5xf32>
    %223 = arith.select %22, %222, %209 : vector<8x5xi1>, vector<8x5xf32>
    %224 = vector.shape_cast %220 : vector<8x1xi32> to vector<8x1xi32>
    %225 = vector.broadcast %224 : vector<8x1xi32> to vector<8x5xi32>
    %226 = arith.select %22, %225, %212 : vector<8x5xi1>, vector<8x5xi32>
    %227 = arith.addf %198, %53 : vector<8x5xf32>
    %cst_84 = arith.constant dense<0xFF800000> : vector<8xf32>
    %228 = vector.multi_reduction <maximumf>, %227, %cst_84 [1] : vector<8x5xf32> to vector<8xf32>
    %229 = vector.shape_cast %228 : vector<8xf32> to vector<8x1xf32>
    %230 = vector.broadcast %229 : vector<8x1xf32> to vector<8x5xf32>
    %231 = arith.cmpf oeq, %227, %230 : vector<8x5xf32>
    %232 = arith.select %231, %12, %14 : vector<8x5xi1>, vector<8x5xi32>
    %cst_85 = arith.constant dense<2147483647> : vector<8xi32>
    %233 = vector.multi_reduction <minsi>, %232, %cst_85 [1] : vector<8x5xi32> to vector<8xi32>
    %234 = vector.shape_cast %233 : vector<8xi32> to vector<8x1xi32>
    %235 = vector.shape_cast %229 : vector<8x1xf32> to vector<8x1xf32>
    %236 = vector.broadcast %235 : vector<8x1xf32> to vector<8x5xf32>
    %237 = arith.select %24, %236, %223 : vector<8x5xi1>, vector<8x5xf32>
    %238 = vector.shape_cast %234 : vector<8x1xi32> to vector<8x1xi32>
    %239 = vector.broadcast %238 : vector<8x1xi32> to vector<8x5xi32>
    %240 = arith.select %24, %239, %226 : vector<8x5xi1>, vector<8x5xi32>
    %241 = arith.addf %198, %56 : vector<8x5xf32>
    %cst_86 = arith.constant dense<0xFF800000> : vector<8xf32>
    %242 = vector.multi_reduction <maximumf>, %241, %cst_86 [1] : vector<8x5xf32> to vector<8xf32>
    %243 = vector.shape_cast %242 : vector<8xf32> to vector<8x1xf32>
    %244 = vector.broadcast %243 : vector<8x1xf32> to vector<8x5xf32>
    %245 = arith.cmpf oeq, %241, %244 : vector<8x5xf32>
    %246 = arith.select %245, %12, %14 : vector<8x5xi1>, vector<8x5xi32>
    %cst_87 = arith.constant dense<2147483647> : vector<8xi32>
    %247 = vector.multi_reduction <minsi>, %246, %cst_87 [1] : vector<8x5xi32> to vector<8xi32>
    %248 = vector.shape_cast %247 : vector<8xi32> to vector<8x1xi32>
    %249 = vector.shape_cast %243 : vector<8x1xf32> to vector<8x1xf32>
    %250 = vector.broadcast %249 : vector<8x1xf32> to vector<8x5xf32>
    %251 = arith.select %26, %250, %237 : vector<8x5xi1>, vector<8x5xf32>
    %252 = vector.shape_cast %248 : vector<8x1xi32> to vector<8x1xi32>
    %253 = vector.broadcast %252 : vector<8x1xi32> to vector<8x5xi32>
    %254 = arith.select %26, %253, %240 : vector<8x5xi1>, vector<8x5xi32>
    %255 = arith.addf %198, %59 : vector<8x5xf32>
    %cst_88 = arith.constant dense<0xFF800000> : vector<8xf32>
    %256 = vector.multi_reduction <maximumf>, %255, %cst_88 [1] : vector<8x5xf32> to vector<8xf32>
    %257 = vector.shape_cast %256 : vector<8xf32> to vector<8x1xf32>
    %258 = vector.broadcast %257 : vector<8x1xf32> to vector<8x5xf32>
    %259 = arith.cmpf oeq, %255, %258 : vector<8x5xf32>
    %260 = arith.select %259, %12, %14 : vector<8x5xi1>, vector<8x5xi32>
    %cst_89 = arith.constant dense<2147483647> : vector<8xi32>
    %261 = vector.multi_reduction <minsi>, %260, %cst_89 [1] : vector<8x5xi32> to vector<8xi32>
    %262 = vector.shape_cast %261 : vector<8xi32> to vector<8x1xi32>
    %263 = vector.shape_cast %257 : vector<8x1xf32> to vector<8x1xf32>
    %264 = vector.broadcast %263 : vector<8x1xf32> to vector<8x5xf32>
    %265 = arith.select %28, %264, %251 : vector<8x5xi1>, vector<8x5xf32>
    %266 = vector.shape_cast %262 : vector<8x1xi32> to vector<8x1xi32>
    %267 = vector.broadcast %266 : vector<8x1xi32> to vector<8x5xi32>
    %268 = arith.select %28, %267, %254 : vector<8x5xi1>, vector<8x5xi32>
    %269 = arith.addf %265, %139 : vector<8x5xf32>
    %270 = arith.addf %269, %47 : vector<8x5xf32>
    %cst_90 = arith.constant dense<0xFF800000> : vector<8xf32>
    %271 = vector.multi_reduction <maximumf>, %270, %cst_90 [1] : vector<8x5xf32> to vector<8xf32>
    %272 = vector.shape_cast %271 : vector<8xf32> to vector<8x1xf32>
    %273 = vector.broadcast %272 : vector<8x1xf32> to vector<8x5xf32>
    %274 = arith.cmpf oeq, %270, %273 : vector<8x5xf32>
    %275 = arith.select %274, %12, %14 : vector<8x5xi1>, vector<8x5xi32>
    %cst_91 = arith.constant dense<2147483647> : vector<8xi32>
    %276 = vector.multi_reduction <minsi>, %275, %cst_91 [1] : vector<8x5xi32> to vector<8xi32>
    %277 = vector.shape_cast %276 : vector<8xi32> to vector<8x1xi32>
    %278 = vector.shape_cast %272 : vector<8x1xf32> to vector<8x1xf32>
    %279 = vector.broadcast %278 : vector<8x1xf32> to vector<8x5xf32>
    %280 = arith.select %20, %279, %15 : vector<8x5xi1>, vector<8x5xf32>
    %281 = vector.shape_cast %277 : vector<8x1xi32> to vector<8x1xi32>
    %282 = vector.broadcast %281 : vector<8x1xi32> to vector<8x5xi32>
    %283 = arith.select %20, %282, %16 : vector<8x5xi1>, vector<8x5xi32>
    %284 = arith.addf %269, %50 : vector<8x5xf32>
    %cst_92 = arith.constant dense<0xFF800000> : vector<8xf32>
    %285 = vector.multi_reduction <maximumf>, %284, %cst_92 [1] : vector<8x5xf32> to vector<8xf32>
    %286 = vector.shape_cast %285 : vector<8xf32> to vector<8x1xf32>
    %287 = vector.broadcast %286 : vector<8x1xf32> to vector<8x5xf32>
    %288 = arith.cmpf oeq, %284, %287 : vector<8x5xf32>
    %289 = arith.select %288, %12, %14 : vector<8x5xi1>, vector<8x5xi32>
    %cst_93 = arith.constant dense<2147483647> : vector<8xi32>
    %290 = vector.multi_reduction <minsi>, %289, %cst_93 [1] : vector<8x5xi32> to vector<8xi32>
    %291 = vector.shape_cast %290 : vector<8xi32> to vector<8x1xi32>
    %292 = vector.shape_cast %286 : vector<8x1xf32> to vector<8x1xf32>
    %293 = vector.broadcast %292 : vector<8x1xf32> to vector<8x5xf32>
    %294 = arith.select %22, %293, %280 : vector<8x5xi1>, vector<8x5xf32>
    %295 = vector.shape_cast %291 : vector<8x1xi32> to vector<8x1xi32>
    %296 = vector.broadcast %295 : vector<8x1xi32> to vector<8x5xi32>
    %297 = arith.select %22, %296, %283 : vector<8x5xi1>, vector<8x5xi32>
    %298 = arith.addf %269, %53 : vector<8x5xf32>
    %cst_94 = arith.constant dense<0xFF800000> : vector<8xf32>
    %299 = vector.multi_reduction <maximumf>, %298, %cst_94 [1] : vector<8x5xf32> to vector<8xf32>
    %300 = vector.shape_cast %299 : vector<8xf32> to vector<8x1xf32>
    %301 = vector.broadcast %300 : vector<8x1xf32> to vector<8x5xf32>
    %302 = arith.cmpf oeq, %298, %301 : vector<8x5xf32>
    %303 = arith.select %302, %12, %14 : vector<8x5xi1>, vector<8x5xi32>
    %cst_95 = arith.constant dense<2147483647> : vector<8xi32>
    %304 = vector.multi_reduction <minsi>, %303, %cst_95 [1] : vector<8x5xi32> to vector<8xi32>
    %305 = vector.shape_cast %304 : vector<8xi32> to vector<8x1xi32>
    %306 = vector.shape_cast %300 : vector<8x1xf32> to vector<8x1xf32>
    %307 = vector.broadcast %306 : vector<8x1xf32> to vector<8x5xf32>
    %308 = arith.select %24, %307, %294 : vector<8x5xi1>, vector<8x5xf32>
    %309 = vector.shape_cast %305 : vector<8x1xi32> to vector<8x1xi32>
    %310 = vector.broadcast %309 : vector<8x1xi32> to vector<8x5xi32>
    %311 = arith.select %24, %310, %297 : vector<8x5xi1>, vector<8x5xi32>
    %312 = arith.addf %269, %56 : vector<8x5xf32>
    %cst_96 = arith.constant dense<0xFF800000> : vector<8xf32>
    %313 = vector.multi_reduction <maximumf>, %312, %cst_96 [1] : vector<8x5xf32> to vector<8xf32>
    %314 = vector.shape_cast %313 : vector<8xf32> to vector<8x1xf32>
    %315 = vector.broadcast %314 : vector<8x1xf32> to vector<8x5xf32>
    %316 = arith.cmpf oeq, %312, %315 : vector<8x5xf32>
    %317 = arith.select %316, %12, %14 : vector<8x5xi1>, vector<8x5xi32>
    %cst_97 = arith.constant dense<2147483647> : vector<8xi32>
    %318 = vector.multi_reduction <minsi>, %317, %cst_97 [1] : vector<8x5xi32> to vector<8xi32>
    %319 = vector.shape_cast %318 : vector<8xi32> to vector<8x1xi32>
    %320 = vector.shape_cast %314 : vector<8x1xf32> to vector<8x1xf32>
    %321 = vector.broadcast %320 : vector<8x1xf32> to vector<8x5xf32>
    %322 = arith.select %26, %321, %308 : vector<8x5xi1>, vector<8x5xf32>
    %323 = vector.shape_cast %319 : vector<8x1xi32> to vector<8x1xi32>
    %324 = vector.broadcast %323 : vector<8x1xi32> to vector<8x5xi32>
    %325 = arith.select %26, %324, %311 : vector<8x5xi1>, vector<8x5xi32>
    %326 = arith.addf %269, %59 : vector<8x5xf32>
    %cst_98 = arith.constant dense<0xFF800000> : vector<8xf32>
    %327 = vector.multi_reduction <maximumf>, %326, %cst_98 [1] : vector<8x5xf32> to vector<8xf32>
    %328 = vector.shape_cast %327 : vector<8xf32> to vector<8x1xf32>
    %329 = vector.broadcast %328 : vector<8x1xf32> to vector<8x5xf32>
    %330 = arith.cmpf oeq, %326, %329 : vector<8x5xf32>
    %331 = arith.select %330, %12, %14 : vector<8x5xi1>, vector<8x5xi32>
    %cst_99 = arith.constant dense<2147483647> : vector<8xi32>
    %332 = vector.multi_reduction <minsi>, %331, %cst_99 [1] : vector<8x5xi32> to vector<8xi32>
    %333 = vector.shape_cast %332 : vector<8xi32> to vector<8x1xi32>
    %334 = vector.shape_cast %328 : vector<8x1xf32> to vector<8x1xf32>
    %335 = vector.broadcast %334 : vector<8x1xf32> to vector<8x5xf32>
    %336 = arith.select %28, %335, %322 : vector<8x5xi1>, vector<8x5xf32>
    %337 = vector.shape_cast %333 : vector<8x1xi32> to vector<8x1xi32>
    %338 = vector.broadcast %337 : vector<8x1xi32> to vector<8x5xi32>
    %339 = arith.select %28, %338, %325 : vector<8x5xi1>, vector<8x5xi32>
    %340 = arith.addf %336, %143 : vector<8x5xf32>
    %341 = arith.addf %340, %47 : vector<8x5xf32>
    %cst_100 = arith.constant dense<0xFF800000> : vector<8xf32>
    %342 = vector.multi_reduction <maximumf>, %341, %cst_100 [1] : vector<8x5xf32> to vector<8xf32>
    %343 = vector.shape_cast %342 : vector<8xf32> to vector<8x1xf32>
    %344 = vector.broadcast %343 : vector<8x1xf32> to vector<8x5xf32>
    %345 = arith.cmpf oeq, %341, %344 : vector<8x5xf32>
    %346 = arith.select %345, %12, %14 : vector<8x5xi1>, vector<8x5xi32>
    %cst_101 = arith.constant dense<2147483647> : vector<8xi32>
    %347 = vector.multi_reduction <minsi>, %346, %cst_101 [1] : vector<8x5xi32> to vector<8xi32>
    %348 = vector.shape_cast %347 : vector<8xi32> to vector<8x1xi32>
    %349 = vector.shape_cast %343 : vector<8x1xf32> to vector<8x1xf32>
    %350 = vector.broadcast %349 : vector<8x1xf32> to vector<8x5xf32>
    %351 = arith.select %20, %350, %15 : vector<8x5xi1>, vector<8x5xf32>
    %352 = vector.shape_cast %348 : vector<8x1xi32> to vector<8x1xi32>
    %353 = vector.broadcast %352 : vector<8x1xi32> to vector<8x5xi32>
    %354 = arith.select %20, %353, %16 : vector<8x5xi1>, vector<8x5xi32>
    %355 = arith.addf %340, %50 : vector<8x5xf32>
    %cst_102 = arith.constant dense<0xFF800000> : vector<8xf32>
    %356 = vector.multi_reduction <maximumf>, %355, %cst_102 [1] : vector<8x5xf32> to vector<8xf32>
    %357 = vector.shape_cast %356 : vector<8xf32> to vector<8x1xf32>
    %358 = vector.broadcast %357 : vector<8x1xf32> to vector<8x5xf32>
    %359 = arith.cmpf oeq, %355, %358 : vector<8x5xf32>
    %360 = arith.select %359, %12, %14 : vector<8x5xi1>, vector<8x5xi32>
    %cst_103 = arith.constant dense<2147483647> : vector<8xi32>
    %361 = vector.multi_reduction <minsi>, %360, %cst_103 [1] : vector<8x5xi32> to vector<8xi32>
    %362 = vector.shape_cast %361 : vector<8xi32> to vector<8x1xi32>
    %363 = vector.shape_cast %357 : vector<8x1xf32> to vector<8x1xf32>
    %364 = vector.broadcast %363 : vector<8x1xf32> to vector<8x5xf32>
    %365 = arith.select %22, %364, %351 : vector<8x5xi1>, vector<8x5xf32>
    %366 = vector.shape_cast %362 : vector<8x1xi32> to vector<8x1xi32>
    %367 = vector.broadcast %366 : vector<8x1xi32> to vector<8x5xi32>
    %368 = arith.select %22, %367, %354 : vector<8x5xi1>, vector<8x5xi32>
    %369 = arith.addf %340, %53 : vector<8x5xf32>
    %cst_104 = arith.constant dense<0xFF800000> : vector<8xf32>
    %370 = vector.multi_reduction <maximumf>, %369, %cst_104 [1] : vector<8x5xf32> to vector<8xf32>
    %371 = vector.shape_cast %370 : vector<8xf32> to vector<8x1xf32>
    %372 = vector.broadcast %371 : vector<8x1xf32> to vector<8x5xf32>
    %373 = arith.cmpf oeq, %369, %372 : vector<8x5xf32>
    %374 = arith.select %373, %12, %14 : vector<8x5xi1>, vector<8x5xi32>
    %cst_105 = arith.constant dense<2147483647> : vector<8xi32>
    %375 = vector.multi_reduction <minsi>, %374, %cst_105 [1] : vector<8x5xi32> to vector<8xi32>
    %376 = vector.shape_cast %375 : vector<8xi32> to vector<8x1xi32>
    %377 = vector.shape_cast %371 : vector<8x1xf32> to vector<8x1xf32>
    %378 = vector.broadcast %377 : vector<8x1xf32> to vector<8x5xf32>
    %379 = arith.select %24, %378, %365 : vector<8x5xi1>, vector<8x5xf32>
    %380 = vector.shape_cast %376 : vector<8x1xi32> to vector<8x1xi32>
    %381 = vector.broadcast %380 : vector<8x1xi32> to vector<8x5xi32>
    %382 = arith.select %24, %381, %368 : vector<8x5xi1>, vector<8x5xi32>
    %383 = arith.addf %340, %56 : vector<8x5xf32>
    %cst_106 = arith.constant dense<0xFF800000> : vector<8xf32>
    %384 = vector.multi_reduction <maximumf>, %383, %cst_106 [1] : vector<8x5xf32> to vector<8xf32>
    %385 = vector.shape_cast %384 : vector<8xf32> to vector<8x1xf32>
    %386 = vector.broadcast %385 : vector<8x1xf32> to vector<8x5xf32>
    %387 = arith.cmpf oeq, %383, %386 : vector<8x5xf32>
    %388 = arith.select %387, %12, %14 : vector<8x5xi1>, vector<8x5xi32>
    %cst_107 = arith.constant dense<2147483647> : vector<8xi32>
    %389 = vector.multi_reduction <minsi>, %388, %cst_107 [1] : vector<8x5xi32> to vector<8xi32>
    %390 = vector.shape_cast %389 : vector<8xi32> to vector<8x1xi32>
    %391 = vector.shape_cast %385 : vector<8x1xf32> to vector<8x1xf32>
    %392 = vector.broadcast %391 : vector<8x1xf32> to vector<8x5xf32>
    %393 = arith.select %26, %392, %379 : vector<8x5xi1>, vector<8x5xf32>
    %394 = vector.shape_cast %390 : vector<8x1xi32> to vector<8x1xi32>
    %395 = vector.broadcast %394 : vector<8x1xi32> to vector<8x5xi32>
    %396 = arith.select %26, %395, %382 : vector<8x5xi1>, vector<8x5xi32>
    %397 = arith.addf %340, %59 : vector<8x5xf32>
    %cst_108 = arith.constant dense<0xFF800000> : vector<8xf32>
    %398 = vector.multi_reduction <maximumf>, %397, %cst_108 [1] : vector<8x5xf32> to vector<8xf32>
    %399 = vector.shape_cast %398 : vector<8xf32> to vector<8x1xf32>
    %400 = vector.broadcast %399 : vector<8x1xf32> to vector<8x5xf32>
    %401 = arith.cmpf oeq, %397, %400 : vector<8x5xf32>
    %402 = arith.select %401, %12, %14 : vector<8x5xi1>, vector<8x5xi32>
    %cst_109 = arith.constant dense<2147483647> : vector<8xi32>
    %403 = vector.multi_reduction <minsi>, %402, %cst_109 [1] : vector<8x5xi32> to vector<8xi32>
    %404 = vector.shape_cast %403 : vector<8xi32> to vector<8x1xi32>
    %405 = vector.shape_cast %399 : vector<8x1xf32> to vector<8x1xf32>
    %406 = vector.broadcast %405 : vector<8x1xf32> to vector<8x5xf32>
    %407 = arith.select %28, %406, %393 : vector<8x5xi1>, vector<8x5xf32>
    %408 = vector.shape_cast %404 : vector<8x1xi32> to vector<8x1xi32>
    %409 = vector.broadcast %408 : vector<8x1xi32> to vector<8x5xi32>
    %410 = arith.select %28, %409, %396 : vector<8x5xi1>, vector<8x5xi32>
    %411 = arith.addf %407, %147 : vector<8x5xf32>
    %412 = arith.addf %411, %47 : vector<8x5xf32>
    %cst_110 = arith.constant dense<0xFF800000> : vector<8xf32>
    %413 = vector.multi_reduction <maximumf>, %412, %cst_110 [1] : vector<8x5xf32> to vector<8xf32>
    %414 = vector.shape_cast %413 : vector<8xf32> to vector<8x1xf32>
    %415 = vector.broadcast %414 : vector<8x1xf32> to vector<8x5xf32>
    %416 = arith.cmpf oeq, %412, %415 : vector<8x5xf32>
    %417 = arith.select %416, %12, %14 : vector<8x5xi1>, vector<8x5xi32>
    %cst_111 = arith.constant dense<2147483647> : vector<8xi32>
    %418 = vector.multi_reduction <minsi>, %417, %cst_111 [1] : vector<8x5xi32> to vector<8xi32>
    %419 = vector.shape_cast %418 : vector<8xi32> to vector<8x1xi32>
    %420 = vector.shape_cast %414 : vector<8x1xf32> to vector<8x1xf32>
    %421 = vector.broadcast %420 : vector<8x1xf32> to vector<8x5xf32>
    %422 = arith.select %20, %421, %15 : vector<8x5xi1>, vector<8x5xf32>
    %423 = vector.shape_cast %419 : vector<8x1xi32> to vector<8x1xi32>
    %424 = vector.broadcast %423 : vector<8x1xi32> to vector<8x5xi32>
    %425 = arith.select %20, %424, %16 : vector<8x5xi1>, vector<8x5xi32>
    %426 = arith.addf %411, %50 : vector<8x5xf32>
    %cst_112 = arith.constant dense<0xFF800000> : vector<8xf32>
    %427 = vector.multi_reduction <maximumf>, %426, %cst_112 [1] : vector<8x5xf32> to vector<8xf32>
    %428 = vector.shape_cast %427 : vector<8xf32> to vector<8x1xf32>
    %429 = vector.broadcast %428 : vector<8x1xf32> to vector<8x5xf32>
    %430 = arith.cmpf oeq, %426, %429 : vector<8x5xf32>
    %431 = arith.select %430, %12, %14 : vector<8x5xi1>, vector<8x5xi32>
    %cst_113 = arith.constant dense<2147483647> : vector<8xi32>
    %432 = vector.multi_reduction <minsi>, %431, %cst_113 [1] : vector<8x5xi32> to vector<8xi32>
    %433 = vector.shape_cast %432 : vector<8xi32> to vector<8x1xi32>
    %434 = vector.shape_cast %428 : vector<8x1xf32> to vector<8x1xf32>
    %435 = vector.broadcast %434 : vector<8x1xf32> to vector<8x5xf32>
    %436 = arith.select %22, %435, %422 : vector<8x5xi1>, vector<8x5xf32>
    %437 = vector.shape_cast %433 : vector<8x1xi32> to vector<8x1xi32>
    %438 = vector.broadcast %437 : vector<8x1xi32> to vector<8x5xi32>
    %439 = arith.select %22, %438, %425 : vector<8x5xi1>, vector<8x5xi32>
    %440 = arith.addf %411, %53 : vector<8x5xf32>
    %cst_114 = arith.constant dense<0xFF800000> : vector<8xf32>
    %441 = vector.multi_reduction <maximumf>, %440, %cst_114 [1] : vector<8x5xf32> to vector<8xf32>
    %442 = vector.shape_cast %441 : vector<8xf32> to vector<8x1xf32>
    %443 = vector.broadcast %442 : vector<8x1xf32> to vector<8x5xf32>
    %444 = arith.cmpf oeq, %440, %443 : vector<8x5xf32>
    %445 = arith.select %444, %12, %14 : vector<8x5xi1>, vector<8x5xi32>
    %cst_115 = arith.constant dense<2147483647> : vector<8xi32>
    %446 = vector.multi_reduction <minsi>, %445, %cst_115 [1] : vector<8x5xi32> to vector<8xi32>
    %447 = vector.shape_cast %446 : vector<8xi32> to vector<8x1xi32>
    %448 = vector.shape_cast %442 : vector<8x1xf32> to vector<8x1xf32>
    %449 = vector.broadcast %448 : vector<8x1xf32> to vector<8x5xf32>
    %450 = arith.select %24, %449, %436 : vector<8x5xi1>, vector<8x5xf32>
    %451 = vector.shape_cast %447 : vector<8x1xi32> to vector<8x1xi32>
    %452 = vector.broadcast %451 : vector<8x1xi32> to vector<8x5xi32>
    %453 = arith.select %24, %452, %439 : vector<8x5xi1>, vector<8x5xi32>
    %454 = arith.addf %411, %56 : vector<8x5xf32>
    %cst_116 = arith.constant dense<0xFF800000> : vector<8xf32>
    %455 = vector.multi_reduction <maximumf>, %454, %cst_116 [1] : vector<8x5xf32> to vector<8xf32>
    %456 = vector.shape_cast %455 : vector<8xf32> to vector<8x1xf32>
    %457 = vector.broadcast %456 : vector<8x1xf32> to vector<8x5xf32>
    %458 = arith.cmpf oeq, %454, %457 : vector<8x5xf32>
    %459 = arith.select %458, %12, %14 : vector<8x5xi1>, vector<8x5xi32>
    %cst_117 = arith.constant dense<2147483647> : vector<8xi32>
    %460 = vector.multi_reduction <minsi>, %459, %cst_117 [1] : vector<8x5xi32> to vector<8xi32>
    %461 = vector.shape_cast %460 : vector<8xi32> to vector<8x1xi32>
    %462 = vector.shape_cast %456 : vector<8x1xf32> to vector<8x1xf32>
    %463 = vector.broadcast %462 : vector<8x1xf32> to vector<8x5xf32>
    %464 = arith.select %26, %463, %450 : vector<8x5xi1>, vector<8x5xf32>
    %465 = vector.shape_cast %461 : vector<8x1xi32> to vector<8x1xi32>
    %466 = vector.broadcast %465 : vector<8x1xi32> to vector<8x5xi32>
    %467 = arith.select %26, %466, %453 : vector<8x5xi1>, vector<8x5xi32>
    %468 = arith.addf %411, %59 : vector<8x5xf32>
    %cst_118 = arith.constant dense<0xFF800000> : vector<8xf32>
    %469 = vector.multi_reduction <maximumf>, %468, %cst_118 [1] : vector<8x5xf32> to vector<8xf32>
    %470 = vector.shape_cast %469 : vector<8xf32> to vector<8x1xf32>
    %471 = vector.broadcast %470 : vector<8x1xf32> to vector<8x5xf32>
    %472 = arith.cmpf oeq, %468, %471 : vector<8x5xf32>
    %473 = arith.select %472, %12, %14 : vector<8x5xi1>, vector<8x5xi32>
    %cst_119 = arith.constant dense<2147483647> : vector<8xi32>
    %474 = vector.multi_reduction <minsi>, %473, %cst_119 [1] : vector<8x5xi32> to vector<8xi32>
    %475 = vector.shape_cast %474 : vector<8xi32> to vector<8x1xi32>
    %476 = vector.shape_cast %470 : vector<8x1xf32> to vector<8x1xf32>
    %477 = vector.broadcast %476 : vector<8x1xf32> to vector<8x5xf32>
    %478 = arith.select %28, %477, %464 : vector<8x5xi1>, vector<8x5xf32>
    %479 = vector.shape_cast %475 : vector<8x1xi32> to vector<8x1xi32>
    %480 = vector.broadcast %479 : vector<8x1xi32> to vector<8x5xi32>
    %481 = arith.select %28, %480, %467 : vector<8x5xi1>, vector<8x5xi32>
    %482 = arith.addf %478, %151 : vector<8x5xf32>
    %483 = arith.addf %482, %47 : vector<8x5xf32>
    %cst_120 = arith.constant dense<0xFF800000> : vector<8xf32>
    %484 = vector.multi_reduction <maximumf>, %483, %cst_120 [1] : vector<8x5xf32> to vector<8xf32>
    %485 = vector.shape_cast %484 : vector<8xf32> to vector<8x1xf32>
    %486 = vector.broadcast %485 : vector<8x1xf32> to vector<8x5xf32>
    %487 = arith.cmpf oeq, %483, %486 : vector<8x5xf32>
    %488 = arith.select %487, %12, %14 : vector<8x5xi1>, vector<8x5xi32>
    %cst_121 = arith.constant dense<2147483647> : vector<8xi32>
    %489 = vector.multi_reduction <minsi>, %488, %cst_121 [1] : vector<8x5xi32> to vector<8xi32>
    %490 = vector.shape_cast %489 : vector<8xi32> to vector<8x1xi32>
    %491 = vector.shape_cast %485 : vector<8x1xf32> to vector<8x1xf32>
    %492 = vector.broadcast %491 : vector<8x1xf32> to vector<8x5xf32>
    %493 = arith.select %20, %492, %15 : vector<8x5xi1>, vector<8x5xf32>
    %494 = vector.shape_cast %490 : vector<8x1xi32> to vector<8x1xi32>
    %495 = vector.broadcast %494 : vector<8x1xi32> to vector<8x5xi32>
    %496 = arith.select %20, %495, %16 : vector<8x5xi1>, vector<8x5xi32>
    %497 = arith.addf %482, %50 : vector<8x5xf32>
    %cst_122 = arith.constant dense<0xFF800000> : vector<8xf32>
    %498 = vector.multi_reduction <maximumf>, %497, %cst_122 [1] : vector<8x5xf32> to vector<8xf32>
    %499 = vector.shape_cast %498 : vector<8xf32> to vector<8x1xf32>
    %500 = vector.broadcast %499 : vector<8x1xf32> to vector<8x5xf32>
    %501 = arith.cmpf oeq, %497, %500 : vector<8x5xf32>
    %502 = arith.select %501, %12, %14 : vector<8x5xi1>, vector<8x5xi32>
    %cst_123 = arith.constant dense<2147483647> : vector<8xi32>
    %503 = vector.multi_reduction <minsi>, %502, %cst_123 [1] : vector<8x5xi32> to vector<8xi32>
    %504 = vector.shape_cast %503 : vector<8xi32> to vector<8x1xi32>
    %505 = vector.shape_cast %499 : vector<8x1xf32> to vector<8x1xf32>
    %506 = vector.broadcast %505 : vector<8x1xf32> to vector<8x5xf32>
    %507 = arith.select %22, %506, %493 : vector<8x5xi1>, vector<8x5xf32>
    %508 = vector.shape_cast %504 : vector<8x1xi32> to vector<8x1xi32>
    %509 = vector.broadcast %508 : vector<8x1xi32> to vector<8x5xi32>
    %510 = arith.select %22, %509, %496 : vector<8x5xi1>, vector<8x5xi32>
    %511 = arith.addf %482, %53 : vector<8x5xf32>
    %cst_124 = arith.constant dense<0xFF800000> : vector<8xf32>
    %512 = vector.multi_reduction <maximumf>, %511, %cst_124 [1] : vector<8x5xf32> to vector<8xf32>
    %513 = vector.shape_cast %512 : vector<8xf32> to vector<8x1xf32>
    %514 = vector.broadcast %513 : vector<8x1xf32> to vector<8x5xf32>
    %515 = arith.cmpf oeq, %511, %514 : vector<8x5xf32>
    %516 = arith.select %515, %12, %14 : vector<8x5xi1>, vector<8x5xi32>
    %cst_125 = arith.constant dense<2147483647> : vector<8xi32>
    %517 = vector.multi_reduction <minsi>, %516, %cst_125 [1] : vector<8x5xi32> to vector<8xi32>
    %518 = vector.shape_cast %517 : vector<8xi32> to vector<8x1xi32>
    %519 = vector.shape_cast %513 : vector<8x1xf32> to vector<8x1xf32>
    %520 = vector.broadcast %519 : vector<8x1xf32> to vector<8x5xf32>
    %521 = arith.select %24, %520, %507 : vector<8x5xi1>, vector<8x5xf32>
    %522 = vector.shape_cast %518 : vector<8x1xi32> to vector<8x1xi32>
    %523 = vector.broadcast %522 : vector<8x1xi32> to vector<8x5xi32>
    %524 = arith.select %24, %523, %510 : vector<8x5xi1>, vector<8x5xi32>
    %525 = arith.addf %482, %56 : vector<8x5xf32>
    %cst_126 = arith.constant dense<0xFF800000> : vector<8xf32>
    %526 = vector.multi_reduction <maximumf>, %525, %cst_126 [1] : vector<8x5xf32> to vector<8xf32>
    %527 = vector.shape_cast %526 : vector<8xf32> to vector<8x1xf32>
    %528 = vector.broadcast %527 : vector<8x1xf32> to vector<8x5xf32>
    %529 = arith.cmpf oeq, %525, %528 : vector<8x5xf32>
    %530 = arith.select %529, %12, %14 : vector<8x5xi1>, vector<8x5xi32>
    %cst_127 = arith.constant dense<2147483647> : vector<8xi32>
    %531 = vector.multi_reduction <minsi>, %530, %cst_127 [1] : vector<8x5xi32> to vector<8xi32>
    %532 = vector.shape_cast %531 : vector<8xi32> to vector<8x1xi32>
    %533 = vector.shape_cast %527 : vector<8x1xf32> to vector<8x1xf32>
    %534 = vector.broadcast %533 : vector<8x1xf32> to vector<8x5xf32>
    %535 = arith.select %26, %534, %521 : vector<8x5xi1>, vector<8x5xf32>
    %536 = vector.shape_cast %532 : vector<8x1xi32> to vector<8x1xi32>
    %537 = vector.broadcast %536 : vector<8x1xi32> to vector<8x5xi32>
    %538 = arith.select %26, %537, %524 : vector<8x5xi1>, vector<8x5xi32>
    %539 = arith.addf %482, %59 : vector<8x5xf32>
    %cst_128 = arith.constant dense<0xFF800000> : vector<8xf32>
    %540 = vector.multi_reduction <maximumf>, %539, %cst_128 [1] : vector<8x5xf32> to vector<8xf32>
    %541 = vector.shape_cast %540 : vector<8xf32> to vector<8x1xf32>
    %542 = vector.broadcast %541 : vector<8x1xf32> to vector<8x5xf32>
    %543 = arith.cmpf oeq, %539, %542 : vector<8x5xf32>
    %544 = arith.select %543, %12, %14 : vector<8x5xi1>, vector<8x5xi32>
    %cst_129 = arith.constant dense<2147483647> : vector<8xi32>
    %545 = vector.multi_reduction <minsi>, %544, %cst_129 [1] : vector<8x5xi32> to vector<8xi32>
    %546 = vector.shape_cast %545 : vector<8xi32> to vector<8x1xi32>
    %547 = vector.shape_cast %541 : vector<8x1xf32> to vector<8x1xf32>
    %548 = vector.broadcast %547 : vector<8x1xf32> to vector<8x5xf32>
    %549 = arith.select %28, %548, %535 : vector<8x5xi1>, vector<8x5xf32>
    %550 = vector.shape_cast %546 : vector<8x1xi32> to vector<8x1xi32>
    %551 = vector.broadcast %550 : vector<8x1xi32> to vector<8x5xi32>
    %552 = arith.select %28, %551, %538 : vector<8x5xi1>, vector<8x5xi32>
    %553 = arith.addf %549, %155 : vector<8x5xf32>
    %554 = arith.addf %553, %47 : vector<8x5xf32>
    %cst_130 = arith.constant dense<0xFF800000> : vector<8xf32>
    %555 = vector.multi_reduction <maximumf>, %554, %cst_130 [1] : vector<8x5xf32> to vector<8xf32>
    %556 = vector.shape_cast %555 : vector<8xf32> to vector<8x1xf32>
    %557 = vector.broadcast %556 : vector<8x1xf32> to vector<8x5xf32>
    %558 = arith.cmpf oeq, %554, %557 : vector<8x5xf32>
    %559 = arith.select %558, %12, %14 : vector<8x5xi1>, vector<8x5xi32>
    %cst_131 = arith.constant dense<2147483647> : vector<8xi32>
    %560 = vector.multi_reduction <minsi>, %559, %cst_131 [1] : vector<8x5xi32> to vector<8xi32>
    %561 = vector.shape_cast %560 : vector<8xi32> to vector<8x1xi32>
    %562 = vector.shape_cast %556 : vector<8x1xf32> to vector<8x1xf32>
    %563 = vector.broadcast %562 : vector<8x1xf32> to vector<8x5xf32>
    %564 = arith.select %20, %563, %15 : vector<8x5xi1>, vector<8x5xf32>
    %565 = vector.shape_cast %561 : vector<8x1xi32> to vector<8x1xi32>
    %566 = vector.broadcast %565 : vector<8x1xi32> to vector<8x5xi32>
    %567 = arith.select %20, %566, %16 : vector<8x5xi1>, vector<8x5xi32>
    %568 = arith.addf %553, %50 : vector<8x5xf32>
    %cst_132 = arith.constant dense<0xFF800000> : vector<8xf32>
    %569 = vector.multi_reduction <maximumf>, %568, %cst_132 [1] : vector<8x5xf32> to vector<8xf32>
    %570 = vector.shape_cast %569 : vector<8xf32> to vector<8x1xf32>
    %571 = vector.broadcast %570 : vector<8x1xf32> to vector<8x5xf32>
    %572 = arith.cmpf oeq, %568, %571 : vector<8x5xf32>
    %573 = arith.select %572, %12, %14 : vector<8x5xi1>, vector<8x5xi32>
    %cst_133 = arith.constant dense<2147483647> : vector<8xi32>
    %574 = vector.multi_reduction <minsi>, %573, %cst_133 [1] : vector<8x5xi32> to vector<8xi32>
    %575 = vector.shape_cast %574 : vector<8xi32> to vector<8x1xi32>
    %576 = vector.shape_cast %570 : vector<8x1xf32> to vector<8x1xf32>
    %577 = vector.broadcast %576 : vector<8x1xf32> to vector<8x5xf32>
    %578 = arith.select %22, %577, %564 : vector<8x5xi1>, vector<8x5xf32>
    %579 = vector.shape_cast %575 : vector<8x1xi32> to vector<8x1xi32>
    %580 = vector.broadcast %579 : vector<8x1xi32> to vector<8x5xi32>
    %581 = arith.select %22, %580, %567 : vector<8x5xi1>, vector<8x5xi32>
    %582 = arith.addf %553, %53 : vector<8x5xf32>
    %cst_134 = arith.constant dense<0xFF800000> : vector<8xf32>
    %583 = vector.multi_reduction <maximumf>, %582, %cst_134 [1] : vector<8x5xf32> to vector<8xf32>
    %584 = vector.shape_cast %583 : vector<8xf32> to vector<8x1xf32>
    %585 = vector.broadcast %584 : vector<8x1xf32> to vector<8x5xf32>
    %586 = arith.cmpf oeq, %582, %585 : vector<8x5xf32>
    %587 = arith.select %586, %12, %14 : vector<8x5xi1>, vector<8x5xi32>
    %cst_135 = arith.constant dense<2147483647> : vector<8xi32>
    %588 = vector.multi_reduction <minsi>, %587, %cst_135 [1] : vector<8x5xi32> to vector<8xi32>
    %589 = vector.shape_cast %588 : vector<8xi32> to vector<8x1xi32>
    %590 = vector.shape_cast %584 : vector<8x1xf32> to vector<8x1xf32>
    %591 = vector.broadcast %590 : vector<8x1xf32> to vector<8x5xf32>
    %592 = arith.select %24, %591, %578 : vector<8x5xi1>, vector<8x5xf32>
    %593 = vector.shape_cast %589 : vector<8x1xi32> to vector<8x1xi32>
    %594 = vector.broadcast %593 : vector<8x1xi32> to vector<8x5xi32>
    %595 = arith.select %24, %594, %581 : vector<8x5xi1>, vector<8x5xi32>
    %596 = arith.addf %553, %56 : vector<8x5xf32>
    %cst_136 = arith.constant dense<0xFF800000> : vector<8xf32>
    %597 = vector.multi_reduction <maximumf>, %596, %cst_136 [1] : vector<8x5xf32> to vector<8xf32>
    %598 = vector.shape_cast %597 : vector<8xf32> to vector<8x1xf32>
    %599 = vector.broadcast %598 : vector<8x1xf32> to vector<8x5xf32>
    %600 = arith.cmpf oeq, %596, %599 : vector<8x5xf32>
    %601 = arith.select %600, %12, %14 : vector<8x5xi1>, vector<8x5xi32>
    %cst_137 = arith.constant dense<2147483647> : vector<8xi32>
    %602 = vector.multi_reduction <minsi>, %601, %cst_137 [1] : vector<8x5xi32> to vector<8xi32>
    %603 = vector.shape_cast %602 : vector<8xi32> to vector<8x1xi32>
    %604 = vector.shape_cast %598 : vector<8x1xf32> to vector<8x1xf32>
    %605 = vector.broadcast %604 : vector<8x1xf32> to vector<8x5xf32>
    %606 = arith.select %26, %605, %592 : vector<8x5xi1>, vector<8x5xf32>
    %607 = vector.shape_cast %603 : vector<8x1xi32> to vector<8x1xi32>
    %608 = vector.broadcast %607 : vector<8x1xi32> to vector<8x5xi32>
    %609 = arith.select %26, %608, %595 : vector<8x5xi1>, vector<8x5xi32>
    %610 = arith.addf %553, %59 : vector<8x5xf32>
    %cst_138 = arith.constant dense<0xFF800000> : vector<8xf32>
    %611 = vector.multi_reduction <maximumf>, %610, %cst_138 [1] : vector<8x5xf32> to vector<8xf32>
    %612 = vector.shape_cast %611 : vector<8xf32> to vector<8x1xf32>
    %613 = vector.broadcast %612 : vector<8x1xf32> to vector<8x5xf32>
    %614 = arith.cmpf oeq, %610, %613 : vector<8x5xf32>
    %615 = arith.select %614, %12, %14 : vector<8x5xi1>, vector<8x5xi32>
    %cst_139 = arith.constant dense<2147483647> : vector<8xi32>
    %616 = vector.multi_reduction <minsi>, %615, %cst_139 [1] : vector<8x5xi32> to vector<8xi32>
    %617 = vector.shape_cast %616 : vector<8xi32> to vector<8x1xi32>
    %618 = vector.shape_cast %612 : vector<8x1xf32> to vector<8x1xf32>
    %619 = vector.broadcast %618 : vector<8x1xf32> to vector<8x5xf32>
    %620 = arith.select %28, %619, %606 : vector<8x5xi1>, vector<8x5xf32>
    %621 = vector.shape_cast %617 : vector<8x1xi32> to vector<8x1xi32>
    %622 = vector.broadcast %621 : vector<8x1xi32> to vector<8x5xi32>
    %623 = arith.select %28, %622, %609 : vector<8x5xi1>, vector<8x5xi32>
    %624 = arith.addf %620, %159 : vector<8x5xf32>
    %625 = arith.addf %624, %47 : vector<8x5xf32>
    %cst_140 = arith.constant dense<0xFF800000> : vector<8xf32>
    %626 = vector.multi_reduction <maximumf>, %625, %cst_140 [1] : vector<8x5xf32> to vector<8xf32>
    %627 = vector.shape_cast %626 : vector<8xf32> to vector<8x1xf32>
    %628 = vector.broadcast %627 : vector<8x1xf32> to vector<8x5xf32>
    %629 = arith.cmpf oeq, %625, %628 : vector<8x5xf32>
    %630 = arith.select %629, %12, %14 : vector<8x5xi1>, vector<8x5xi32>
    %cst_141 = arith.constant dense<2147483647> : vector<8xi32>
    %631 = vector.multi_reduction <minsi>, %630, %cst_141 [1] : vector<8x5xi32> to vector<8xi32>
    %632 = vector.shape_cast %631 : vector<8xi32> to vector<8x1xi32>
    %633 = vector.shape_cast %627 : vector<8x1xf32> to vector<8x1xf32>
    %634 = vector.broadcast %633 : vector<8x1xf32> to vector<8x5xf32>
    %635 = arith.select %20, %634, %15 : vector<8x5xi1>, vector<8x5xf32>
    %636 = vector.shape_cast %632 : vector<8x1xi32> to vector<8x1xi32>
    %637 = vector.broadcast %636 : vector<8x1xi32> to vector<8x5xi32>
    %638 = arith.select %20, %637, %16 : vector<8x5xi1>, vector<8x5xi32>
    %639 = arith.addf %624, %50 : vector<8x5xf32>
    %cst_142 = arith.constant dense<0xFF800000> : vector<8xf32>
    %640 = vector.multi_reduction <maximumf>, %639, %cst_142 [1] : vector<8x5xf32> to vector<8xf32>
    %641 = vector.shape_cast %640 : vector<8xf32> to vector<8x1xf32>
    %642 = vector.broadcast %641 : vector<8x1xf32> to vector<8x5xf32>
    %643 = arith.cmpf oeq, %639, %642 : vector<8x5xf32>
    %644 = arith.select %643, %12, %14 : vector<8x5xi1>, vector<8x5xi32>
    %cst_143 = arith.constant dense<2147483647> : vector<8xi32>
    %645 = vector.multi_reduction <minsi>, %644, %cst_143 [1] : vector<8x5xi32> to vector<8xi32>
    %646 = vector.shape_cast %645 : vector<8xi32> to vector<8x1xi32>
    %647 = vector.shape_cast %641 : vector<8x1xf32> to vector<8x1xf32>
    %648 = vector.broadcast %647 : vector<8x1xf32> to vector<8x5xf32>
    %649 = arith.select %22, %648, %635 : vector<8x5xi1>, vector<8x5xf32>
    %650 = vector.shape_cast %646 : vector<8x1xi32> to vector<8x1xi32>
    %651 = vector.broadcast %650 : vector<8x1xi32> to vector<8x5xi32>
    %652 = arith.select %22, %651, %638 : vector<8x5xi1>, vector<8x5xi32>
    %653 = arith.addf %624, %53 : vector<8x5xf32>
    %cst_144 = arith.constant dense<0xFF800000> : vector<8xf32>
    %654 = vector.multi_reduction <maximumf>, %653, %cst_144 [1] : vector<8x5xf32> to vector<8xf32>
    %655 = vector.shape_cast %654 : vector<8xf32> to vector<8x1xf32>
    %656 = vector.broadcast %655 : vector<8x1xf32> to vector<8x5xf32>
    %657 = arith.cmpf oeq, %653, %656 : vector<8x5xf32>
    %658 = arith.select %657, %12, %14 : vector<8x5xi1>, vector<8x5xi32>
    %cst_145 = arith.constant dense<2147483647> : vector<8xi32>
    %659 = vector.multi_reduction <minsi>, %658, %cst_145 [1] : vector<8x5xi32> to vector<8xi32>
    %660 = vector.shape_cast %659 : vector<8xi32> to vector<8x1xi32>
    %661 = vector.shape_cast %655 : vector<8x1xf32> to vector<8x1xf32>
    %662 = vector.broadcast %661 : vector<8x1xf32> to vector<8x5xf32>
    %663 = arith.select %24, %662, %649 : vector<8x5xi1>, vector<8x5xf32>
    %664 = vector.shape_cast %660 : vector<8x1xi32> to vector<8x1xi32>
    %665 = vector.broadcast %664 : vector<8x1xi32> to vector<8x5xi32>
    %666 = arith.select %24, %665, %652 : vector<8x5xi1>, vector<8x5xi32>
    %667 = arith.addf %624, %56 : vector<8x5xf32>
    %cst_146 = arith.constant dense<0xFF800000> : vector<8xf32>
    %668 = vector.multi_reduction <maximumf>, %667, %cst_146 [1] : vector<8x5xf32> to vector<8xf32>
    %669 = vector.shape_cast %668 : vector<8xf32> to vector<8x1xf32>
    %670 = vector.broadcast %669 : vector<8x1xf32> to vector<8x5xf32>
    %671 = arith.cmpf oeq, %667, %670 : vector<8x5xf32>
    %672 = arith.select %671, %12, %14 : vector<8x5xi1>, vector<8x5xi32>
    %cst_147 = arith.constant dense<2147483647> : vector<8xi32>
    %673 = vector.multi_reduction <minsi>, %672, %cst_147 [1] : vector<8x5xi32> to vector<8xi32>
    %674 = vector.shape_cast %673 : vector<8xi32> to vector<8x1xi32>
    %675 = vector.shape_cast %669 : vector<8x1xf32> to vector<8x1xf32>
    %676 = vector.broadcast %675 : vector<8x1xf32> to vector<8x5xf32>
    %677 = arith.select %26, %676, %663 : vector<8x5xi1>, vector<8x5xf32>
    %678 = vector.shape_cast %674 : vector<8x1xi32> to vector<8x1xi32>
    %679 = vector.broadcast %678 : vector<8x1xi32> to vector<8x5xi32>
    %680 = arith.select %26, %679, %666 : vector<8x5xi1>, vector<8x5xi32>
    %681 = arith.addf %624, %59 : vector<8x5xf32>
    %cst_148 = arith.constant dense<0xFF800000> : vector<8xf32>
    %682 = vector.multi_reduction <maximumf>, %681, %cst_148 [1] : vector<8x5xf32> to vector<8xf32>
    %683 = vector.shape_cast %682 : vector<8xf32> to vector<8x1xf32>
    %684 = vector.broadcast %683 : vector<8x1xf32> to vector<8x5xf32>
    %685 = arith.cmpf oeq, %681, %684 : vector<8x5xf32>
    %686 = arith.select %685, %12, %14 : vector<8x5xi1>, vector<8x5xi32>
    %cst_149 = arith.constant dense<2147483647> : vector<8xi32>
    %687 = vector.multi_reduction <minsi>, %686, %cst_149 [1] : vector<8x5xi32> to vector<8xi32>
    %688 = vector.shape_cast %687 : vector<8xi32> to vector<8x1xi32>
    %689 = vector.shape_cast %683 : vector<8x1xf32> to vector<8x1xf32>
    %690 = vector.broadcast %689 : vector<8x1xf32> to vector<8x5xf32>
    %691 = arith.select %28, %690, %677 : vector<8x5xi1>, vector<8x5xf32>
    %692 = vector.shape_cast %688 : vector<8x1xi32> to vector<8x1xi32>
    %693 = vector.broadcast %692 : vector<8x1xi32> to vector<8x5xi32>
    %694 = arith.select %28, %693, %680 : vector<8x5xi1>, vector<8x5xi32>
    %695 = arith.addf %691, %163 : vector<8x5xf32>
    %696 = vector.broadcast %6 : vector<1x5xf32> to vector<8x5xf32>
    %697 = arith.addf %695, %696 : vector<8x5xf32>
    %cst_150 = arith.constant dense<0xFF800000> : vector<8xf32>
    %698 = vector.multi_reduction <maximumf>, %697, %cst_150 [1] : vector<8x5xf32> to vector<8xf32>
    %699 = vector.shape_cast %698 : vector<8xf32> to vector<8x1xf32>
    %700 = vector.broadcast %699 : vector<8x1xf32> to vector<8x5xf32>
    %701 = arith.cmpf oeq, %697, %700 : vector<8x5xf32>
    %702 = arith.select %701, %12, %14 : vector<8x5xi1>, vector<8x5xi32>
    %cst_151 = arith.constant dense<2147483647> : vector<8xi32>
    %703 = vector.multi_reduction <minsi>, %702, %cst_151 [1] : vector<8x5xi32> to vector<8xi32>
    %704 = vector.shape_cast %703 : vector<8xi32> to vector<8x1xi32>
    %c0_152 = arith.constant 0 : index
    %c0_153 = arith.constant 0 : index
    %705 = vector.load %arg11[%c0_152, %c0_153] : memref<8x1xf32, #tpu.memory_space<vmem>>, vector<8x1xf32>
    tpu.vector_store %arg11[%c0_152, %c0_153], %699 {strides = array<i32>} : memref<8x1xf32, #tpu.memory_space<vmem>>, vector<8x1xf32>,
    %706 = vector.shape_cast %704 : vector<8x1xi32> to vector<8x1xi32>
    %707 = vector.broadcast %706 : vector<8x1xi32> to vector<8x8xi32>
    %708 = arith.select %44, %707, %17 : vector<8x8xi1>, vector<8x8xi32>
    %709 = vector.broadcast %704 : vector<8x1xi32> to vector<8x5xi32>
    %710 = arith.cmpi eq, %12, %709 : vector<8x5xi32>
    %711 = arith.select %710, %694, %16 : vector<8x5xi1>, vector<8x5xi32>
    %cst_154 = arith.constant dense<0> : vector<8xi32>
    %712 = vector.multi_reduction <add>, %711, %cst_154 [1] : vector<8x5xi32> to vector<8xi32>
    %713 = vector.shape_cast %712 : vector<8xi32> to vector<8x1xi32>
    %714 = vector.shape_cast %713 : vector<8x1xi32> to vector<8x1xi32>
    %715 = vector.broadcast %714 : vector<8x1xi32> to vector<8x8xi32>
    %716 = arith.select %42, %715, %708 : vector<8x8xi1>, vector<8x8xi32>
    %717 = vector.broadcast %713 : vector<8x1xi32> to vector<8x5xi32>
    %718 = arith.cmpi eq, %12, %717 : vector<8x5xi32>
    %719 = arith.select %718, %623, %16 : vector<8x5xi1>, vector<8x5xi32>
    %cst_155 = arith.constant dense<0> : vector<8xi32>
    %720 = vector.multi_reduction <add>, %719, %cst_155 [1] : vector<8x5xi32> to vector<8xi32>
    %721 = vector.shape_cast %720 : vector<8xi32> to vector<8x1xi32>
    %722 = vector.shape_cast %721 : vector<8x1xi32> to vector<8x1xi32>
    %723 = vector.broadcast %722 : vector<8x1xi32> to vector<8x8xi32>
    %724 = arith.select %40, %723, %716 : vector<8x8xi1>, vector<8x8xi32>
    %725 = vector.broadcast %721 : vector<8x1xi32> to vector<8x5xi32>
    %726 = arith.cmpi eq, %12, %725 : vector<8x5xi32>
    %727 = arith.select %726, %552, %16 : vector<8x5xi1>, vector<8x5xi32>
    %cst_156 = arith.constant dense<0> : vector<8xi32>
    %728 = vector.multi_reduction <add>, %727, %cst_156 [1] : vector<8x5xi32> to vector<8xi32>
    %729 = vector.shape_cast %728 : vector<8xi32> to vector<8x1xi32>
    %730 = vector.shape_cast %729 : vector<8x1xi32> to vector<8x1xi32>
    %731 = vector.broadcast %730 : vector<8x1xi32> to vector<8x8xi32>
    %732 = arith.select %38, %731, %724 : vector<8x8xi1>, vector<8x8xi32>
    %733 = vector.broadcast %729 : vector<8x1xi32> to vector<8x5xi32>
    %734 = arith.cmpi eq, %12, %733 : vector<8x5xi32>
    %735 = arith.select %734, %481, %16 : vector<8x5xi1>, vector<8x5xi32>
    %cst_157 = arith.constant dense<0> : vector<8xi32>
    %736 = vector.multi_reduction <add>, %735, %cst_157 [1] : vector<8x5xi32> to vector<8xi32>
    %737 = vector.shape_cast %736 : vector<8xi32> to vector<8x1xi32>
    %738 = vector.shape_cast %737 : vector<8x1xi32> to vector<8x1xi32>
    %739 = vector.broadcast %738 : vector<8x1xi32> to vector<8x8xi32>
    %740 = arith.select %36, %739, %732 : vector<8x8xi1>, vector<8x8xi32>
    %741 = vector.broadcast %737 : vector<8x1xi32> to vector<8x5xi32>
    %742 = arith.cmpi eq, %12, %741 : vector<8x5xi32>
    %743 = arith.select %742, %410, %16 : vector<8x5xi1>, vector<8x5xi32>
    %cst_158 = arith.constant dense<0> : vector<8xi32>
    %744 = vector.multi_reduction <add>, %743, %cst_158 [1] : vector<8x5xi32> to vector<8xi32>
    %745 = vector.shape_cast %744 : vector<8xi32> to vector<8x1xi32>
    %746 = vector.shape_cast %745 : vector<8x1xi32> to vector<8x1xi32>
    %747 = vector.broadcast %746 : vector<8x1xi32> to vector<8x8xi32>
    %748 = arith.select %34, %747, %740 : vector<8x8xi1>, vector<8x8xi32>
    %749 = vector.broadcast %745 : vector<8x1xi32> to vector<8x5xi32>
    %750 = arith.cmpi eq, %12, %749 : vector<8x5xi32>
    %751 = arith.select %750, %339, %16 : vector<8x5xi1>, vector<8x5xi32>
    %cst_159 = arith.constant dense<0> : vector<8xi32>
    %752 = vector.multi_reduction <add>, %751, %cst_159 [1] : vector<8x5xi32> to vector<8xi32>
    %753 = vector.shape_cast %752 : vector<8xi32> to vector<8x1xi32>
    %754 = vector.shape_cast %753 : vector<8x1xi32> to vector<8x1xi32>
    %755 = vector.broadcast %754 : vector<8x1xi32> to vector<8x8xi32>
    %756 = arith.select %32, %755, %748 : vector<8x8xi1>, vector<8x8xi32>
    %757 = vector.broadcast %753 : vector<8x1xi32> to vector<8x5xi32>
    %758 = arith.cmpi eq, %12, %757 : vector<8x5xi32>
    %759 = arith.select %758, %268, %16 : vector<8x5xi1>, vector<8x5xi32>
    %cst_160 = arith.constant dense<0> : vector<8xi32>
    %760 = vector.multi_reduction <add>, %759, %cst_160 [1] : vector<8x5xi32> to vector<8xi32>
    %761 = vector.shape_cast %760 : vector<8xi32> to vector<8x1xi32>
    %762 = vector.shape_cast %761 : vector<8x1xi32> to vector<8x1xi32>
    %763 = vector.broadcast %762 : vector<8x1xi32> to vector<8x8xi32>
    %764 = arith.select %30, %763, %756 : vector<8x8xi1>, vector<8x8xi32>
    %c0_161 = arith.constant 0 : index
    %c0_162 = arith.constant 0 : index
    %765 = vector.load %arg12[%c0_161, %c0_162] : memref<8x8xi32, #tpu.memory_space<vmem>>, vector<8x8xi32>
    tpu.vector_store %arg12[%c0_161, %c0_162], %764 {strides = array<i32>} : memref<8x8xi32, #tpu.memory_space<vmem>>, vector<8x8xi32>,
    return
  }
  func.func @transform_0(%arg0: i32) -> (i32, i32, i32) {
    %c0_i32 = arith.constant 0 : i32
    %c0_i32_0 = arith.constant 0 : i32
    %c0_i32_1 = arith.constant 0 : i32
    return %c0_i32, %arg0, %c0_i32_0 : i32, i32, i32
  }
  func.func @transform_1(%arg0: i32) -> (i32, i32) {
    %c0_i32 = arith.constant 0 : i32
    %c0_i32_0 = arith.constant 0 : i32
    %c0_i32_1 = arith.constant 0 : i32
    return %c0_i32, %c0_i32_0 : i32, i32
  }
  func.func @transform_2(%arg0: i32) -> (i32, i32) {
    %c0_i32 = arith.constant 0 : i32
    %c0_i32_0 = arith.constant 0 : i32
    %c0_i32_1 = arith.constant 0 : i32
    return %c0_i32, %c0_i32_0 : i32, i32
  }
  func.func @transform_3(%arg0: i32) -> (i32, i32) {
    %c0_i32 = arith.constant 0 : i32
    %c0_i32_0 = arith.constant 0 : i32
    %c0_i32_1 = arith.constant 0 : i32
    return %c0_i32, %c0_i32_0 : i32, i32
  }
  func.func @transform_4(%arg0: i32) -> (i32, i32) {
    %c0_i32 = arith.constant 0 : i32
    %c0_i32_0 = arith.constant 0 : i32
    %c0_i32_1 = arith.constant 0 : i32
    return %c0_i32, %c0_i32_0 : i32, i32
  }
  func.func @transform_5(%arg0: i32) -> (i32, i32) {
    %c0_i32 = arith.constant 0 : i32
    %c0_i32_0 = arith.constant 0 : i32
    %c0_i32_1 = arith.constant 0 : i32
    return %c0_i32, %c0_i32_0 : i32, i32
  }
  func.func @transform_6(%arg0: i32) -> (i32, i32) {
    %c0_i32 = arith.constant 0 : i32
    %c0_i32_0 = arith.constant 0 : i32
    %c0_i32_1 = arith.constant 0 : i32
    return %c0_i32, %c0_i32_0 : i32, i32
  }
  func.func @transform_7(%arg0: i32) -> (i32, i32) {
    %c0_i32 = arith.constant 0 : i32
    %c0_i32_0 = arith.constant 0 : i32
    %c0_i32_1 = arith.constant 0 : i32
    return %c0_i32, %c0_i32_0 : i32, i32
  }
  func.func @transform_8(%arg0: i32) -> (i32, i32) {
    %c0_i32 = arith.constant 0 : i32
    %c0_i32_0 = arith.constant 0 : i32
    %c0_i32_1 = arith.constant 0 : i32
    return %c0_i32, %c0_i32_0 : i32, i32
  }
  func.func @transform_9(%arg0: i32) -> (i32, i32, i32) {
    %c0_i32 = arith.constant 0 : i32
    %c0_i32_0 = arith.constant 0 : i32
    %c0_i32_1 = arith.constant 0 : i32
    return %c0_i32, %arg0, %c0_i32_0 : i32, i32, i32
  }
  func.func @transform_10(%arg0: i32) -> (i32, i32) {
    %c0_i32 = arith.constant 0 : i32
    %c0_i32_0 = arith.constant 0 : i32
    return %arg0, %c0_i32 : i32, i32
  }
  func.func @transform_11(%arg0: i32) -> (i32, i32) {
    %c0_i32 = arith.constant 0 : i32
    %c0_i32_0 = arith.constant 0 : i32
    return %arg0, %c0_i32 : i32, i32
  }
}

</mosaic_0001>

<llo_original>
// kernel: tpu_custom_call.1
$region0: #{tpu_custom_call.1}
  #allocation0 [shape = 'u32[]', space=smem, size = 0x4, offset = 0x4, fixed_abs, tag = 'smem constant byte address 0x4 - core index']
  #allocation1 [shape = 'u32[144,128]{1,0:T(1,128)}', space=vmem, size = 0x12000, scoped, tag = 'internal scratch']
  %s0 = inlined_call_operand.hbm [shape: f32[8,16,32], index: 0, kind: input, shape index: {}]
  %s1 = inlined_call_operand.vmem [shape: f32[32,32], index: 1, kind: input, shape index: {}]
  %s2 = inlined_call_operand.hbm [shape: f32[32,32], index: 2, kind: input, shape index: {}]
  %s3 = inlined_call_operand.vmem [shape: f32[1,32], index: 3, kind: input, shape index: {}]
  %s4 = inlined_call_operand.vmem [shape: f32[1,32], index: 4, kind: input, shape index: {}]
  %s5 = inlined_call_operand.vmem [shape: f32[32,5], index: 5, kind: input, shape index: {}]
  %s6 = inlined_call_operand.vmem [shape: f32[1,5], index: 6, kind: input, shape index: {}]
  %s7 = inlined_call_operand.vmem [shape: f32[5,5], index: 7, kind: input, shape index: {}]
  %s8 = inlined_call_operand.vmem [shape: f32[1,5], index: 8, kind: input, shape index: {}]
  %s9 = inlined_call_operand.vmem [shape: f32[8,16,5], index: 9, kind: output, shape index: {0}]
  %s10 = inlined_call_operand.vmem [shape: f32[16,1], index: 10, kind: output, shape index: {1}]
  %s11 = inlined_call_operand.vmem [shape: s32[16,8], index: 11, kind: output, shape index: {2}]
  %12 = xla_tuple %s9, %s10, %s11
  %s13 = sld [smem:[#allocation0]]
  $region127: #{tpu_custom_call.1} parent=0
    _
  %s15 = ssub.s32 1, %s13
  %s16 = scalar_select 0, %s15, %s13
  $region1: #{tpu_custom_call.1} parent=0
    #allocation2 [shape = 'u8[65536]{0}', space=vmem, size = 0x10000, scoped, tag = 'input window, operand 0']
    #allocation3 [shape = 's32[2]{0}', space=sflag, size = 0x8, scoped, tag = 'scoped memory for tpu_custom_call.1']
    #allocation4 [shape = 'u8[16384]{0}', space=vmem, size = 0x4000, scoped, tag = 'input window, operand 2, single buffered']
    #allocation5 [shape = 's32[1]{0}', space=sflag, size = 0x4, scoped, tag = 'scoped memory for tpu_custom_call.1']
    #allocation6 [shape = 'u8[65536]{0}', space=vmem, size = 0x10000, scoped, tag = 'output window, operand 0']
    %17 = vsyncpa [#allocation3], 0
    %s18 = scalar_lea.sflag [#allocation3], 1
    %19 = vsyncpa %s18, 0
    %20 = vsyncpa [#allocation5], 0
    loop: start=0, step=1, limit=4
    $region2: #{tpu_custom_call.1} parent=1 // loop_pre_header
      _
    $region3: #{tpu_custom_call.1} parent=1 // loop_header
      %s22 = sphi 0, %s26
      %p23 = scmp.ge.s32.totalorder %s22, 4
      %s32 = sphi 0, %s34
      %s35 = sphi 0, %s32
      %s36 = sphi 0, %s35
      %s52 = sphi 0, %s36
      %s56 = sphi 0, %s56
      %s58 = sphi 0, %s56
      %s59 = sphi 0, %s58
      %s73 = sphi 0, %s59
      %s77 = sphi 0, %s77
      %s79 = sphi 0, %s77
      %s80 = sphi 0, %s79
      %s94 = sphi 0, %s80
      %s98 = sphi 0, %s98
      %s100 = sphi 0, %s98
      %s101 = sphi 0, %s100
      %s115 = sphi 0, %s101
      %s119 = sphi 0, %s119
      %s121 = sphi 0, %s119
      %s122 = sphi 0, %s121
      %s136 = sphi 0, %s122
      %s140 = sphi 0, %s140
      %s142 = sphi 0, %s140
      %s143 = sphi 0, %s142
      %s157 = sphi 0, %s143
      %s161 = sphi 0, %s161
      %s163 = sphi 0, %s161
      %s164 = sphi 0, %s163
      %s178 = sphi 0, %s164
      %s182 = sphi 0, %s182
      %s184 = sphi 0, %s182
      %s185 = sphi 0, %s184
      %s199 = sphi 0, %s185
      %s203 = sphi 0, %s203
      %s205 = sphi 0, %s203
      %s206 = sphi 0, %s205
      %s220 = sphi 0, %s206
      %s226 = sphi 0, %s228
      %s229 = sphi 0, %s226
      %s230 = sphi 0, %s229
      %s246 = sphi 0, %s230
      %s252 = sphi 0, %s254
      %s255 = sphi 0, %s252
      %s256 = sphi 0, %s255
      %s272 = sphi 0, %s256
      %s278 = sphi 0, %s280
      %s281 = sphi 0, %s278
      %s282 = sphi 0, %s281
      %s298 = sphi 0, %s282
    $region4: #{tpu_custom_call.1} parent=1 // loop_header_branch
      %25 = sbr.rel (%p23) target = $region8
    $region5: #{tpu_custom_call.1} parent=1 // loop_body
      %s27 = ssub.s32 %s22, 1
      %s28 = ssub.s32 %s22, 2
      %s29 = sadd.s32 %s22, 1
      %s30 = ssub.s32 %s22, %s29
      %p31 = scmp.eq.s32.totalorder %s30, 0
      %s33 = sadd.s32 %s32, 1
      %s34 = scalar_select %p31, %s32, %s33
      %p37 = pneg %p31
      %p38 = scmp.eq.s32.totalorder %s22, 1
      %p39 = por %p37, %p38
      %p40 = scmp.ne.s32.totalorder %s32, %s35
      %p41 = scmp.eq.s32.totalorder %s22, 0
      %p42 = por %p40, %p41
      %p43 = scmp.ne.s32.totalorder %s32, %s35
      %p44 = scmp.eq.s32.totalorder %s27, 1
      %p45 = por %p43, %p44
      %p46 = scmp.ne.s32.totalorder %s35, %s36
      %p47 = scmp.eq.s32.totalorder %s27, 0
      %p48 = por %p46, %p47
      %p49 = scmp.ne.s32.totalorder %s35, %s36
      %p50 = scmp.eq.s32.totalorder %s28, 1
      %p51 = por %p49, %p50
      %p53 = scmp.ne.s32.totalorder %s36, %s52
      %p54 = scmp.eq.s32.totalorder %s28, 0
      %p55 = por %p53, %p54
      %s57 = sadd.s32 %s56, 1
      %p60 = scmp.eq.s32.totalorder %s22, 1
      %p61 = scmp.ne.s32.totalorder %s56, %s58
      %p62 = scmp.eq.s32.totalorder %s22, 0
      %p63 = por %p61, %p62
      %p64 = scmp.ne.s32.totalorder %s56, %s58
      %p65 = scmp.eq.s32.totalorder %s27, 1
      %p66 = por %p64, %p65
      %p67 = scmp.ne.s32.totalorder %s58, %s59
      %p68 = scmp.eq.s32.totalorder %s27, 0
      %p69 = por %p67, %p68
      %p70 = scmp.ne.s32.totalorder %s58, %s59
      %p71 = scmp.eq.s32.totalorder %s28, 1
      %p72 = por %p70, %p71
      %p74 = scmp.ne.s32.totalorder %s59, %s73
      %p75 = scmp.eq.s32.totalorder %s28, 0
      %p76 = por %p74, %p75
      %s78 = sadd.s32 %s77, 1
      %p81 = scmp.eq.s32.totalorder %s22, 1
      %p82 = scmp.ne.s32.totalorder %s77, %s79
      %p83 = scmp.eq.s32.totalorder %s22, 0
      %p84 = por %p82, %p83
      %p85 = scmp.ne.s32.totalorder %s77, %s79
      %p86 = scmp.eq.s32.totalorder %s27, 1
      %p87 = por %p85, %p86
      %p88 = scmp.ne.s32.totalorder %s79, %s80
      %p89 = scmp.eq.s32.totalorder %s27, 0
      %p90 = por %p88, %p89
      %p91 = scmp.ne.s32.totalorder %s79, %s80
      %p92 = scmp.eq.s32.totalorder %s28, 1
      %p93 = por %p91, %p92
      %p95 = scmp.ne.s32.totalorder %s80, %s94
      %p96 = scmp.eq.s32.totalorder %s28, 0
      %p97 = por %p95, %p96
      %s99 = sadd.s32 %s98, 1
      %p102 = scmp.eq.s32.totalorder %s22, 1
      %p103 = scmp.ne.s32.totalorder %s98, %s100
      %p104 = scmp.eq.s32.totalorder %s22, 0
      %p105 = por %p103, %p104
      %p106 = scmp.ne.s32.totalorder %s98, %s100
      %p107 = scmp.eq.s32.totalorder %s27, 1
      %p108 = por %p106, %p107
      %p109 = scmp.ne.s32.totalorder %s100, %s101
      %p110 = scmp.eq.s32.totalorder %s27, 0
      %p111 = por %p109, %p110
      %p112 = scmp.ne.s32.totalorder %s100, %s101
      %p113 = scmp.eq.s32.totalorder %s28, 1
      %p114 = por %p112, %p113
      %p116 = scmp.ne.s32.totalorder %s101, %s115
      %p117 = scmp.eq.s32.totalorder %s28, 0
      %p118 = por %p116, %p117
      %s120 = sadd.s32 %s119, 1
      %p123 = scmp.eq.s32.totalorder %s22, 1
      %p124 = scmp.ne.s32.totalorder %s119, %s121
      %p125 = scmp.eq.s32.totalorder %s22, 0
      %p126 = por %p124, %p125
      %p127 = scmp.ne.s32.totalorder %s119, %s121
      %p128 = scmp.eq.s32.totalorder %s27, 1
      %p129 = por %p127, %p128
      %p130 = scmp.ne.s32.totalorder %s121, %s122
      %p131 = scmp.eq.s32.totalorder %s27, 0
      %p132 = por %p130, %p131
      %p133 = scmp.ne.s32.totalorder %s121, %s122
      %p134 = scmp.eq.s32.totalorder %s28, 1
      %p135 = por %p133, %p134
      %p137 = scmp.ne.s32.totalorder %s122, %s136
      %p138 = scmp.eq.s32.totalorder %s28, 0
      %p139 = por %p137, %p138
      %s141 = sadd.s32 %s140, 1
      %p144 = scmp.eq.s32.totalorder %s22, 1
      %p145 = scmp.ne.s32.totalorder %s140, %s142
      %p146 = scmp.eq.s32.totalorder %s22, 0
      %p147 = por %p145, %p146
      %p148 = scmp.ne.s32.totalorder %s140, %s142
      %p149 = scmp.eq.s32.totalorder %s27, 1
      %p150 = por %p148, %p149
      %p151 = scmp.ne.s32.totalorder %s142, %s143
      %p152 = scmp.eq.s32.totalorder %s27, 0
      %p153 = por %p151, %p152
      %p154 = scmp.ne.s32.totalorder %s142, %s143
      %p155 = scmp.eq.s32.totalorder %s28, 1
      %p156 = por %p154, %p155
      %p158 = scmp.ne.s32.totalorder %s143, %s157
      %p159 = scmp.eq.s32.totalorder %s28, 0
      %p160 = por %p158, %p159
      %s162 = sadd.s32 %s161, 1
      %p165 = scmp.eq.s32.totalorder %s22, 1
      %p166 = scmp.ne.s32.totalorder %s161, %s163
      %p167 = scmp.eq.s32.totalorder %s22, 0
      %p168 = por %p166, %p167
      %p169 = scmp.ne.s32.totalorder %s161, %s163
      %p170 = scmp.eq.s32.totalorder %s27, 1
      %p171 = por %p169, %p170
      %p172 = scmp.ne.s32.totalorder %s163, %s164
      %p173 = scmp.eq.s32.totalorder %s27, 0
      %p174 = por %p172, %p173
      %p175 = scmp.ne.s32.totalorder %s163, %s164
      %p176 = scmp.eq.s32.totalorder %s28, 1
      %p177 = por %p175, %p176
      %p179 = scmp.ne.s32.totalorder %s164, %s178
      %p180 = scmp.eq.s32.totalorder %s28, 0
      %p181 = por %p179, %p180
      %s183 = sadd.s32 %s182, 1
      %p186 = scmp.eq.s32.totalorder %s22, 1
      %p187 = scmp.ne.s32.totalorder %s182, %s184
      %p188 = scmp.eq.s32.totalorder %s22, 0
      %p189 = por %p187, %p188
      %p190 = scmp.ne.s32.totalorder %s182, %s184
      %p191 = scmp.eq.s32.totalorder %s27, 1
      %p192 = por %p190, %p191
      %p193 = scmp.ne.s32.totalorder %s184, %s185
      %p194 = scmp.eq.s32.totalorder %s27, 0
      %p195 = por %p193, %p194
      %p196 = scmp.ne.s32.totalorder %s184, %s185
      %p197 = scmp.eq.s32.totalorder %s28, 1
      %p198 = por %p196, %p197
      %p200 = scmp.ne.s32.totalorder %s185, %s199
      %p201 = scmp.eq.s32.totalorder %s28, 0
      %p202 = por %p200, %p201
      %s204 = sadd.s32 %s203, 1
      %p207 = scmp.eq.s32.totalorder %s22, 1
      %p208 = scmp.ne.s32.totalorder %s203, %s205
      %p209 = scmp.eq.s32.totalorder %s22, 0
      %p210 = por %p208, %p209
      %p211 = scmp.ne.s32.totalorder %s203, %s205
      %p212 = scmp.eq.s32.totalorder %s27, 1
      %p213 = por %p211, %p212
      %p214 = scmp.ne.s32.totalorder %s205, %s206
      %p215 = scmp.eq.s32.totalorder %s27, 0
      %p216 = por %p214, %p215
      %p217 = scmp.ne.s32.totalorder %s205, %s206
      %p218 = scmp.eq.s32.totalorder %s28, 1
      %p219 = por %p217, %p218
      %p221 = scmp.ne.s32.totalorder %s206, %s220
      %p222 = scmp.eq.s32.totalorder %s28, 0
      %p223 = por %p221, %p222
      %s224 = ssub.s32 %s22, %s29
      %p225 = scmp.eq.s32.totalorder %s224, 0
      %s227 = sadd.s32 %s226, 1
      %s228 = scalar_select %p225, %s226, %s227
      %p231 = pneg %p225
      %p232 = scmp.eq.s32.totalorder %s22, 1
      %p233 = por %p231, %p232
      %p234 = scmp.ne.s32.totalorder %s226, %s229
      %p235 = scmp.eq.s32.totalorder %s22, 0
      %p236 = por %p234, %p235
      %p237 = scmp.ne.s32.totalorder %s226, %s229
      %p238 = scmp.eq.s32.totalorder %s27, 1
      %p239 = por %p237, %p238
      %p240 = scmp.ne.s32.totalorder %s229, %s230
      %p241 = scmp.eq.s32.totalorder %s27, 0
      %p242 = por %p240, %p241
      %p243 = scmp.ne.s32.totalorder %s229, %s230
      %p244 = scmp.eq.s32.totalorder %s28, 1
      %p245 = por %p243, %p244
      %p247 = scmp.ne.s32.totalorder %s230, %s246
      %p248 = scmp.eq.s32.totalorder %s28, 0
      %p249 = por %p247, %p248
      %s250 = ssub.s32 %s22, %s29
      %p251 = scmp.eq.s32.totalorder %s250, 0
      %s253 = sadd.s32 %s252, 1
      %s254 = scalar_select %p251, %s252, %s253
      %p257 = pneg %p251
      %p258 = scmp.eq.s32.totalorder %s22, 1
      %p259 = por %p257, %p258
      %p260 = scmp.ne.s32.totalorder %s252, %s255
      %p261 = scmp.eq.s32.totalorder %s22, 0
      %p262 = por %p260, %p261
      %p263 = scmp.ne.s32.totalorder %s252, %s255
      %p264 = scmp.eq.s32.totalorder %s27, 1
      %p265 = por %p263, %p264
      %p266 = scmp.ne.s32.totalorder %s255, %s256
      %p267 = scmp.eq.s32.totalorder %s27, 0
      %p268 = por %p266, %p267
      %p269 = scmp.ne.s32.totalorder %s255, %s256
      %p270 = scmp.eq.s32.totalorder %s28, 1
      %p271 = por %p269, %p270
      %p273 = scmp.ne.s32.totalorder %s256, %s272
      %p274 = scmp.eq.s32.totalorder %s28, 0
      %p275 = por %p273, %p274
      %s276 = ssub.s32 %s22, %s29
      %p277 = scmp.eq.s32.totalorder %s276, 0
      %s279 = sadd.s32 %s278, 1
      %s280 = scalar_select %p277, %s278, %s279
      %p283 = pneg %p277
      %p284 = scmp.eq.s32.totalorder %s22, 1
      %p285 = por %p283, %p284
      %p286 = scmp.ne.s32.totalorder %s278, %s281
      %p287 = scmp.eq.s32.totalorder %s22, 0
      %p288 = por %p286, %p287
      %p289 = scmp.ne.s32.totalorder %s278, %s281
      %p290 = scmp.eq.s32.totalorder %s27, 1
      %p291 = por %p289, %p290
      %p292 = scmp.ne.s32.totalorder %s281, %s282
      %p293 = scmp.eq.s32.totalorder %s27, 0
      %p294 = por %p292, %p293
      %p295 = scmp.ne.s32.totalorder %s281, %s282
      %p296 = scmp.eq.s32.totalorder %s28, 1
      %p297 = por %p295, %p296
      %p299 = scmp.ne.s32.totalorder %s282, %s298
      %p300 = scmp.eq.s32.totalorder %s28, 0
      %p301 = por %p299, %p300
      %p302 = scmp.le.s32.totalorder 1, %s22
      %p303 = scmp.lt.s32.totalorder %s22, 3
      %p304 = pnand %p302, %p303
      %p305 = pneg %p304
      // Predicated region
      $region9: #{tpu_custom_call.1} parent=5 // pred_check
        _
      $region10: #{tpu_custom_call.1} parent=5 // pred_check_branch
        %307 = sbr.rel (%p304) target = $region12
      $region11: #{tpu_custom_call.1} parent=5 // pred_region
        %s308 = ssub.s32 %s22, 1
        // Predicated region
        $region13: #{tpu_custom_call.1} parent=11 // pred_check
          %p309 = pneg %p69
        $region14: #{tpu_custom_call.1} parent=11 // pred_check_branch
          %311 = sbr.rel (%p309) target = $region16
        $region15: #{tpu_custom_call.1} parent=11 // pred_region
          _
        $region16: #{tpu_custom_call.1} parent=11 // pred_fallthru
          _
        // Predicated region
        $region17: #{tpu_custom_call.1} parent=11 // pred_check
          %p312 = pneg %p90
        $region18: #{tpu_custom_call.1} parent=11 // pred_check_branch
          %314 = sbr.rel (%p312) target = $region20
        $region19: #{tpu_custom_call.1} parent=11 // pred_region
          %s316 = ssub.s32 512, 512
          %317 = vsyncadd [#allocation5], %s316
          %s318 = sshll.u32 [#allocation4], 4
          %s319 = int_to_ptr.vmem [resolvable:$true] %s318
          %324 = dma.hbm_to_vmem [thread:$0]  %s2, 512, %s319, [#allocation5], 128, 128, 8
        $region20: #{tpu_custom_call.1} parent=11 // pred_fallthru
          _
        // Predicated region
        $region21: #{tpu_custom_call.1} parent=11 // pred_check
          %p325 = pneg %p111
        $region22: #{tpu_custom_call.1} parent=11 // pred_check_branch
          %327 = sbr.rel (%p325) target = $region24
        $region23: #{tpu_custom_call.1} parent=11 // pred_region
          _
        $region24: #{tpu_custom_call.1} parent=11 // pred_fallthru
          _
        // Predicated region
        $region25: #{tpu_custom_call.1} parent=11 // pred_check
          %p328 = pneg %p132
        $region26: #{tpu_custom_call.1} parent=11 // pred_check_branch
          %330 = sbr.rel (%p328) target = $region28
        $region27: #{tpu_custom_call.1} parent=11 // pred_region
          _
        $region28: #{tpu_custom_call.1} parent=11 // pred_fallthru
          _
        // Predicated region
        $region29: #{tpu_custom_call.1} parent=11 // pred_check
          %p331 = pneg %p153
        $region30: #{tpu_custom_call.1} parent=11 // pred_check_branch
          %333 = sbr.rel (%p331) target = $region32
        $region31: #{tpu_custom_call.1} parent=11 // pred_region
          _
        $region32: #{tpu_custom_call.1} parent=11 // pred_fallthru
          _
        // Predicated region
        $region33: #{tpu_custom_call.1} parent=11 // pred_check
          %p334 = pneg %p174
        $region34: #{tpu_custom_call.1} parent=11 // pred_check_branch
          %336 = sbr.rel (%p334) target = $region36
        $region35: #{tpu_custom_call.1} parent=11 // pred_region
          _
        $region36: #{tpu_custom_call.1} parent=11 // pred_fallthru
          _
        // Predicated region
        $region37: #{tpu_custom_call.1} parent=11 // pred_check
          %p337 = pneg %p195
        $region38: #{tpu_custom_call.1} parent=11 // pred_check_branch
          %339 = sbr.rel (%p337) target = $region40
        $region39: #{tpu_custom_call.1} parent=11 // pred_region
          _
        $region40: #{tpu_custom_call.1} parent=11 // pred_fallthru
          _
        // Predicated region
        $region41: #{tpu_custom_call.1} parent=11 // pred_check
          %p340 = pneg %p216
        $region42: #{tpu_custom_call.1} parent=11 // pred_check_branch
          %342 = sbr.rel (%p340) target = $region44
        $region43: #{tpu_custom_call.1} parent=11 // pred_region
          _
        $region44: #{tpu_custom_call.1} parent=11 // pred_fallthru
          _
      $region12: #{tpu_custom_call.1} parent=5 // pred_fallthru
        _
      %p343 = scmp.lt.s32.totalorder %s22, 2
      // Predicated region
      $region45: #{tpu_custom_call.1} parent=5 // pred_check
        %p344 = pneg %p343
      $region46: #{tpu_custom_call.1} parent=5 // pred_check_branch
        %346 = sbr.rel (%p344) target = $region48
      $region47: #{tpu_custom_call.1} parent=5 // pred_region
        // Predicated region
        $region49: #{tpu_custom_call.1} parent=47 // pred_check
          %p347 = pneg %p42
        $region50: #{tpu_custom_call.1} parent=47 // pred_check_branch
          %349 = sbr.rel (%p347) target = $region52
        $region51: #{tpu_custom_call.1} parent=47 // pred_region
          %s350 = sand.u32 %s32, 1
          %s351 = scalar_lea.sflag [#allocation3], %s350
          %s352 = sand.u32 %s32, 1
          %s353 = smul.addr %s352, 64
          %s354 = scalar_lea.vmem [#allocation2], %s353
          %s356 = ssub.s32 1024, 1024
          %357 = vsyncadd %s351, %s356
          %s358 = smul.addr %s22, 128
          %s359 = scalar_lea.hbm %s0, %s358
          %s360 = sshll.u32 %s354, 4
          %s361 = int_to_ptr.vmem [resolvable:$true] %s360
          %366 = dma.hbm_to_vmem [thread:$0]  %s359, 1024, %s361, %s351, 256, 128, 8
        $region52: #{tpu_custom_call.1} parent=47 // pred_fallthru
          _
      $region48: #{tpu_custom_call.1} parent=5 // pred_fallthru
        _
      %p367 = scmp.le.s32.totalorder 1, %s22
      %p368 = scmp.lt.s32.totalorder %s22, 3
      %p369 = pnand %p367, %p368
      %p370 = pneg %p369
      // Predicated region
      $region53: #{tpu_custom_call.1} parent=5 // pred_check
        _
      $region54: #{tpu_custom_call.1} parent=5 // pred_check_branch
        %372 = sbr.rel (%p369) target = $region56
      $region55: #{tpu_custom_call.1} parent=5 // pred_region
        %s373 = ssub.s32 %s22, 1
        %s374 = sand.u32 %s35, 1
        %s375 = scalar_lea.sflag [#allocation3], %s374
        %s376 = sand.u32 %s35, 1
        %s377 = smul.addr %s376, 64
        %s378 = scalar_lea.vmem [#allocation2], %s377
        // Predicated region
        $region57: #{tpu_custom_call.1} parent=55 // pred_check
          %p379 = pneg %p48
        $region58: #{tpu_custom_call.1} parent=55 // pred_check_branch
          %381 = sbr.rel (%p379) target = $region60
        $region59: #{tpu_custom_call.1} parent=55 // pred_region
          %382 = dma.done %s375, 1024
        $region60: #{tpu_custom_call.1} parent=55 // pred_fallthru
          _
        // Predicated region
        $region61: #{tpu_custom_call.1} parent=55 // pred_check
          %p383 = pneg %p90
        $region62: #{tpu_custom_call.1} parent=55 // pred_check_branch
          %385 = sbr.rel (%p383) target = $region64
        $region63: #{tpu_custom_call.1} parent=55 // pred_region
          %386 = dma.done [#allocation5], 512
        $region64: #{tpu_custom_call.1} parent=55 // pred_fallthru
          _
        %s387 = sand.u32 %s35, 1
        %s388 = scalar_lea.sflag [#allocation3], %s387
        %s389 = sand.u32 %s35, 1
        %s390 = smul.addr %s389, 64
        %s391 = scalar_lea.vmem [#allocation2], %s390
        %p392 = pneg %p48
        %p393 = pneg %p45
        %p394 = pneg %p69
        %p395 = pneg %p66
        %p396 = pneg %p90
        %p397 = pneg %p87
        %p398 = pneg %p111
        %p399 = pneg %p108
        %p400 = pneg %p132
        %p401 = pneg %p129
        %p402 = pneg %p153
        %p403 = pneg %p150
        %p404 = pneg %p174
        %p405 = pneg %p171
        %p406 = pneg %p195
        %p407 = pneg %p192
        %p408 = pneg %p216
        %p409 = pneg %p213
        %p410 = pneg %p242
        %p411 = pneg %p239
        %s412 = sand.u32 %s229, 1
        %s413 = sand.u32 %s229, 1
        %s414 = smul.addr %s413, 64
        %s415 = scalar_lea.vmem [#allocation6], %s414
        %p416 = pneg %p268
        %p417 = pneg %p265
        %p418 = scmp.lt.s32.totalorder %s27, 1
        %s419 = scalar_select %p418, %s27, 1
        %s420 = smul.addr %s419, 8
        %s421 = scalar_lea.vmem %s10, %s420
        %p422 = pneg %p294
        %p423 = pneg %p291
        %p424 = scmp.lt.s32.totalorder %s27, 1
        %s425 = scalar_select %p424, %s27, 1
        %s426 = smul.addr %s425, 8
        %s427 = scalar_lea.vmem %s11, %s426
        %p428 = scmp.lt.s32.totalorder %s27, 1
        %s429 = scalar_select %p428, %s27, 1
        %s430 = smul.addr %s429, 8
        %s431 = scalar_lea.vmem %s10, %s430
        %p432 = scmp.lt.s32.totalorder %s27, 1
        %s433 = scalar_select %p432, %s27, 1
        %s434 = smul.addr %s433, 8
        %s435 = scalar_lea.vmem %s11, %s434
        %v436 = vld [vmem:[%s1] sm:$0xff]
        %v437 = vld [vmem:[%s1 + $0x8] sm:$0xff]
        %v438 = vld [vmem:[%s1 + $0x10] sm:$0xff]
        %v439 = vld [vmem:[%s1 + $0x18] sm:$0xff]
        %v440 = vld [vmem:[#allocation4] sm:$0xff]
        %v441 = vld [vmem:[#allocation4 + $0x8] sm:$0xff]
        %v442 = vld [vmem:[#allocation4 + $0x10] sm:$0xff]
        %v443 = vld [vmem:[#allocation4 + $0x18] sm:$0xff]
        %v444 = vld [vmem:[%s3] sm:$0x1]
        %v445 = vld [vmem:[%s5] sm:$0xff]
        %v446 = vld [vmem:[%s5 + $0x8] sm:$0xff]
        %v447 = vld [vmem:[%s5 + $0x10] sm:$0xff]
        %v448 = vld [vmem:[%s5 + $0x18] sm:$0xff]
        %v449 = vld [vmem:[%s6] sm:$0x1]
        %v450 = vld [vmem:[%s7] sm:$0x1f]
        %v451 = vld [vmem:[%s8] sm:$0x1]
        %v452 = vlaneseq
        %v453 = vand.u32 %v452, 127
        %vm454 = vcmp.lt.s32.totalorder %v453, 16
        %v455 = vsel %vm454, 1, 0
        %vm456 = vcmp.eq.s32.totalorder %v455, 1
        %vm457 = vcmp.eq.s32.totalorder %v453, 0
        %vm458 = vcmp.eq.s32.totalorder %v453, 1
        %vm459 = vcmp.eq.s32.totalorder %v453, 2
        %vm460 = vcmp.eq.s32.totalorder %v453, 3
        %vm461 = vcmp.eq.s32.totalorder %v453, 4
        %vm462 = vcmp.eq.s32.totalorder %v453, 5
        %vm463 = vcmp.eq.s32.totalorder %v453, 6
        %vm464 = vcmp.eq.s32.totalorder %v453, 7
        %v465 = vlaneseq
        %v466 = vshrl.u32 %v465, 7
        %v467 = vsub.s32 0, %v466
        %v468 = vrot.slane %v450, %v467
        %v469 = vlaneseq
        %v470 = vshrl.u32 %v469, 7
        %v471 = vsub.s32 1, %v470
        %v472 = vrot.slane %v450, %v471
        %v473 = vlaneseq
        %v474 = vshrl.u32 %v473, 7
        %v475 = vsub.s32 2, %v474
        %v476 = vrot.slane %v450, %v475
        %v477 = vlaneseq
        %v478 = vshrl.u32 %v477, 7
        %v479 = vsub.s32 3, %v478
        %v480 = vrot.slane %v450, %v479
        %v481 = vlaneseq
        %v482 = vshrl.u32 %v481, 7
        %v483 = vsub.s32 4, %v482
        %v484 = vrot.slane %v450, %v483
        %v485 = vld [vmem:[%s378] sm:$0xff]
        %s486 = scalar_lea.vmem %s378, 8 [#allocation2]
        %v487 = vld [vmem:[%s486] sm:$0xff]
        %s488 = scalar_lea.vmem %s378, 16 [#allocation2]
        %v489 = vld [vmem:[%s488] sm:$0xff]
        %s490 = scalar_lea.vmem %s378, 24 [#allocation2]
        %v491 = vld [vmem:[%s490] sm:$0xff]
        %s492 = scalar_lea.vmem %s378, 32 [#allocation2]
        %v493 = vld [vmem:[%s492] sm:$0xff]
        %s494 = scalar_lea.vmem %s378, 40 [#allocation2]
        %v495 = vld [vmem:[%s494] sm:$0xff]
        %s496 = scalar_lea.vmem %s378, 48 [#allocation2]
        %v497 = vld [vmem:[%s496] sm:$0xff]
        %s498 = scalar_lea.vmem %s378, 56 [#allocation2]
        %v499 = vld [vmem:[%s498] sm:$0xff]
        %v501 = vlaneseq
        %v502 = vshrl.u32 %v501, 7
        %v503 = vsub.s32 0, %v502
        %v504 = vrot.slane %v444, %v503
        %vm506 = vcmask 261120
        %v508 = vsel %vm506, %v485, 0
        %v511 = vsel %vm506, %v487, 0
        %v514 = vsel %vm506, %v489, 0
        %v517 = vsel %vm506, %v491, 0
        %v520 = vsel %vm506, %v493, 0
        %v523 = vsel %vm506, %v495, 0
        %v526 = vsel %vm506, %v497, 0
        %v529 = vsel %vm506, %v499, 0
        %531 = vmatprep.subr.mxu0 0.0
        %532 = vmatpush1.msra.mxu0 %v436
        %533 = vmatprep.subr.mxu0 0.0
        %534 = vmatpush1.msra.mxu0 %v437
        %535 = vmatprep.subr.mxu0 0.0
        %536 = vmatpush1.msra.mxu0 %v438
        %537 = vmatprep.subr.mxu0 0.0
        %538 = vmatpush1.msra.mxu0 %v439
        %539 = vmatprep.subr.mxu0 0.0
        %540 = vmatpush1.msra.mxu0 0.0
        %541 = vmatprep.subr.mxu0 0.0
        %542 = vmatpush1.msra.mxu0 0.0
        %543 = vmatprep.subr.mxu0 0.0
        %544 = vmatpush1.msra.mxu0 0.0
        %545 = vmatprep.subr.mxu0 0.0
        %546 = vmatpush1.msra.mxu0 0.0
        %547 = vmatprep.subr.mxu0 0.0
        %548 = vmatpush1.msra.mxu0 0.0
        %549 = vmatprep.subr.mxu0 0.0
        %550 = vmatpush1.msra.mxu0 0.0
        %551 = vmatprep.subr.mxu0 0.0
        %552 = vmatpush1.msra.mxu0 0.0
        %553 = vmatprep.subr.mxu0 0.0
        %554 = vmatpush1.msra.mxu0 0.0
        %555 = vmatprep.subr.mxu0 0.0
        %556 = vmatpush1.msra.mxu0 0.0
        %557 = vmatprep.subr.mxu0 0.0
        %558 = vmatpush1.msra.mxu0 0.0
        %559 = vmatprep.subr.mxu0 0.0
        %560 = vmatpush1.msra.mxu0 0.0
        %561 = vmatprep.subr.mxu0 0.0
        %562 = vmatpush1.msra.mxu0 0.0
        %563 = vmatprep.subr.mxu0 0.0
        %564 = vmatpush1.msra.mxu0 0.0
        %565 = vmatprep.subr.mxu0 0.0
        %566 = vmatpush1.msra.mxu0 0.0
        %567 = vmatprep.subr.mxu0 0.0
        %568 = vmatpush1.msra.mxu0 0.0
        %569 = vmatprep.subr.mxu0 0.0
        %570 = vmatpush1.msra.mxu0 0.0
        %571 = vmatprep.subr.mxu0 0.0
        %572 = vmatpush1.msra.mxu0 0.0
        %573 = vmatprep.subr.mxu0 0.0
        %574 = vmatpush1.msra.mxu0 0.0
        %575 = vmatprep.subr.mxu0 0.0
        %576 = vmatpush1.msra.mxu0 0.0
        %577 = vmatprep.subr.mxu0 0.0
        %578 = vmatpush1.msra.mxu0 0.0
        %579 = vmatprep.subr.mxu0 0.0
        %580 = vmatpush1.msra.mxu0 0.0
        %581 = vmatprep.subr.mxu0 0.0
        %582 = vmatpush1.msra.mxu0 0.0
        %583 = vmatprep.subr.mxu0 0.0
        %584 = vmatpush1.msra.mxu0 0.0
        %585 = vmatprep.subr.mxu0 0.0
        %586 = vmatpush1.msra.mxu0 0.0
        %587 = vmatprep.subr.mxu0 0.0
        %588 = vmatpush1.msra.mxu0 0.0
        %589 = vmatprep.subr.mxu0 0.0
        %590 = vmatpush1.msra.mxu0 0.0
        %591 = vmatprep.subr.mxu0 0.0
        %592 = vmatpush1.msra.mxu0 0.0
        %593 = vmatprep.subr.mxu0 0.0
        %594 = vmatpush1.msra.mxu0 0.0
        %595 = vmatprep.mubr.f32.mxu0 0.0
        %596 = vmatmul.mubr.f32.gmra.mrb[0].mxu0 %v508
        %v597 = vpop.f32.mrb[0].mxu0
        %v598 = vadd.f32 %v504, %v597
        %v599 = vpop.f32.mrb[0].mxu0
        %600 = vmatprep.mubr.f32.mxu0 0.0
        %601 = vmatmul.mubr.f32.gmra.mrb[0].mxu0 %v511
        %v602 = vpop.f32.mrb[0].mxu0
        %v603 = vadd.f32 %v504, %v602
        %v604 = vpop.f32.mrb[0].mxu0
        %605 = vmatprep.mubr.f32.mxu0 0.0
        %606 = vmatmul.mubr.f32.gmra.mrb[0].mxu0 %v514
        %v607 = vpop.f32.mrb[0].mxu0
        %v608 = vadd.f32 %v504, %v607
        %v609 = vpop.f32.mrb[0].mxu0
        %610 = vmatprep.mubr.f32.mxu0 0.0
        %611 = vmatmul.mubr.f32.gmra.mrb[0].mxu0 %v517
        %v612 = vpop.f32.mrb[0].mxu0
        %v613 = vadd.f32 %v504, %v612
        %v614 = vpop.f32.mrb[0].mxu0
        %615 = vmatprep.mubr.f32.mxu0 0.0
        %616 = vmatmul.mubr.f32.gmra.mrb[0].mxu0 %v520
        %v617 = vpop.f32.mrb[0].mxu0
        %v618 = vadd.f32 %v504, %v617
        %v619 = vpop.f32.mrb[0].mxu0
        %620 = vmatprep.mubr.f32.mxu0 0.0
        %621 = vmatmul.mubr.f32.gmra.mrb[0].mxu0 %v523
        %v622 = vpop.f32.mrb[0].mxu0
        %v623 = vadd.f32 %v504, %v622
        %v624 = vpop.f32.mrb[0].mxu0
        %625 = vmatprep.mubr.f32.mxu0 0.0
        %626 = vmatmul.mubr.f32.gmra.mrb[0].mxu0 %v526
        %v627 = vpop.f32.mrb[0].mxu0
        %v628 = vadd.f32 %v504, %v627
        %v629 = vpop.f32.mrb[0].mxu0
        %630 = vmatprep.mubr.f32.mxu0 0.0
        %631 = vmatmul.mubr.f32.gmra.mrb[0].mxu0 %v529
        %v632 = vpop.f32.mrb[0].mxu0
        %v633 = vadd.f32 %v504, %v632
        %v634 = vpop.f32.mrb[0].mxu0
        %635 = vdwg.mxu0
        %v636 = vld [vmem:[%s4] sm:$0x1]
        %v638 = vlaneseq
        %v639 = vshrl.u32 %v638, 7
        %v640 = vsub.s32 0, %v639
        %v641 = vrot.slane %v636, %v640
        %v642 = vsel %vm456, %v598, %v633
        %v643 = vsel %vm506, %v641, 0
        %645 = vmatprep.subr.mxu0 0.0
        %646 = vmatpush1.msra.mxu0 %v440
        %647 = vmatprep.subr.mxu0 0.0
        %648 = vmatpush1.msra.mxu0 %v441
        %649 = vmatprep.subr.mxu0 0.0
        %650 = vmatpush1.msra.mxu0 %v442
        %651 = vmatprep.subr.mxu0 0.0
        %652 = vmatpush1.msra.mxu0 %v443
        %653 = vmatprep.subr.mxu0 0.0
        %654 = vmatpush1.msra.mxu0 0.0
        %655 = vmatprep.subr.mxu0 0.0
        %656 = vmatpush1.msra.mxu0 0.0
        %657 = vmatprep.subr.mxu0 0.0
        %658 = vmatpush1.msra.mxu0 0.0
        %659 = vmatprep.subr.mxu0 0.0
        %660 = vmatpush1.msra.mxu0 0.0
        %661 = vmatprep.subr.mxu0 0.0
        %662 = vmatpush1.msra.mxu0 0.0
        %663 = vmatprep.subr.mxu0 0.0
        %664 = vmatpush1.msra.mxu0 0.0
        %665 = vmatprep.subr.mxu0 0.0
        %666 = vmatpush1.msra.mxu0 0.0
        %667 = vmatprep.subr.mxu0 0.0
        %668 = vmatpush1.msra.mxu0 0.0
        %669 = vmatprep.subr.mxu0 0.0
        %670 = vmatpush1.msra.mxu0 0.0
        %671 = vmatprep.subr.mxu0 0.0
        %672 = vmatpush1.msra.mxu0 0.0
        %673 = vmatprep.subr.mxu0 0.0
        %674 = vmatpush1.msra.mxu0 0.0
        %675 = vmatprep.subr.mxu0 0.0
        %676 = vmatpush1.msra.mxu0 0.0
        %677 = vmatprep.subr.mxu0 0.0
        %678 = vmatpush1.msra.mxu0 0.0
        %679 = vmatprep.subr.mxu0 0.0
        %680 = vmatpush1.msra.mxu0 0.0
        %681 = vmatprep.subr.mxu0 0.0
        %682 = vmatpush1.msra.mxu0 0.0
        %683 = vmatprep.subr.mxu0 0.0
        %684 = vmatpush1.msra.mxu0 0.0
        %685 = vmatprep.subr.mxu0 0.0
        %686 = vmatpush1.msra.mxu0 0.0
        %687 = vmatprep.subr.mxu0 0.0
        %688 = vmatpush1.msra.mxu0 0.0
        %689 = vmatprep.subr.mxu0 0.0
        %690 = vmatpush1.msra.mxu0 0.0
        %691 = vmatprep.subr.mxu0 0.0
        %692 = vmatpush1.msra.mxu0 0.0
        %693 = vmatprep.subr.mxu0 0.0
        %694 = vmatpush1.msra.mxu0 0.0
        %695 = vmatprep.subr.mxu0 0.0
        %696 = vmatpush1.msra.mxu0 0.0
        %697 = vmatprep.subr.mxu0 0.0
        %698 = vmatpush1.msra.mxu0 0.0
        %699 = vmatprep.subr.mxu0 0.0
        %700 = vmatpush1.msra.mxu0 0.0
        %701 = vmatprep.subr.mxu0 0.0
        %702 = vmatpush1.msra.mxu0 0.0
        %703 = vmatprep.subr.mxu0 0.0
        %704 = vmatpush1.msra.mxu0 0.0
        %705 = vmatprep.subr.mxu0 0.0
        %706 = vmatpush1.msra.mxu0 0.0
        %707 = vmatprep.subr.mxu0 0.0
        %708 = vmatpush1.msra.mxu0 0.0
        %709 = vmatprep.mubr.f32.mxu0 0.0
        %710 = vmatmul.mubr.f32.gmra.mrb[0].mxu0 %v643
        %v711 = vpop.f32.mrb[0].mxu0
        %v712 = vadd.f32 0.0, %v711
        %v713 = vpop.f32.mrb[0].mxu0
        %714 = vdwg.mxu0
        %v715 = vadd.f32 %v642, %v712
        %v716 = vtanh.pop %v715
        %v717 = vsel %vm456, %v603, %v628
        %v719 = vsel %vm506, %v716, 0
        %721 = vmatprep.subr.mxu0 0.0
        %722 = vmatpush1.msra.mxu0 %v440
        %723 = vmatprep.subr.mxu0 0.0
        %724 = vmatpush1.msra.mxu0 %v441
        %725 = vmatprep.subr.mxu0 0.0
        %726 = vmatpush1.msra.mxu0 %v442
        %727 = vmatprep.subr.mxu0 0.0
        %728 = vmatpush1.msra.mxu0 %v443
        %729 = vmatprep.subr.mxu0 0.0
        %730 = vmatpush1.msra.mxu0 0.0
        %731 = vmatprep.subr.mxu0 0.0
        %732 = vmatpush1.msra.mxu0 0.0
        %733 = vmatprep.subr.mxu0 0.0
        %734 = vmatpush1.msra.mxu0 0.0
        %735 = vmatprep.subr.mxu0 0.0
        %736 = vmatpush1.msra.mxu0 0.0
        %737 = vmatprep.subr.mxu0 0.0
        %738 = vmatpush1.msra.mxu0 0.0
        %739 = vmatprep.subr.mxu0 0.0
        %740 = vmatpush1.msra.mxu0 0.0
        %741 = vmatprep.subr.mxu0 0.0
        %742 = vmatpush1.msra.mxu0 0.0
        %743 = vmatprep.subr.mxu0 0.0
        %744 = vmatpush1.msra.mxu0 0.0
        %745 = vmatprep.subr.mxu0 0.0
        %746 = vmatpush1.msra.mxu0 0.0
        %747 = vmatprep.subr.mxu0 0.0
        %748 = vmatpush1.msra.mxu0 0.0
        %749 = vmatprep.subr.mxu0 0.0
        %750 = vmatpush1.msra.mxu0 0.0
        %751 = vmatprep.subr.mxu0 0.0
        %752 = vmatpush1.msra.mxu0 0.0
        %753 = vmatprep.subr.mxu0 0.0
        %754 = vmatpush1.msra.mxu0 0.0
        %755 = vmatprep.subr.mxu0 0.0
        %756 = vmatpush1.msra.mxu0 0.0
        %757 = vmatprep.subr.mxu0 0.0
        %758 = vmatpush1.msra.mxu0 0.0
        %759 = vmatprep.subr.mxu0 0.0
        %760 = vmatpush1.msra.mxu0 0.0
        %761 = vmatprep.subr.mxu0 0.0
        %762 = vmatpush1.msra.mxu0 0.0
        %763 = vmatprep.subr.mxu0 0.0
        %764 = vmatpush1.msra.mxu0 0.0
        %765 = vmatprep.subr.mxu0 0.0
        %766 = vmatpush1.msra.mxu0 0.0
        %767 = vmatprep.subr.mxu0 0.0
        %768 = vmatpush1.msra.mxu0 0.0
        %769 = vmatprep.subr.mxu0 0.0
        %770 = vmatpush1.msra.mxu0 0.0
        %771 = vmatprep.subr.mxu0 0.0
        %772 = vmatpush1.msra.mxu0 0.0
        %773 = vmatprep.subr.mxu0 0.0
        %774 = vmatpush1.msra.mxu0 0.0
        %775 = vmatprep.subr.mxu0 0.0
        %776 = vmatpush1.msra.mxu0 0.0
        %777 = vmatprep.subr.mxu0 0.0
        %778 = vmatpush1.msra.mxu0 0.0
        %779 = vmatprep.subr.mxu0 0.0
        %780 = vmatpush1.msra.mxu0 0.0
        %781 = vmatprep.subr.mxu0 0.0
        %782 = vmatpush1.msra.mxu0 0.0
        %783 = vmatprep.subr.mxu0 0.0
        %784 = vmatpush1.msra.mxu0 0.0
        %785 = vmatprep.mubr.f32.mxu0 0.0
        %786 = vmatmul.mubr.f32.gmra.mrb[0].mxu0 %v719
        %v787 = vpop.f32.mrb[0].mxu0
        %v788 = vadd.f32 0.0, %v787
        %v789 = vpop.f32.mrb[0].mxu0
        %790 = vdwg.mxu0
        %v791 = vadd.f32 %v717, %v788
        %v792 = vtanh.pop %v791
        %v793 = vsel %vm456, %v608, %v623
        %v795 = vsel %vm506, %v792, 0
        %797 = vmatprep.subr.mxu0 0.0
        %798 = vmatpush1.msra.mxu0 %v440
        %799 = vmatprep.subr.mxu0 0.0
        %800 = vmatpush1.msra.mxu0 %v441
        %801 = vmatprep.subr.mxu0 0.0
        %802 = vmatpush1.msra.mxu0 %v442
        %803 = vmatprep.subr.mxu0 0.0
        %804 = vmatpush1.msra.mxu0 %v443
        %805 = vmatprep.subr.mxu0 0.0
        %806 = vmatpush1.msra.mxu0 0.0
        %807 = vmatprep.subr.mxu0 0.0
        %808 = vmatpush1.msra.mxu0 0.0
        %809 = vmatprep.subr.mxu0 0.0
        %810 = vmatpush1.msra.mxu0 0.0
        %811 = vmatprep.subr.mxu0 0.0
        %812 = vmatpush1.msra.mxu0 0.0
        %813 = vmatprep.subr.mxu0 0.0
        %814 = vmatpush1.msra.mxu0 0.0
        %815 = vmatprep.subr.mxu0 0.0
        %816 = vmatpush1.msra.mxu0 0.0
        %817 = vmatprep.subr.mxu0 0.0
        %818 = vmatpush1.msra.mxu0 0.0
        %819 = vmatprep.subr.mxu0 0.0
        %820 = vmatpush1.msra.mxu0 0.0
        %821 = vmatprep.subr.mxu0 0.0
        %822 = vmatpush1.msra.mxu0 0.0
        %823 = vmatprep.subr.mxu0 0.0
        %824 = vmatpush1.msra.mxu0 0.0
        %825 = vmatprep.subr.mxu0 0.0
        %826 = vmatpush1.msra.mxu0 0.0
        %827 = vmatprep.subr.mxu0 0.0
        %828 = vmatpush1.msra.mxu0 0.0
        %829 = vmatprep.subr.mxu0 0.0
        %830 = vmatpush1.msra.mxu0 0.0
        %831 = vmatprep.subr.mxu0 0.0
        %832 = vmatpush1.msra.mxu0 0.0
        %833 = vmatprep.subr.mxu0 0.0
        %834 = vmatpush1.msra.mxu0 0.0
        %835 = vmatprep.subr.mxu0 0.0
        %836 = vmatpush1.msra.mxu0 0.0
        %837 = vmatprep.subr.mxu0 0.0
        %838 = vmatpush1.msra.mxu0 0.0
        %839 = vmatprep.subr.mxu0 0.0
        %840 = vmatpush1.msra.mxu0 0.0
        %841 = vmatprep.subr.mxu0 0.0
        %842 = vmatpush1.msra.mxu0 0.0
        %843 = vmatprep.subr.mxu0 0.0
        %844 = vmatpush1.msra.mxu0 0.0
        %845 = vmatprep.subr.mxu0 0.0
        %846 = vmatpush1.msra.mxu0 0.0
        %847 = vmatprep.subr.mxu0 0.0
        %848 = vmatpush1.msra.mxu0 0.0
        %849 = vmatprep.subr.mxu0 0.0
        %850 = vmatpush1.msra.mxu0 0.0
        %851 = vmatprep.subr.mxu0 0.0
        %852 = vmatpush1.msra.mxu0 0.0
        %853 = vmatprep.subr.mxu0 0.0
        %854 = vmatpush1.msra.mxu0 0.0
        %855 = vmatprep.subr.mxu0 0.0
        %856 = vmatpush1.msra.mxu0 0.0
        %857 = vmatprep.subr.mxu0 0.0
        %858 = vmatpush1.msra.mxu0 0.0
        %859 = vmatprep.subr.mxu0 0.0
        %860 = vmatpush1.msra.mxu0 0.0
        %861 = vmatprep.mubr.f32.mxu0 0.0
        %862 = vmatmul.mubr.f32.gmra.mrb[0].mxu0 %v795
        %v863 = vpop.f32.mrb[0].mxu0
        %v864 = vadd.f32 0.0, %v863
        %v865 = vpop.f32.mrb[0].mxu0
        %866 = vdwg.mxu0
        %v867 = vadd.f32 %v793, %v864
        %v868 = vtanh.pop %v867
        %v869 = vsel %vm456, %v613, %v618
        %v871 = vsel %vm506, %v868, 0
        %873 = vmatprep.subr.mxu0 0.0
        %874 = vmatpush1.msra.mxu0 %v440
        %875 = vmatprep.subr.mxu0 0.0
        %876 = vmatpush1.msra.mxu0 %v441
        %877 = vmatprep.subr.mxu0 0.0
        %878 = vmatpush1.msra.mxu0 %v442
        %879 = vmatprep.subr.mxu0 0.0
        %880 = vmatpush1.msra.mxu0 %v443
        %881 = vmatprep.subr.mxu0 0.0
        %882 = vmatpush1.msra.mxu0 0.0
        %883 = vmatprep.subr.mxu0 0.0
        %884 = vmatpush1.msra.mxu0 0.0
        %885 = vmatprep.subr.mxu0 0.0
        %886 = vmatpush1.msra.mxu0 0.0
        %887 = vmatprep.subr.mxu0 0.0
        %888 = vmatpush1.msra.mxu0 0.0
        %889 = vmatprep.subr.mxu0 0.0
        %890 = vmatpush1.msra.mxu0 0.0
        %891 = vmatprep.subr.mxu0 0.0
        %892 = vmatpush1.msra.mxu0 0.0
        %893 = vmatprep.subr.mxu0 0.0
        %894 = vmatpush1.msra.mxu0 0.0
        %895 = vmatprep.subr.mxu0 0.0
        %896 = vmatpush1.msra.mxu0 0.0
        %897 = vmatprep.subr.mxu0 0.0
        %898 = vmatpush1.msra.mxu0 0.0
        %899 = vmatprep.subr.mxu0 0.0
        %900 = vmatpush1.msra.mxu0 0.0
        %901 = vmatprep.subr.mxu0 0.0
        %902 = vmatpush1.msra.mxu0 0.0
        %903 = vmatprep.subr.mxu0 0.0
        %904 = vmatpush1.msra.mxu0 0.0
        %905 = vmatprep.subr.mxu0 0.0
        %906 = vmatpush1.msra.mxu0 0.0
        %907 = vmatprep.subr.mxu0 0.0
        %908 = vmatpush1.msra.mxu0 0.0
        %909 = vmatprep.subr.mxu0 0.0
        %910 = vmatpush1.msra.mxu0 0.0
        %911 = vmatprep.subr.mxu0 0.0
        %912 = vmatpush1.msra.mxu0 0.0
        %913 = vmatprep.subr.mxu0 0.0
        %914 = vmatpush1.msra.mxu0 0.0
        %915 = vmatprep.subr.mxu0 0.0
        %916 = vmatpush1.msra.mxu0 0.0
        %917 = vmatprep.subr.mxu0 0.0
        %918 = vmatpush1.msra.mxu0 0.0
        %919 = vmatprep.subr.mxu0 0.0
        %920 = vmatpush1.msra.mxu0 0.0
        %921 = vmatprep.subr.mxu0 0.0
        %922 = vmatpush1.msra.mxu0 0.0
        %923 = vmatprep.subr.mxu0 0.0
        %924 = vmatpush1.msra.mxu0 0.0
        %925 = vmatprep.subr.mxu0 0.0
        %926 = vmatpush1.msra.mxu0 0.0
        %927 = vmatprep.subr.mxu0 0.0
        %928 = vmatpush1.msra.mxu0 0.0
        %929 = vmatprep.subr.mxu0 0.0
        %930 = vmatpush1.msra.mxu0 0.0
        %931 = vmatprep.subr.mxu0 0.0
        %932 = vmatpush1.msra.mxu0 0.0
        %933 = vmatprep.subr.mxu0 0.0
        %934 = vmatpush1.msra.mxu0 0.0
        %935 = vmatprep.subr.mxu0 0.0
        %936 = vmatpush1.msra.mxu0 0.0
        %937 = vmatprep.mubr.f32.mxu0 0.0
        %938 = vmatmul.mubr.f32.gmra.mrb[0].mxu0 %v871
        %v939 = vpop.f32.mrb[0].mxu0
        %v940 = vadd.f32 0.0, %v939
        %v941 = vpop.f32.mrb[0].mxu0
        %942 = vdwg.mxu0
        %v943 = vadd.f32 %v869, %v940
        %v944 = vtanh.pop %v943
        %v945 = vsel %vm456, %v618, %v613
        %v947 = vsel %vm506, %v944, 0
        %949 = vmatprep.subr.mxu0 0.0
        %950 = vmatpush1.msra.mxu0 %v440
        %951 = vmatprep.subr.mxu0 0.0
        %952 = vmatpush1.msra.mxu0 %v441
        %953 = vmatprep.subr.mxu0 0.0
        %954 = vmatpush1.msra.mxu0 %v442
        %955 = vmatprep.subr.mxu0 0.0
        %956 = vmatpush1.msra.mxu0 %v443
        %957 = vmatprep.subr.mxu0 0.0
        %958 = vmatpush1.msra.mxu0 0.0
        %959 = vmatprep.subr.mxu0 0.0
        %960 = vmatpush1.msra.mxu0 0.0
        %961 = vmatprep.subr.mxu0 0.0
        %962 = vmatpush1.msra.mxu0 0.0
        %963 = vmatprep.subr.mxu0 0.0
        %964 = vmatpush1.msra.mxu0 0.0
        %965 = vmatprep.subr.mxu0 0.0
        %966 = vmatpush1.msra.mxu0 0.0
        %967 = vmatprep.subr.mxu0 0.0
        %968 = vmatpush1.msra.mxu0 0.0
        %969 = vmatprep.subr.mxu0 0.0
        %970 = vmatpush1.msra.mxu0 0.0
        %971 = vmatprep.subr.mxu0 0.0
        %972 = vmatpush1.msra.mxu0 0.0
        %973 = vmatprep.subr.mxu0 0.0
        %974 = vmatpush1.msra.mxu0 0.0
        %975 = vmatprep.subr.mxu0 0.0
        %976 = vmatpush1.msra.mxu0 0.0
        %977 = vmatprep.subr.mxu0 0.0
        %978 = vmatpush1.msra.mxu0 0.0
        %979 = vmatprep.subr.mxu0 0.0
        %980 = vmatpush1.msra.mxu0 0.0
        %981 = vmatprep.subr.mxu0 0.0
        %982 = vmatpush1.msra.mxu0 0.0
        %983 = vmatprep.subr.mxu0 0.0
        %984 = vmatpush1.msra.mxu0 0.0
        %985 = vmatprep.subr.mxu0 0.0
        %986 = vmatpush1.msra.mxu0 0.0
        %987 = vmatprep.subr.mxu0 0.0
        %988 = vmatpush1.msra.mxu0 0.0
        %989 = vmatprep.subr.mxu0 0.0
        %990 = vmatpush1.msra.mxu0 0.0
        %991 = vmatprep.subr.mxu0 0.0
        %992 = vmatpush1.msra.mxu0 0.0
        %993 = vmatprep.subr.mxu0 0.0
        %994 = vmatpush1.msra.mxu0 0.0
        %995 = vmatprep.subr.mxu0 0.0
        %996 = vmatpush1.msra.mxu0 0.0
        %997 = vmatprep.subr.mxu0 0.0
        %998 = vmatpush1.msra.mxu0 0.0
        %999 = vmatprep.subr.mxu0 0.0
        %1000 = vmatpush1.msra.mxu0 0.0
        %1001 = vmatprep.subr.mxu0 0.0
        %1002 = vmatpush1.msra.mxu0 0.0
        %1003 = vmatprep.subr.mxu0 0.0
        %1004 = vmatpush1.msra.mxu0 0.0
        %1005 = vmatprep.subr.mxu0 0.0
        %1006 = vmatpush1.msra.mxu0 0.0
        %1007 = vmatprep.subr.mxu0 0.0
        %1008 = vmatpush1.msra.mxu0 0.0
        %1009 = vmatprep.subr.mxu0 0.0
        %1010 = vmatpush1.msra.mxu0 0.0
        %1011 = vmatprep.subr.mxu0 0.0
        %1012 = vmatpush1.msra.mxu0 0.0
        %1013 = vmatprep.mubr.f32.mxu0 0.0
        %1014 = vmatmul.mubr.f32.gmra.mrb[0].mxu0 %v947
        %v1015 = vpop.f32.mrb[0].mxu0
        %v1016 = vadd.f32 0.0, %v1015
        %v1017 = vpop.f32.mrb[0].mxu0
        %1018 = vdwg.mxu0
        %v1019 = vadd.f32 %v945, %v1016
        %v1020 = vtanh.pop %v1019
        %v1021 = vsel %vm456, %v623, %v608
        %v1023 = vsel %vm506, %v1020, 0
        %1025 = vmatprep.subr.mxu0 0.0
        %1026 = vmatpush1.msra.mxu0 %v440
        %1027 = vmatprep.subr.mxu0 0.0
        %1028 = vmatpush1.msra.mxu0 %v441
        %1029 = vmatprep.subr.mxu0 0.0
        %1030 = vmatpush1.msra.mxu0 %v442
        %1031 = vmatprep.subr.mxu0 0.0
        %1032 = vmatpush1.msra.mxu0 %v443
        %1033 = vmatprep.subr.mxu0 0.0
        %1034 = vmatpush1.msra.mxu0 0.0
        %1035 = vmatprep.subr.mxu0 0.0
        %1036 = vmatpush1.msra.mxu0 0.0
        %1037 = vmatprep.subr.mxu0 0.0
        %1038 = vmatpush1.msra.mxu0 0.0
        %1039 = vmatprep.subr.mxu0 0.0
        %1040 = vmatpush1.msra.mxu0 0.0
        %1041 = vmatprep.subr.mxu0 0.0
        %1042 = vmatpush1.msra.mxu0 0.0
        %1043 = vmatprep.subr.mxu0 0.0
        %1044 = vmatpush1.msra.mxu0 0.0
        %1045 = vmatprep.subr.mxu0 0.0
        %1046 = vmatpush1.msra.mxu0 0.0
        %1047 = vmatprep.subr.mxu0 0.0
        %1048 = vmatpush1.msra.mxu0 0.0
        %1049 = vmatprep.subr.mxu0 0.0
        %1050 = vmatpush1.msra.mxu0 0.0
        %1051 = vmatprep.subr.mxu0 0.0
        %1052 = vmatpush1.msra.mxu0 0.0
        %1053 = vmatprep.subr.mxu0 0.0
        %1054 = vmatpush1.msra.mxu0 0.0
        %1055 = vmatprep.subr.mxu0 0.0
        %1056 = vmatpush1.msra.mxu0 0.0
        %1057 = vmatprep.subr.mxu0 0.0
        %1058 = vmatpush1.msra.mxu0 0.0
        %1059 = vmatprep.subr.mxu0 0.0
        %1060 = vmatpush1.msra.mxu0 0.0
        %1061 = vmatprep.subr.mxu0 0.0
        %1062 = vmatpush1.msra.mxu0 0.0
        %1063 = vmatprep.subr.mxu0 0.0
        %1064 = vmatpush1.msra.mxu0 0.0
        %1065 = vmatprep.subr.mxu0 0.0
        %1066 = vmatpush1.msra.mxu0 0.0
        %1067 = vmatprep.subr.mxu0 0.0
        %1068 = vmatpush1.msra.mxu0 0.0
        %1069 = vmatprep.subr.mxu0 0.0
        %1070 = vmatpush1.msra.mxu0 0.0
        %1071 = vmatprep.subr.mxu0 0.0
        %1072 = vmatpush1.msra.mxu0 0.0
        %1073 = vmatprep.subr.mxu0 0.0
        %1074 = vmatpush1.msra.mxu0 0.0
        %1075 = vmatprep.subr.mxu0 0.0
        %1076 = vmatpush1.msra.mxu0 0.0
        %1077 = vmatprep.subr.mxu0 0.0
        %1078 = vmatpush1.msra.mxu0 0.0
        %1079 = vmatprep.subr.mxu0 0.0
        %1080 = vmatpush1.msra.mxu0 0.0
        %1081 = vmatprep.subr.mxu0 0.0
        %1082 = vmatpush1.msra.mxu0 0.0
        %1083 = vmatprep.subr.mxu0 0.0
        %1084 = vmatpush1.msra.mxu0 0.0
        %1085 = vmatprep.subr.mxu0 0.0
        %1086 = vmatpush1.msra.mxu0 0.0
        %1087 = vmatprep.subr.mxu0 0.0
        %1088 = vmatpush1.msra.mxu0 0.0
        %1089 = vmatprep.mubr.f32.mxu0 0.0
        %1090 = vmatmul.mubr.f32.gmra.mrb[0].mxu0 %v1023
        %v1091 = vpop.f32.mrb[0].mxu0
        %v1092 = vadd.f32 0.0, %v1091
        %v1093 = vpop.f32.mrb[0].mxu0
        %1094 = vdwg.mxu0
        %v1095 = vadd.f32 %v1021, %v1092
        %v1096 = vtanh.pop %v1095
        %v1097 = vsel %vm456, %v628, %v603
        %v1099 = vsel %vm506, %v1096, 0
        %1101 = vmatprep.subr.mxu0 0.0
        %1102 = vmatpush1.msra.mxu0 %v440
        %1103 = vmatprep.subr.mxu0 0.0
        %1104 = vmatpush1.msra.mxu0 %v441
        %1105 = vmatprep.subr.mxu0 0.0
        %1106 = vmatpush1.msra.mxu0 %v442
        %1107 = vmatprep.subr.mxu0 0.0
        %1108 = vmatpush1.msra.mxu0 %v443
        %1109 = vmatprep.subr.mxu0 0.0
        %1110 = vmatpush1.msra.mxu0 0.0
        %1111 = vmatprep.subr.mxu0 0.0
        %1112 = vmatpush1.msra.mxu0 0.0
        %1113 = vmatprep.subr.mxu0 0.0
        %1114 = vmatpush1.msra.mxu0 0.0
        %1115 = vmatprep.subr.mxu0 0.0
        %1116 = vmatpush1.msra.mxu0 0.0
        %1117 = vmatprep.subr.mxu0 0.0
        %1118 = vmatpush1.msra.mxu0 0.0
        %1119 = vmatprep.subr.mxu0 0.0
        %1120 = vmatpush1.msra.mxu0 0.0
        %1121 = vmatprep.subr.mxu0 0.0
        %1122 = vmatpush1.msra.mxu0 0.0
        %1123 = vmatprep.subr.mxu0 0.0
        %1124 = vmatpush1.msra.mxu0 0.0
        %1125 = vmatprep.subr.mxu0 0.0
        %1126 = vmatpush1.msra.mxu0 0.0
        %1127 = vmatprep.subr.mxu0 0.0
        %1128 = vmatpush1.msra.mxu0 0.0
        %1129 = vmatprep.subr.mxu0 0.0
        %1130 = vmatpush1.msra.mxu0 0.0
        %1131 = vmatprep.subr.mxu0 0.0
        %1132 = vmatpush1.msra.mxu0 0.0
        %1133 = vmatprep.subr.mxu0 0.0
        %1134 = vmatpush1.msra.mxu0 0.0
        %1135 = vmatprep.subr.mxu0 0.0
        %1136 = vmatpush1.msra.mxu0 0.0
        %1137 = vmatprep.subr.mxu0 0.0
        %1138 = vmatpush1.msra.mxu0 0.0
        %1139 = vmatprep.subr.mxu0 0.0
        %1140 = vmatpush1.msra.mxu0 0.0
        %1141 = vmatprep.subr.mxu0 0.0
        %1142 = vmatpush1.msra.mxu0 0.0
        %1143 = vmatprep.subr.mxu0 0.0
        %1144 = vmatpush1.msra.mxu0 0.0
        %1145 = vmatprep.subr.mxu0 0.0
        %1146 = vmatpush1.msra.mxu0 0.0
        %1147 = vmatprep.subr.mxu0 0.0
        %1148 = vmatpush1.msra.mxu0 0.0
        %1149 = vmatprep.subr.mxu0 0.0
        %1150 = vmatpush1.msra.mxu0 0.0
        %1151 = vmatprep.subr.mxu0 0.0
        %1152 = vmatpush1.msra.mxu0 0.0
        %1153 = vmatprep.subr.mxu0 0.0
        %1154 = vmatpush1.msra.mxu0 0.0
        %1155 = vmatprep.subr.mxu0 0.0
        %1156 = vmatpush1.msra.mxu0 0.0
        %1157 = vmatprep.subr.mxu0 0.0
        %1158 = vmatpush1.msra.mxu0 0.0
        %1159 = vmatprep.subr.mxu0 0.0
        %1160 = vmatpush1.msra.mxu0 0.0
        %1161 = vmatprep.subr.mxu0 0.0
        %1162 = vmatpush1.msra.mxu0 0.0
        %1163 = vmatprep.subr.mxu0 0.0
        %1164 = vmatpush1.msra.mxu0 0.0
        %1165 = vmatprep.mubr.f32.mxu0 0.0
        %1166 = vmatmul.mubr.f32.gmra.mrb[0].mxu0 %v1099
        %v1167 = vpop.f32.mrb[0].mxu0
        %v1168 = vadd.f32 0.0, %v1167
        %v1169 = vpop.f32.mrb[0].mxu0
        %1170 = vdwg.mxu0
        %v1171 = vadd.f32 %v1097, %v1168
        %v1172 = vtanh.pop %v1171
        %v1173 = vsel %vm456, %v633, %v598
        %v1175 = vsel %vm506, %v1172, 0
        %1177 = vmatprep.subr.mxu0 0.0
        %1178 = vmatpush1.msra.mxu0 %v440
        %1179 = vmatprep.subr.mxu0 0.0
        %1180 = vmatpush1.msra.mxu0 %v441
        %1181 = vmatprep.subr.mxu0 0.0
        %1182 = vmatpush1.msra.mxu0 %v442
        %1183 = vmatprep.subr.mxu0 0.0
        %1184 = vmatpush1.msra.mxu0 %v443
        %1185 = vmatprep.subr.mxu0 0.0
        %1186 = vmatpush1.msra.mxu0 0.0
        %1187 = vmatprep.subr.mxu0 0.0
        %1188 = vmatpush1.msra.mxu0 0.0
        %1189 = vmatprep.subr.mxu0 0.0
        %1190 = vmatpush1.msra.mxu0 0.0
        %1191 = vmatprep.subr.mxu0 0.0
        %1192 = vmatpush1.msra.mxu0 0.0
        %1193 = vmatprep.subr.mxu0 0.0
        %1194 = vmatpush1.msra.mxu0 0.0
        %1195 = vmatprep.subr.mxu0 0.0
        %1196 = vmatpush1.msra.mxu0 0.0
        %1197 = vmatprep.subr.mxu0 0.0
        %1198 = vmatpush1.msra.mxu0 0.0
        %1199 = vmatprep.subr.mxu0 0.0
        %1200 = vmatpush1.msra.mxu0 0.0
        %1201 = vmatprep.subr.mxu0 0.0
        %1202 = vmatpush1.msra.mxu0 0.0
        %1203 = vmatprep.subr.mxu0 0.0
        %1204 = vmatpush1.msra.mxu0 0.0
        %1205 = vmatprep.subr.mxu0 0.0
        %1206 = vmatpush1.msra.mxu0 0.0
        %1207 = vmatprep.subr.mxu0 0.0
        %1208 = vmatpush1.msra.mxu0 0.0
        %1209 = vmatprep.subr.mxu0 0.0
        %1210 = vmatpush1.msra.mxu0 0.0
        %1211 = vmatprep.subr.mxu0 0.0
        %1212 = vmatpush1.msra.mxu0 0.0
        %1213 = vmatprep.subr.mxu0 0.0
        %1214 = vmatpush1.msra.mxu0 0.0
        %1215 = vmatprep.subr.mxu0 0.0
        %1216 = vmatpush1.msra.mxu0 0.0
        %1217 = vmatprep.subr.mxu0 0.0
        %1218 = vmatpush1.msra.mxu0 0.0
        %1219 = vmatprep.subr.mxu0 0.0
        %1220 = vmatpush1.msra.mxu0 0.0
        %1221 = vmatprep.subr.mxu0 0.0
        %1222 = vmatpush1.msra.mxu0 0.0
        %1223 = vmatprep.subr.mxu0 0.0
        %1224 = vmatpush1.msra.mxu0 0.0
        %1225 = vmatprep.subr.mxu0 0.0
        %1226 = vmatpush1.msra.mxu0 0.0
        %1227 = vmatprep.subr.mxu0 0.0
        %1228 = vmatpush1.msra.mxu0 0.0
        %1229 = vmatprep.subr.mxu0 0.0
        %1230 = vmatpush1.msra.mxu0 0.0
        %1231 = vmatprep.subr.mxu0 0.0
        %1232 = vmatpush1.msra.mxu0 0.0
        %1233 = vmatprep.subr.mxu0 0.0
        %1234 = vmatpush1.msra.mxu0 0.0
        %1235 = vmatprep.subr.mxu0 0.0
        %1236 = vmatpush1.msra.mxu0 0.0
        %1237 = vmatprep.subr.mxu0 0.0
        %1238 = vmatpush1.msra.mxu0 0.0
        %1239 = vmatprep.subr.mxu0 0.0
        %1240 = vmatpush1.msra.mxu0 0.0
        %1241 = vmatprep.mubr.f32.mxu0 0.0
        %1242 = vmatmul.mubr.f32.gmra.mrb[0].mxu0 %v1175
        %v1243 = vpop.f32.mrb[0].mxu0
        %v1244 = vadd.f32 0.0, %v1243
        %v1245 = vpop.f32.mrb[0].mxu0
        %1246 = vdwg.mxu0
        %v1247 = vadd.f32 %v1173, %v1244
        %v1248 = vtanh.pop %v1247
        %v1249 = vsel %vm456, %v716, %v1248
        %v1250 = vsel %vm456, %v792, %v1172
        %v1251 = vsel %vm456, %v868, %v1096
        %v1252 = vsel %vm456, %v944, %v1020
        %v1253 = vsel %vm456, %v1020, %v944
        %v1254 = vsel %vm456, %v1096, %v868
        %v1255 = vsel %vm456, %v1172, %v792
        %v1256 = vsel %vm456, %v1248, %v716
        %v1258 = vlaneseq
        %v1259 = vshrl.u32 %v1258, 7
        %v1260 = vsub.s32 0, %v1259
        %v1261 = vrot.slane %v449, %v1260
        %v1264 = vsel %vm506, %v1249, 0
        %v1267 = vsel %vm506, %v1250, 0
        %v1270 = vsel %vm506, %v1251, 0
        %v1273 = vsel %vm506, %v1252, 0
        %v1276 = vsel %vm506, %v1253, 0
        %v1279 = vsel %vm506, %v1254, 0
        %v1282 = vsel %vm506, %v1255, 0
        %v1285 = vsel %vm506, %v1256, 0
        %1287 = vmatprep.subr.mxu0 0.0
        %1288 = vmatpush1.msra.mxu0 %v445
        %1289 = vmatprep.subr.mxu0 0.0
        %1290 = vmatpush1.msra.mxu0 %v446
        %1291 = vmatprep.subr.mxu0 0.0
        %1292 = vmatpush1.msra.mxu0 %v447
        %1293 = vmatprep.subr.mxu0 0.0
        %1294 = vmatpush1.msra.mxu0 %v448
        %1295 = vmatprep.subr.mxu0 0.0
        %1296 = vmatpush1.msra.mxu0 0.0
        %1297 = vmatprep.subr.mxu0 0.0
        %1298 = vmatpush1.msra.mxu0 0.0
        %1299 = vmatprep.subr.mxu0 0.0
        %1300 = vmatpush1.msra.mxu0 0.0
        %1301 = vmatprep.subr.mxu0 0.0
        %1302 = vmatpush1.msra.mxu0 0.0
        %1303 = vmatprep.subr.mxu0 0.0
        %1304 = vmatpush1.msra.mxu0 0.0
        %1305 = vmatprep.subr.mxu0 0.0
        %1306 = vmatpush1.msra.mxu0 0.0
        %1307 = vmatprep.subr.mxu0 0.0
        %1308 = vmatpush1.msra.mxu0 0.0
        %1309 = vmatprep.subr.mxu0 0.0
        %1310 = vmatpush1.msra.mxu0 0.0
        %1311 = vmatprep.subr.mxu0 0.0
        %1312 = vmatpush1.msra.mxu0 0.0
        %1313 = vmatprep.subr.mxu0 0.0
        %1314 = vmatpush1.msra.mxu0 0.0
        %1315 = vmatprep.subr.mxu0 0.0
        %1316 = vmatpush1.msra.mxu0 0.0
        %1317 = vmatprep.subr.mxu0 0.0
        %1318 = vmatpush1.msra.mxu0 0.0
        %1319 = vmatprep.subr.mxu0 0.0
        %1320 = vmatpush1.msra.mxu0 0.0
        %1321 = vmatprep.subr.mxu0 0.0
        %1322 = vmatpush1.msra.mxu0 0.0
        %1323 = vmatprep.subr.mxu0 0.0
        %1324 = vmatpush1.msra.mxu0 0.0
        %1325 = vmatprep.subr.mxu0 0.0
        %1326 = vmatpush1.msra.mxu0 0.0
        %1327 = vmatprep.subr.mxu0 0.0
        %1328 = vmatpush1.msra.mxu0 0.0
        %1329 = vmatprep.subr.mxu0 0.0
        %1330 = vmatpush1.msra.mxu0 0.0
        %1331 = vmatprep.subr.mxu0 0.0
        %1332 = vmatpush1.msra.mxu0 0.0
        %1333 = vmatprep.subr.mxu0 0.0
        %1334 = vmatpush1.msra.mxu0 0.0
        %1335 = vmatprep.subr.mxu0 0.0
        %1336 = vmatpush1.msra.mxu0 0.0
        %1337 = vmatprep.subr.mxu0 0.0
        %1338 = vmatpush1.msra.mxu0 0.0
        %1339 = vmatprep.subr.mxu0 0.0
        %1340 = vmatpush1.msra.mxu0 0.0
        %1341 = vmatprep.subr.mxu0 0.0
        %1342 = vmatpush1.msra.mxu0 0.0
        %1343 = vmatprep.subr.mxu0 0.0
        %1344 = vmatpush1.msra.mxu0 0.0
        %1345 = vmatprep.subr.mxu0 0.0
        %1346 = vmatpush1.msra.mxu0 0.0
        %1347 = vmatprep.subr.mxu0 0.0
        %1348 = vmatpush1.msra.mxu0 0.0
        %1349 = vmatprep.subr.mxu0 0.0
        %1350 = vmatpush1.msra.mxu0 0.0
        %1351 = vmatprep.mubr.f32.mxu0 0.0
        %1352 = vmatmul.mubr.f32.gmra.mrb[0].mxu0 %v1264
        %v1353 = vpop.f32.mrb[0].mxu0
        %v1354 = vadd.f32 %v1261, %v1353
        %v1355 = vpop.f32.mrb[0].mxu0
        %1356 = vmatprep.mubr.f32.mxu0 0.0
        %1357 = vmatmul.mubr.f32.gmra.mrb[0].mxu0 %v1267
        %v1358 = vpop.f32.mrb[0].mxu0
        %v1359 = vadd.f32 %v1261, %v1358
        %v1360 = vpop.f32.mrb[0].mxu0
        %1361 = vmatprep.mubr.f32.mxu0 0.0
        %1362 = vmatmul.mubr.f32.gmra.mrb[0].mxu0 %v1270
        %v1363 = vpop.f32.mrb[0].mxu0
        %v1364 = vadd.f32 %v1261, %v1363
        %v1365 = vpop.f32.mrb[0].mxu0
        %1366 = vmatprep.mubr.f32.mxu0 0.0
        %1367 = vmatmul.mubr.f32.gmra.mrb[0].mxu0 %v1273
        %v1368 = vpop.f32.mrb[0].mxu0
        %v1369 = vadd.f32 %v1261, %v1368
        %v1370 = vpop.f32.mrb[0].mxu0
        %1371 = vmatprep.mubr.f32.mxu0 0.0
        %1372 = vmatmul.mubr.f32.gmra.mrb[0].mxu0 %v1276
        %v1373 = vpop.f32.mrb[0].mxu0
        %v1374 = vadd.f32 %v1261, %v1373
        %v1375 = vpop.f32.mrb[0].mxu0
        %1376 = vmatprep.mubr.f32.mxu0 0.0
        %1377 = vmatmul.mubr.f32.gmra.mrb[0].mxu0 %v1279
        %v1378 = vpop.f32.mrb[0].mxu0
        %v1379 = vadd.f32 %v1261, %v1378
        %v1380 = vpop.f32.mrb[0].mxu0
        %1381 = vmatprep.mubr.f32.mxu0 0.0
        %1382 = vmatmul.mubr.f32.gmra.mrb[0].mxu0 %v1282
        %v1383 = vpop.f32.mrb[0].mxu0
        %v1384 = vadd.f32 %v1261, %v1383
        %v1385 = vpop.f32.mrb[0].mxu0
        %1386 = vmatprep.mubr.f32.mxu0 0.0
        %1387 = vmatmul.mubr.f32.gmra.mrb[0].mxu0 %v1285
        %v1388 = vpop.f32.mrb[0].mxu0
        %v1389 = vadd.f32 %v1261, %v1388
        %v1390 = vpop.f32.mrb[0].mxu0
        %1391 = vdwg.mxu0
        %vm1392 = vcmask 39936
        %1393 = vst.msk [vmem:[%s415] sm:$0xff] %vm1392, %v1354
        %s1394 = scalar_lea.vmem %s415, 8 [#allocation6]
        %1395 = vst.msk [vmem:[%s1394] sm:$0xff] %vm1392, %v1359
        %s1396 = scalar_lea.vmem %s415, 16 [#allocation6]
        %1397 = vst.msk [vmem:[%s1396] sm:$0xff] %vm1392, %v1364
        %s1398 = scalar_lea.vmem %s415, 24 [#allocation6]
        %1399 = vst.msk [vmem:[%s1398] sm:$0xff] %vm1392, %v1369
        %s1400 = scalar_lea.vmem %s415, 32 [#allocation6]
        %1401 = vst.msk [vmem:[%s1400] sm:$0xff] %vm1392, %v1374
        %s1402 = scalar_lea.vmem %s415, 40 [#allocation6]
        %1403 = vst.msk [vmem:[%s1402] sm:$0xff] %vm1392, %v1379
        %s1404 = scalar_lea.vmem %s415, 48 [#allocation6]
        %1405 = vst.msk [vmem:[%s1404] sm:$0xff] %vm1392, %v1384
        %s1406 = scalar_lea.vmem %s415, 56 [#allocation6]
        %1407 = vst.msk [vmem:[%s1406] sm:$0xff] %vm1392, %v1389
        %v1408 = vsel %vm460, 0.0, -10000.0
        %v1409 = vadd.f32 %v1408, %v468
        %v1410 = vsel %vm1392, %v1409, -inf
        %1411 = vmax.xlane.f32.xlu0 %v1410
        %v1412 = vpop.xlane.xlu0 %1411
        %v1413 = vsel %vm457, %v1412, 0.0
        %v1414 = vadd.f32 %v1408, %v472
        %v1415 = vsel %vm1392, %v1414, -inf
        %1416 = vmax.xlane.f32.xlu0 %v1415
        %v1417 = vpop.xlane.xlu0 %1416
        %v1418 = vsel %vm458, %v1417, %v1413
        %v1419 = vadd.f32 %v1408, %v476
        %v1420 = vsel %vm1392, %v1419, -inf
        %1421 = vmax.xlane.f32.xlu0 %v1420
        %v1422 = vpop.xlane.xlu0 %1421
        %v1423 = vsel %vm459, %v1422, %v1418
        %v1424 = vadd.f32 %v1408, %v480
        %v1425 = vsel %vm1392, %v1424, -inf
        %1426 = vmax.xlane.f32.xlu0 %v1425
        %v1427 = vpop.xlane.xlu0 %1426
        %v1428 = vsel %vm460, %v1427, %v1423
        %v1429 = vadd.f32 %v1408, %v484
        %v1430 = vsel %vm1392, %v1429, -inf
        %1431 = vmax.xlane.f32.xlu0 %v1430
        %v1432 = vpop.xlane.xlu0 %1431
        %v1433 = vsel %vm461, %v1432, %v1428
        %v1434 = vadd.f32 %v1433, %v1354
        %v1435 = vadd.f32 %v1434, %v468
        %v1436 = vsel %vm1392, %v1435, -inf
        %1437 = vmax.xlane.f32.xlu0 %v1436
        %v1438 = vpop.xlane.xlu0 %1437
        %vm1439 = vcmp.eq.f32.partialorder %v1435, %v1438
        %v1440 = vsel %vm1439, %v453, 5
        %v1441 = vsel %vm1392, %v1440, 2147483647
        %v1442 = vand.u32 %v1441, 65535
        %v1443 = vshra.s32 %v1441, 16
        %v1444 = vcvt.s32.f32 %v1442
        %v1445 = vcvt.s32.f32 %v1443
        %1446 = vmin.xlane.f32.xlu0 %v1445
        %v1447 = vpop.xlane.xlu0 %1446
        %vm1448 = vcmp.eq.f32.partialorder %v1445, %v1447
        %v1449 = vsel %vm1448, %v1444, inf
        %1450 = vmin.xlane.f32.xlu0 %v1449
        %v1451 = vpop.xlane.xlu0 %1450
        %v1452 = vcvt.f32.s32 %v1451
        %v1453 = vcvt.f32.s32 %v1447
        %v1454 = vshll.u32 %v1453, 16
        %v1455 = vadd.s32 %v1454, %v1452
        %v1456 = vsel %vm457, %v1438, 0.0
        %v1457 = vsel %vm457, %v1455, 0
        %v1458 = vadd.f32 %v1434, %v472
        %v1459 = vsel %vm1392, %v1458, -inf
        %1460 = vmax.xlane.f32.xlu0 %v1459
        %v1461 = vpop.xlane.xlu0 %1460
        %vm1462 = vcmp.eq.f32.partialorder %v1458, %v1461
        %v1463 = vsel %vm1462, %v453, 5
        %v1464 = vsel %vm1392, %v1463, 2147483647
        %v1465 = vand.u32 %v1464, 65535
        %v1466 = vshra.s32 %v1464, 16
        %v1467 = vcvt.s32.f32 %v1465
        %v1468 = vcvt.s32.f32 %v1466
        %1469 = vmin.xlane.f32.xlu0 %v1468
        %v1470 = vpop.xlane.xlu0 %1469
        %vm1471 = vcmp.eq.f32.partialorder %v1468, %v1470
        %v1472 = vsel %vm1471, %v1467, inf
        %1473 = vmin.xlane.f32.xlu0 %v1472
        %v1474 = vpop.xlane.xlu0 %1473
        %v1475 = vcvt.f32.s32 %v1474
        %v1476 = vcvt.f32.s32 %v1470
        %v1477 = vshll.u32 %v1476, 16
        %v1478 = vadd.s32 %v1477, %v1475
        %v1479 = vsel %vm458, %v1461, %v1456
        %v1480 = vsel %vm458, %v1478, %v1457
        %v1481 = vadd.f32 %v1434, %v476
        %v1482 = vsel %vm1392, %v1481, -inf
        %1483 = vmax.xlane.f32.xlu0 %v1482
        %v1484 = vpop.xlane.xlu0 %1483
        %vm1485 = vcmp.eq.f32.partialorder %v1481, %v1484
        %v1486 = vsel %vm1485, %v453, 5
        %v1487 = vsel %vm1392, %v1486, 2147483647
        %v1488 = vand.u32 %v1487, 65535
        %v1489 = vshra.s32 %v1487, 16
        %v1490 = vcvt.s32.f32 %v1488
        %v1491 = vcvt.s32.f32 %v1489
        %1492 = vmin.xlane.f32.xlu0 %v1491
        %v1493 = vpop.xlane.xlu0 %1492
        %vm1494 = vcmp.eq.f32.partialorder %v1491, %v1493
        %v1495 = vsel %vm1494, %v1490, inf
        %1496 = vmin.xlane.f32.xlu0 %v1495
        %v1497 = vpop.xlane.xlu0 %1496
        %v1498 = vcvt.f32.s32 %v1497
        %v1499 = vcvt.f32.s32 %v1493
        %v1500 = vshll.u32 %v1499, 16
        %v1501 = vadd.s32 %v1500, %v1498
        %v1502 = vsel %vm459, %v1484, %v1479
        %v1503 = vsel %vm459, %v1501, %v1480
        %v1504 = vadd.f32 %v1434, %v480
        %v1505 = vsel %vm1392, %v1504, -inf
        %1506 = vmax.xlane.f32.xlu0 %v1505
        %v1507 = vpop.xlane.xlu0 %1506
        %vm1508 = vcmp.eq.f32.partialorder %v1504, %v1507
        %v1509 = vsel %vm1508, %v453, 5
        %v1510 = vsel %vm1392, %v1509, 2147483647
        %v1511 = vand.u32 %v1510, 65535
        %v1512 = vshra.s32 %v1510, 16
        %v1513 = vcvt.s32.f32 %v1511
        %v1514 = vcvt.s32.f32 %v1512
        %1515 = vmin.xlane.f32.xlu0 %v1514
        %v1516 = vpop.xlane.xlu0 %1515
        %vm1517 = vcmp.eq.f32.partialorder %v1514, %v1516
        %v1518 = vsel %vm1517, %v1513, inf
        %1519 = vmin.xlane.f32.xlu0 %v1518
        %v1520 = vpop.xlane.xlu0 %1519
        %v1521 = vcvt.f32.s32 %v1520
        %v1522 = vcvt.f32.s32 %v1516
        %v1523 = vshll.u32 %v1522, 16
        %v1524 = vadd.s32 %v1523, %v1521
        %v1525 = vsel %vm460, %v1507, %v1502
        %v1526 = vsel %vm460, %v1524, %v1503
        %v1527 = vadd.f32 %v1434, %v484
        %v1528 = vsel %vm1392, %v1527, -inf
        %1529 = vmax.xlane.f32.xlu0 %v1528
        %v1530 = vpop.xlane.xlu0 %1529
        %vm1531 = vcmp.eq.f32.partialorder %v1527, %v1530
        %v1532 = vsel %vm1531, %v453, 5
        %v1533 = vsel %vm1392, %v1532, 2147483647
        %v1534 = vand.u32 %v1533, 65535
        %v1535 = vshra.s32 %v1533, 16
        %v1536 = vcvt.s32.f32 %v1534
        %v1537 = vcvt.s32.f32 %v1535
        %1538 = vmin.xlane.f32.xlu0 %v1537
        %v1539 = vpop.xlane.xlu0 %1538
        %vm1540 = vcmp.eq.f32.partialorder %v1537, %v1539
        %v1541 = vsel %vm1540, %v1536, inf
        %1542 = vmin.xlane.f32.xlu0 %v1541
        %v1543 = vpop.xlane.xlu0 %1542
        %v1544 = vcvt.f32.s32 %v1543
        %v1545 = vcvt.f32.s32 %v1539
        %v1546 = vshll.u32 %v1545, 16
        %v1547 = vadd.s32 %v1546, %v1544
        %v1548 = vsel %vm461, %v1530, %v1525
        %v1549 = vsel %vm461, %v1547, %v1526
        %v1550 = vadd.f32 %v1548, %v1359
        %v1551 = vadd.f32 %v1550, %v468
        %v1552 = vsel %vm1392, %v1551, -inf
        %1553 = vmax.xlane.f32.xlu0 %v1552
        %v1554 = vpop.xlane.xlu0 %1553
        %vm1555 = vcmp.eq.f32.partialorder %v1551, %v1554
        %v1556 = vsel %vm1555, %v453, 5
        %v1557 = vsel %vm1392, %v1556, 2147483647
        %v1558 = vand.u32 %v1557, 65535
        %v1559 = vshra.s32 %v1557, 16
        %v1560 = vcvt.s32.f32 %v1558
        %v1561 = vcvt.s32.f32 %v1559
        %1562 = vmin.xlane.f32.xlu0 %v1561
        %v1563 = vpop.xlane.xlu0 %1562
        %vm1564 = vcmp.eq.f32.partialorder %v1561, %v1563
        %v1565 = vsel %vm1564, %v1560, inf
        %1566 = vmin.xlane.f32.xlu0 %v1565
        %v1567 = vpop.xlane.xlu0 %1566
        %v1568 = vcvt.f32.s32 %v1567
        %v1569 = vcvt.f32.s32 %v1563
        %v1570 = vshll.u32 %v1569, 16
        %v1571 = vadd.s32 %v1570, %v1568
        %v1572 = vsel %vm457, %v1554, 0.0
        %v1573 = vsel %vm457, %v1571, 0
        %v1574 = vadd.f32 %v1550, %v472
        %v1575 = vsel %vm1392, %v1574, -inf
        %1576 = vmax.xlane.f32.xlu0 %v1575
        %v1577 = vpop.xlane.xlu0 %1576
        %vm1578 = vcmp.eq.f32.partialorder %v1574, %v1577
        %v1579 = vsel %vm1578, %v453, 5
        %v1580 = vsel %vm1392, %v1579, 2147483647
        %v1581 = vand.u32 %v1580, 65535
        %v1582 = vshra.s32 %v1580, 16
        %v1583 = vcvt.s32.f32 %v1581
        %v1584 = vcvt.s32.f32 %v1582
        %1585 = vmin.xlane.f32.xlu0 %v1584
        %v1586 = vpop.xlane.xlu0 %1585
        %vm1587 = vcmp.eq.f32.partialorder %v1584, %v1586
        %v1588 = vsel %vm1587, %v1583, inf
        %1589 = vmin.xlane.f32.xlu0 %v1588
        %v1590 = vpop.xlane.xlu0 %1589
        %v1591 = vcvt.f32.s32 %v1590
        %v1592 = vcvt.f32.s32 %v1586
        %v1593 = vshll.u32 %v1592, 16
        %v1594 = vadd.s32 %v1593, %v1591
        %v1595 = vsel %vm458, %v1577, %v1572
        %v1596 = vsel %vm458, %v1594, %v1573
        %v1597 = vadd.f32 %v1550, %v476
        %v1598 = vsel %vm1392, %v1597, -inf
        %1599 = vmax.xlane.f32.xlu0 %v1598
        %v1600 = vpop.xlane.xlu0 %1599
        %vm1601 = vcmp.eq.f32.partialorder %v1597, %v1600
        %v1602 = vsel %vm1601, %v453, 5
        %v1603 = vsel %vm1392, %v1602, 2147483647
        %v1604 = vand.u32 %v1603, 65535
        %v1605 = vshra.s32 %v1603, 16
        %v1606 = vcvt.s32.f32 %v1604
        %v1607 = vcvt.s32.f32 %v1605
        %1608 = vmin.xlane.f32.xlu0 %v1607
        %v1609 = vpop.xlane.xlu0 %1608
        %vm1610 = vcmp.eq.f32.partialorder %v1607, %v1609
        %v1611 = vsel %vm1610, %v1606, inf
        %1612 = vmin.xlane.f32.xlu0 %v1611
        %v1613 = vpop.xlane.xlu0 %1612
        %v1614 = vcvt.f32.s32 %v1613
        %v1615 = vcvt.f32.s32 %v1609
        %v1616 = vshll.u32 %v1615, 16
        %v1617 = vadd.s32 %v1616, %v1614
        %v1618 = vsel %vm459, %v1600, %v1595
        %v1619 = vsel %vm459, %v1617, %v1596
        %v1620 = vadd.f32 %v1550, %v480
        %v1621 = vsel %vm1392, %v1620, -inf
        %1622 = vmax.xlane.f32.xlu0 %v1621
        %v1623 = vpop.xlane.xlu0 %1622
        %vm1624 = vcmp.eq.f32.partialorder %v1620, %v1623
        %v1625 = vsel %vm1624, %v453, 5
        %v1626 = vsel %vm1392, %v1625, 2147483647
        %v1627 = vand.u32 %v1626, 65535
        %v1628 = vshra.s32 %v1626, 16
        %v1629 = vcvt.s32.f32 %v1627
        %v1630 = vcvt.s32.f32 %v1628
        %1631 = vmin.xlane.f32.xlu0 %v1630
        %v1632 = vpop.xlane.xlu0 %1631
        %vm1633 = vcmp.eq.f32.partialorder %v1630, %v1632
        %v1634 = vsel %vm1633, %v1629, inf
        %1635 = vmin.xlane.f32.xlu0 %v1634
        %v1636 = vpop.xlane.xlu0 %1635
        %v1637 = vcvt.f32.s32 %v1636
        %v1638 = vcvt.f32.s32 %v1632
        %v1639 = vshll.u32 %v1638, 16
        %v1640 = vadd.s32 %v1639, %v1637
        %v1641 = vsel %vm460, %v1623, %v1618
        %v1642 = vsel %vm460, %v1640, %v1619
        %v1643 = vadd.f32 %v1550, %v484
        %v1644 = vsel %vm1392, %v1643, -inf
        %1645 = vmax.xlane.f32.xlu0 %v1644
        %v1646 = vpop.xlane.xlu0 %1645
        %vm1647 = vcmp.eq.f32.partialorder %v1643, %v1646
        %v1648 = vsel %vm1647, %v453, 5
        %v1649 = vsel %vm1392, %v1648, 2147483647
        %v1650 = vand.u32 %v1649, 65535
        %v1651 = vshra.s32 %v1649, 16
        %v1652 = vcvt.s32.f32 %v1650
        %v1653 = vcvt.s32.f32 %v1651
        %1654 = vmin.xlane.f32.xlu0 %v1653
        %v1655 = vpop.xlane.xlu0 %1654
        %vm1656 = vcmp.eq.f32.partialorder %v1653, %v1655
        %v1657 = vsel %vm1656, %v1652, inf
        %1658 = vmin.xlane.f32.xlu0 %v1657
        %v1659 = vpop.xlane.xlu0 %1658
        %v1660 = vcvt.f32.s32 %v1659
        %v1661 = vcvt.f32.s32 %v1655
        %v1662 = vshll.u32 %v1661, 16
        %v1663 = vadd.s32 %v1662, %v1660
        %v1664 = vsel %vm461, %v1646, %v1641
        %v1665 = vsel %vm461, %v1663, %v1642
        %v1666 = vadd.f32 %v1664, %v1364
        %v1667 = vadd.f32 %v1666, %v468
        %v1668 = vsel %vm1392, %v1667, -inf
        %1669 = vmax.xlane.f32.xlu0 %v1668
        %v1670 = vpop.xlane.xlu0 %1669
        %vm1671 = vcmp.eq.f32.partialorder %v1667, %v1670
        %v1672 = vsel %vm1671, %v453, 5
        %v1673 = vsel %vm1392, %v1672, 2147483647
        %v1674 = vand.u32 %v1673, 65535
        %v1675 = vshra.s32 %v1673, 16
        %v1676 = vcvt.s32.f32 %v1674
        %v1677 = vcvt.s32.f32 %v1675
        %1678 = vmin.xlane.f32.xlu0 %v1677
        %v1679 = vpop.xlane.xlu0 %1678
        %vm1680 = vcmp.eq.f32.partialorder %v1677, %v1679
        %v1681 = vsel %vm1680, %v1676, inf
        %1682 = vmin.xlane.f32.xlu0 %v1681
        %v1683 = vpop.xlane.xlu0 %1682
        %v1684 = vcvt.f32.s32 %v1683
        %v1685 = vcvt.f32.s32 %v1679
        %v1686 = vshll.u32 %v1685, 16
        %v1687 = vadd.s32 %v1686, %v1684
        %v1688 = vsel %vm457, %v1670, 0.0
        %v1689 = vsel %vm457, %v1687, 0
        %v1690 = vadd.f32 %v1666, %v472
        %v1691 = vsel %vm1392, %v1690, -inf
        %1692 = vmax.xlane.f32.xlu0 %v1691
        %v1693 = vpop.xlane.xlu0 %1692
        %vm1694 = vcmp.eq.f32.partialorder %v1690, %v1693
        %v1695 = vsel %vm1694, %v453, 5
        %v1696 = vsel %vm1392, %v1695, 2147483647
        %v1697 = vand.u32 %v1696, 65535
        %v1698 = vshra.s32 %v1696, 16
        %v1699 = vcvt.s32.f32 %v1697
        %v1700 = vcvt.s32.f32 %v1698
        %1701 = vmin.xlane.f32.xlu0 %v1700
        %v1702 = vpop.xlane.xlu0 %1701
        %vm1703 = vcmp.eq.f32.partialorder %v1700, %v1702
        %v1704 = vsel %vm1703, %v1699, inf
        %1705 = vmin.xlane.f32.xlu0 %v1704
        %v1706 = vpop.xlane.xlu0 %1705
        %v1707 = vcvt.f32.s32 %v1706
        %v1708 = vcvt.f32.s32 %v1702
        %v1709 = vshll.u32 %v1708, 16
        %v1710 = vadd.s32 %v1709, %v1707
        %v1711 = vsel %vm458, %v1693, %v1688
        %v1712 = vsel %vm458, %v1710, %v1689
        %v1713 = vadd.f32 %v1666, %v476
        %v1714 = vsel %vm1392, %v1713, -inf
        %1715 = vmax.xlane.f32.xlu0 %v1714
        %v1716 = vpop.xlane.xlu0 %1715
        %vm1717 = vcmp.eq.f32.partialorder %v1713, %v1716
        %v1718 = vsel %vm1717, %v453, 5
        %v1719 = vsel %vm1392, %v1718, 2147483647
        %v1720 = vand.u32 %v1719, 65535
        %v1721 = vshra.s32 %v1719, 16
        %v1722 = vcvt.s32.f32 %v1720
        %v1723 = vcvt.s32.f32 %v1721
        %1724 = vmin.xlane.f32.xlu0 %v1723
        %v1725 = vpop.xlane.xlu0 %1724
        %vm1726 = vcmp.eq.f32.partialorder %v1723, %v1725
        %v1727 = vsel %vm1726, %v1722, inf
        %1728 = vmin.xlane.f32.xlu0 %v1727
        %v1729 = vpop.xlane.xlu0 %1728
        %v1730 = vcvt.f32.s32 %v1729
        %v1731 = vcvt.f32.s32 %v1725
        %v1732 = vshll.u32 %v1731, 16
        %v1733 = vadd.s32 %v1732, %v1730
        %v1734 = vsel %vm459, %v1716, %v1711
        %v1735 = vsel %vm459, %v1733, %v1712
        %v1736 = vadd.f32 %v1666, %v480
        %v1737 = vsel %vm1392, %v1736, -inf
        %1738 = vmax.xlane.f32.xlu0 %v1737
        %v1739 = vpop.xlane.xlu0 %1738
        %vm1740 = vcmp.eq.f32.partialorder %v1736, %v1739
        %v1741 = vsel %vm1740, %v453, 5
        %v1742 = vsel %vm1392, %v1741, 2147483647
        %v1743 = vand.u32 %v1742, 65535
        %v1744 = vshra.s32 %v1742, 16
        %v1745 = vcvt.s32.f32 %v1743
        %v1746 = vcvt.s32.f32 %v1744
        %1747 = vmin.xlane.f32.xlu0 %v1746
        %v1748 = vpop.xlane.xlu0 %1747
        %vm1749 = vcmp.eq.f32.partialorder %v1746, %v1748
        %v1750 = vsel %vm1749, %v1745, inf
        %1751 = vmin.xlane.f32.xlu0 %v1750
        %v1752 = vpop.xlane.xlu0 %1751
        %v1753 = vcvt.f32.s32 %v1752
        %v1754 = vcvt.f32.s32 %v1748
        %v1755 = vshll.u32 %v1754, 16
        %v1756 = vadd.s32 %v1755, %v1753
        %v1757 = vsel %vm460, %v1739, %v1734
        %v1758 = vsel %vm460, %v1756, %v1735
        %v1759 = vadd.f32 %v1666, %v484
        %v1760 = vsel %vm1392, %v1759, -inf
        %1761 = vmax.xlane.f32.xlu0 %v1760
        %v1762 = vpop.xlane.xlu0 %1761
        %vm1763 = vcmp.eq.f32.partialorder %v1759, %v1762
        %v1764 = vsel %vm1763, %v453, 5
        %v1765 = vsel %vm1392, %v1764, 2147483647
        %v1766 = vand.u32 %v1765, 65535
        %v1767 = vshra.s32 %v1765, 16
        %v1768 = vcvt.s32.f32 %v1766
        %v1769 = vcvt.s32.f32 %v1767
        %1770 = vmin.xlane.f32.xlu0 %v1769
        %v1771 = vpop.xlane.xlu0 %1770
        %vm1772 = vcmp.eq.f32.partialorder %v1769, %v1771
        %v1773 = vsel %vm1772, %v1768, inf
        %1774 = vmin.xlane.f32.xlu0 %v1773
        %v1775 = vpop.xlane.xlu0 %1774
        %v1776 = vcvt.f32.s32 %v1775
        %v1777 = vcvt.f32.s32 %v1771
        %v1778 = vshll.u32 %v1777, 16
        %v1779 = vadd.s32 %v1778, %v1776
        %v1780 = vsel %vm461, %v1762, %v1757
        %v1781 = vsel %vm461, %v1779, %v1758
        %v1782 = vadd.f32 %v1780, %v1369
        %v1783 = vadd.f32 %v1782, %v468
        %v1784 = vsel %vm1392, %v1783, -inf
        %1785 = vmax.xlane.f32.xlu0 %v1784
        %v1786 = vpop.xlane.xlu0 %1785
        %vm1787 = vcmp.eq.f32.partialorder %v1783, %v1786
        %v1788 = vsel %vm1787, %v453, 5
        %v1789 = vsel %vm1392, %v1788, 2147483647
        %v1790 = vand.u32 %v1789, 65535
        %v1791 = vshra.s32 %v1789, 16
        %v1792 = vcvt.s32.f32 %v1790
        %v1793 = vcvt.s32.f32 %v1791
        %1794 = vmin.xlane.f32.xlu0 %v1793
        %v1795 = vpop.xlane.xlu0 %1794
        %vm1796 = vcmp.eq.f32.partialorder %v1793, %v1795
        %v1797 = vsel %vm1796, %v1792, inf
        %1798 = vmin.xlane.f32.xlu0 %v1797
        %v1799 = vpop.xlane.xlu0 %1798
        %v1800 = vcvt.f32.s32 %v1799
        %v1801 = vcvt.f32.s32 %v1795
        %v1802 = vshll.u32 %v1801, 16
        %v1803 = vadd.s32 %v1802, %v1800
        %v1804 = vsel %vm457, %v1786, 0.0
        %v1805 = vsel %vm457, %v1803, 0
        %v1806 = vadd.f32 %v1782, %v472
        %v1807 = vsel %vm1392, %v1806, -inf
        %1808 = vmax.xlane.f32.xlu0 %v1807
        %v1809 = vpop.xlane.xlu0 %1808
        %vm1810 = vcmp.eq.f32.partialorder %v1806, %v1809
        %v1811 = vsel %vm1810, %v453, 5
        %v1812 = vsel %vm1392, %v1811, 2147483647
        %v1813 = vand.u32 %v1812, 65535
        %v1814 = vshra.s32 %v1812, 16
        %v1815 = vcvt.s32.f32 %v1813
        %v1816 = vcvt.s32.f32 %v1814
        %1817 = vmin.xlane.f32.xlu0 %v1816
        %v1818 = vpop.xlane.xlu0 %1817
        %vm1819 = vcmp.eq.f32.partialorder %v1816, %v1818
        %v1820 = vsel %vm1819, %v1815, inf
        %1821 = vmin.xlane.f32.xlu0 %v1820
        %v1822 = vpop.xlane.xlu0 %1821
        %v1823 = vcvt.f32.s32 %v1822
        %v1824 = vcvt.f32.s32 %v1818
        %v1825 = vshll.u32 %v1824, 16
        %v1826 = vadd.s32 %v1825, %v1823
        %v1827 = vsel %vm458, %v1809, %v1804
        %v1828 = vsel %vm458, %v1826, %v1805
        %v1829 = vadd.f32 %v1782, %v476
        %v1830 = vsel %vm1392, %v1829, -inf
        %1831 = vmax.xlane.f32.xlu0 %v1830
        %v1832 = vpop.xlane.xlu0 %1831
        %vm1833 = vcmp.eq.f32.partialorder %v1829, %v1832
        %v1834 = vsel %vm1833, %v453, 5
        %v1835 = vsel %vm1392, %v1834, 2147483647
        %v1836 = vand.u32 %v1835, 65535
        %v1837 = vshra.s32 %v1835, 16
        %v1838 = vcvt.s32.f32 %v1836
        %v1839 = vcvt.s32.f32 %v1837
        %1840 = vmin.xlane.f32.xlu0 %v1839
        %v1841 = vpop.xlane.xlu0 %1840
        %vm1842 = vcmp.eq.f32.partialorder %v1839, %v1841
        %v1843 = vsel %vm1842, %v1838, inf
        %1844 = vmin.xlane.f32.xlu0 %v1843
        %v1845 = vpop.xlane.xlu0 %1844
        %v1846 = vcvt.f32.s32 %v1845
        %v1847 = vcvt.f32.s32 %v1841
        %v1848 = vshll.u32 %v1847, 16
        %v1849 = vadd.s32 %v1848, %v1846
        %v1850 = vsel %vm459, %v1832, %v1827
        %v1851 = vsel %vm459, %v1849, %v1828
        %v1852 = vadd.f32 %v1782, %v480
        %v1853 = vsel %vm1392, %v1852, -inf
        %1854 = vmax.xlane.f32.xlu0 %v1853
        %v1855 = vpop.xlane.xlu0 %1854
        %vm1856 = vcmp.eq.f32.partialorder %v1852, %v1855
        %v1857 = vsel %vm1856, %v453, 5
        %v1858 = vsel %vm1392, %v1857, 2147483647
        %v1859 = vand.u32 %v1858, 65535
        %v1860 = vshra.s32 %v1858, 16
        %v1861 = vcvt.s32.f32 %v1859
        %v1862 = vcvt.s32.f32 %v1860
        %1863 = vmin.xlane.f32.xlu0 %v1862
        %v1864 = vpop.xlane.xlu0 %1863
        %vm1865 = vcmp.eq.f32.partialorder %v1862, %v1864
        %v1866 = vsel %vm1865, %v1861, inf
        %1867 = vmin.xlane.f32.xlu0 %v1866
        %v1868 = vpop.xlane.xlu0 %1867
        %v1869 = vcvt.f32.s32 %v1868
        %v1870 = vcvt.f32.s32 %v1864
        %v1871 = vshll.u32 %v1870, 16
        %v1872 = vadd.s32 %v1871, %v1869
        %v1873 = vsel %vm460, %v1855, %v1850
        %v1874 = vsel %vm460, %v1872, %v1851
        %v1875 = vadd.f32 %v1782, %v484
        %v1876 = vsel %vm1392, %v1875, -inf
        %1877 = vmax.xlane.f32.xlu0 %v1876
        %v1878 = vpop.xlane.xlu0 %1877
        %vm1879 = vcmp.eq.f32.partialorder %v1875, %v1878
        %v1880 = vsel %vm1879, %v453, 5
        %v1881 = vsel %vm1392, %v1880, 2147483647
        %v1882 = vand.u32 %v1881, 65535
        %v1883 = vshra.s32 %v1881, 16
        %v1884 = vcvt.s32.f32 %v1882
        %v1885 = vcvt.s32.f32 %v1883
        %1886 = vmin.xlane.f32.xlu0 %v1885
        %v1887 = vpop.xlane.xlu0 %1886
        %vm1888 = vcmp.eq.f32.partialorder %v1885, %v1887
        %v1889 = vsel %vm1888, %v1884, inf
        %1890 = vmin.xlane.f32.xlu0 %v1889
        %v1891 = vpop.xlane.xlu0 %1890
        %v1892 = vcvt.f32.s32 %v1891
        %v1893 = vcvt.f32.s32 %v1887
        %v1894 = vshll.u32 %v1893, 16
        %v1895 = vadd.s32 %v1894, %v1892
        %v1896 = vsel %vm461, %v1878, %v1873
        %v1897 = vsel %vm461, %v1895, %v1874
        %v1898 = vadd.f32 %v1896, %v1374
        %v1899 = vadd.f32 %v1898, %v468
        %v1900 = vsel %vm1392, %v1899, -inf
        %1901 = vmax.xlane.f32.xlu0 %v1900
        %v1902 = vpop.xlane.xlu0 %1901
        %vm1903 = vcmp.eq.f32.partialorder %v1899, %v1902
        %v1904 = vsel %vm1903, %v453, 5
        %v1905 = vsel %vm1392, %v1904, 2147483647
        %v1906 = vand.u32 %v1905, 65535
        %v1907 = vshra.s32 %v1905, 16
        %v1908 = vcvt.s32.f32 %v1906
        %v1909 = vcvt.s32.f32 %v1907
        %1910 = vmin.xlane.f32.xlu0 %v1909
        %v1911 = vpop.xlane.xlu0 %1910
        %vm1912 = vcmp.eq.f32.partialorder %v1909, %v1911
        %v1913 = vsel %vm1912, %v1908, inf
        %1914 = vmin.xlane.f32.xlu0 %v1913
        %v1915 = vpop.xlane.xlu0 %1914
        %v1916 = vcvt.f32.s32 %v1915
        %v1917 = vcvt.f32.s32 %v1911
        %v1918 = vshll.u32 %v1917, 16
        %v1919 = vadd.s32 %v1918, %v1916
        %v1920 = vsel %vm457, %v1902, 0.0
        %v1921 = vsel %vm457, %v1919, 0
        %v1922 = vadd.f32 %v1898, %v472
        %v1923 = vsel %vm1392, %v1922, -inf
        %1924 = vmax.xlane.f32.xlu0 %v1923
        %v1925 = vpop.xlane.xlu0 %1924
        %vm1926 = vcmp.eq.f32.partialorder %v1922, %v1925
        %v1927 = vsel %vm1926, %v453, 5
        %v1928 = vsel %vm1392, %v1927, 2147483647
        %v1929 = vand.u32 %v1928, 65535
        %v1930 = vshra.s32 %v1928, 16
        %v1931 = vcvt.s32.f32 %v1929
        %v1932 = vcvt.s32.f32 %v1930
        %1933 = vmin.xlane.f32.xlu0 %v1932
        %v1934 = vpop.xlane.xlu0 %1933
        %vm1935 = vcmp.eq.f32.partialorder %v1932, %v1934
        %v1936 = vsel %vm1935, %v1931, inf
        %1937 = vmin.xlane.f32.xlu0 %v1936
        %v1938 = vpop.xlane.xlu0 %1937
        %v1939 = vcvt.f32.s32 %v1938
        %v1940 = vcvt.f32.s32 %v1934
        %v1941 = vshll.u32 %v1940, 16
        %v1942 = vadd.s32 %v1941, %v1939
        %v1943 = vsel %vm458, %v1925, %v1920
        %v1944 = vsel %vm458, %v1942, %v1921
        %v1945 = vadd.f32 %v1898, %v476
        %v1946 = vsel %vm1392, %v1945, -inf
        %1947 = vmax.xlane.f32.xlu0 %v1946
        %v1948 = vpop.xlane.xlu0 %1947
        %vm1949 = vcmp.eq.f32.partialorder %v1945, %v1948
        %v1950 = vsel %vm1949, %v453, 5
        %v1951 = vsel %vm1392, %v1950, 2147483647
        %v1952 = vand.u32 %v1951, 65535
        %v1953 = vshra.s32 %v1951, 16
        %v1954 = vcvt.s32.f32 %v1952
        %v1955 = vcvt.s32.f32 %v1953
        %1956 = vmin.xlane.f32.xlu0 %v1955
        %v1957 = vpop.xlane.xlu0 %1956
        %vm1958 = vcmp.eq.f32.partialorder %v1955, %v1957
        %v1959 = vsel %vm1958, %v1954, inf
        %1960 = vmin.xlane.f32.xlu0 %v1959
        %v1961 = vpop.xlane.xlu0 %1960
        %v1962 = vcvt.f32.s32 %v1961
        %v1963 = vcvt.f32.s32 %v1957
        %v1964 = vshll.u32 %v1963, 16
        %v1965 = vadd.s32 %v1964, %v1962
        %v1966 = vsel %vm459, %v1948, %v1943
        %v1967 = vsel %vm459, %v1965, %v1944
        %v1968 = vadd.f32 %v1898, %v480
        %v1969 = vsel %vm1392, %v1968, -inf
        %1970 = vmax.xlane.f32.xlu0 %v1969
        %v1971 = vpop.xlane.xlu0 %1970
        %vm1972 = vcmp.eq.f32.partialorder %v1968, %v1971
        %v1973 = vsel %vm1972, %v453, 5
        %v1974 = vsel %vm1392, %v1973, 2147483647
        %v1975 = vand.u32 %v1974, 65535
        %v1976 = vshra.s32 %v1974, 16
        %v1977 = vcvt.s32.f32 %v1975
        %v1978 = vcvt.s32.f32 %v1976
        %1979 = vmin.xlane.f32.xlu0 %v1978
        %v1980 = vpop.xlane.xlu0 %1979
        %vm1981 = vcmp.eq.f32.partialorder %v1978, %v1980
        %v1982 = vsel %vm1981, %v1977, inf
        %1983 = vmin.xlane.f32.xlu0 %v1982
        %v1984 = vpop.xlane.xlu0 %1983
        %v1985 = vcvt.f32.s32 %v1984
        %v1986 = vcvt.f32.s32 %v1980
        %v1987 = vshll.u32 %v1986, 16
        %v1988 = vadd.s32 %v1987, %v1985
        %v1989 = vsel %vm460, %v1971, %v1966
        %v1990 = vsel %vm460, %v1988, %v1967
        %v1991 = vadd.f32 %v1898, %v484
        %v1992 = vsel %vm1392, %v1991, -inf
        %1993 = vmax.xlane.f32.xlu0 %v1992
        %v1994 = vpop.xlane.xlu0 %1993
        %vm1995 = vcmp.eq.f32.partialorder %v1991, %v1994
        %v1996 = vsel %vm1995, %v453, 5
        %v1997 = vsel %vm1392, %v1996, 2147483647
        %v1998 = vand.u32 %v1997, 65535
        %v1999 = vshra.s32 %v1997, 16
        %v2000 = vcvt.s32.f32 %v1998
        %v2001 = vcvt.s32.f32 %v1999
        %2002 = vmin.xlane.f32.xlu0 %v2001
        %v2003 = vpop.xlane.xlu0 %2002
        %vm2004 = vcmp.eq.f32.partialorder %v2001, %v2003
        %v2005 = vsel %vm2004, %v2000, inf
        %2006 = vmin.xlane.f32.xlu0 %v2005
        %v2007 = vpop.xlane.xlu0 %2006
        %v2008 = vcvt.f32.s32 %v2007
        %v2009 = vcvt.f32.s32 %v2003
        %v2010 = vshll.u32 %v2009, 16
        %v2011 = vadd.s32 %v2010, %v2008
        %v2012 = vsel %vm461, %v1994, %v1989
        %v2013 = vsel %vm461, %v2011, %v1990
        %v2014 = vadd.f32 %v2012, %v1379
        %v2015 = vadd.f32 %v2014, %v468
        %v2016 = vsel %vm1392, %v2015, -inf
        %2017 = vmax.xlane.f32.xlu0 %v2016
        %v2018 = vpop.xlane.xlu0 %2017
        %vm2019 = vcmp.eq.f32.partialorder %v2015, %v2018
        %v2020 = vsel %vm2019, %v453, 5
        %v2021 = vsel %vm1392, %v2020, 2147483647
        %v2022 = vand.u32 %v2021, 65535
        %v2023 = vshra.s32 %v2021, 16
        %v2024 = vcvt.s32.f32 %v2022
        %v2025 = vcvt.s32.f32 %v2023
        %2026 = vmin.xlane.f32.xlu0 %v2025
        %v2027 = vpop.xlane.xlu0 %2026
        %vm2028 = vcmp.eq.f32.partialorder %v2025, %v2027
        %v2029 = vsel %vm2028, %v2024, inf
        %2030 = vmin.xlane.f32.xlu0 %v2029
        %v2031 = vpop.xlane.xlu0 %2030
        %v2032 = vcvt.f32.s32 %v2031
        %v2033 = vcvt.f32.s32 %v2027
        %v2034 = vshll.u32 %v2033, 16
        %v2035 = vadd.s32 %v2034, %v2032
        %v2036 = vsel %vm457, %v2018, 0.0
        %v2037 = vsel %vm457, %v2035, 0
        %v2038 = vadd.f32 %v2014, %v472
        %v2039 = vsel %vm1392, %v2038, -inf
        %2040 = vmax.xlane.f32.xlu0 %v2039
        %v2041 = vpop.xlane.xlu0 %2040
        %vm2042 = vcmp.eq.f32.partialorder %v2038, %v2041
        %v2043 = vsel %vm2042, %v453, 5
        %v2044 = vsel %vm1392, %v2043, 2147483647
        %v2045 = vand.u32 %v2044, 65535
        %v2046 = vshra.s32 %v2044, 16
        %v2047 = vcvt.s32.f32 %v2045
        %v2048 = vcvt.s32.f32 %v2046
        %2049 = vmin.xlane.f32.xlu0 %v2048
        %v2050 = vpop.xlane.xlu0 %2049
        %vm2051 = vcmp.eq.f32.partialorder %v2048, %v2050
        %v2052 = vsel %vm2051, %v2047, inf
        %2053 = vmin.xlane.f32.xlu0 %v2052
        %v2054 = vpop.xlane.xlu0 %2053
        %v2055 = vcvt.f32.s32 %v2054
        %v2056 = vcvt.f32.s32 %v2050
        %v2057 = vshll.u32 %v2056, 16
        %v2058 = vadd.s32 %v2057, %v2055
        %v2059 = vsel %vm458, %v2041, %v2036
        %v2060 = vsel %vm458, %v2058, %v2037
        %v2061 = vadd.f32 %v2014, %v476
        %v2062 = vsel %vm1392, %v2061, -inf
        %2063 = vmax.xlane.f32.xlu0 %v2062
        %v2064 = vpop.xlane.xlu0 %2063
        %vm2065 = vcmp.eq.f32.partialorder %v2061, %v2064
        %v2066 = vsel %vm2065, %v453, 5
        %v2067 = vsel %vm1392, %v2066, 2147483647
        %v2068 = vand.u32 %v2067, 65535
        %v2069 = vshra.s32 %v2067, 16
        %v2070 = vcvt.s32.f32 %v2068
        %v2071 = vcvt.s32.f32 %v2069
        %2072 = vmin.xlane.f32.xlu0 %v2071
        %v2073 = vpop.xlane.xlu0 %2072
        %vm2074 = vcmp.eq.f32.partialorder %v2071, %v2073
        %v2075 = vsel %vm2074, %v2070, inf
        %2076 = vmin.xlane.f32.xlu0 %v2075
        %v2077 = vpop.xlane.xlu0 %2076
        %v2078 = vcvt.f32.s32 %v2077
        %v2079 = vcvt.f32.s32 %v2073
        %v2080 = vshll.u32 %v2079, 16
        %v2081 = vadd.s32 %v2080, %v2078
        %v2082 = vsel %vm459, %v2064, %v2059
        %v2083 = vsel %vm459, %v2081, %v2060
        %v2084 = vadd.f32 %v2014, %v480
        %v2085 = vsel %vm1392, %v2084, -inf
        %2086 = vmax.xlane.f32.xlu0 %v2085
        %v2087 = vpop.xlane.xlu0 %2086
        %vm2088 = vcmp.eq.f32.partialorder %v2084, %v2087
        %v2089 = vsel %vm2088, %v453, 5
        %v2090 = vsel %vm1392, %v2089, 2147483647
        %v2091 = vand.u32 %v2090, 65535
        %v2092 = vshra.s32 %v2090, 16
        %v2093 = vcvt.s32.f32 %v2091
        %v2094 = vcvt.s32.f32 %v2092
        %2095 = vmin.xlane.f32.xlu0 %v2094
        %v2096 = vpop.xlane.xlu0 %2095
        %vm2097 = vcmp.eq.f32.partialorder %v2094, %v2096
        %v2098 = vsel %vm2097, %v2093, inf
        %2099 = vmin.xlane.f32.xlu0 %v2098
        %v2100 = vpop.xlane.xlu0 %2099
        %v2101 = vcvt.f32.s32 %v2100
        %v2102 = vcvt.f32.s32 %v2096
        %v2103 = vshll.u32 %v2102, 16
        %v2104 = vadd.s32 %v2103, %v2101
        %v2105 = vsel %vm460, %v2087, %v2082
        %v2106 = vsel %vm460, %v2104, %v2083
        %v2107 = vadd.f32 %v2014, %v484
        %v2108 = vsel %vm1392, %v2107, -inf
        %2109 = vmax.xlane.f32.xlu0 %v2108
        %v2110 = vpop.xlane.xlu0 %2109
        %vm2111 = vcmp.eq.f32.partialorder %v2107, %v2110
        %v2112 = vsel %vm2111, %v453, 5
        %v2113 = vsel %vm1392, %v2112, 2147483647
        %v2114 = vand.u32 %v2113, 65535
        %v2115 = vshra.s32 %v2113, 16
        %v2116 = vcvt.s32.f32 %v2114
        %v2117 = vcvt.s32.f32 %v2115
        %2118 = vmin.xlane.f32.xlu0 %v2117
        %v2119 = vpop.xlane.xlu0 %2118
        %vm2120 = vcmp.eq.f32.partialorder %v2117, %v2119
        %v2121 = vsel %vm2120, %v2116, inf
        %2122 = vmin.xlane.f32.xlu0 %v2121
        %v2123 = vpop.xlane.xlu0 %2122
        %v2124 = vcvt.f32.s32 %v2123
        %v2125 = vcvt.f32.s32 %v2119
        %v2126 = vshll.u32 %v2125, 16
        %v2127 = vadd.s32 %v2126, %v2124
        %v2128 = vsel %vm461, %v2110, %v2105
        %v2129 = vsel %vm461, %v2127, %v2106
        %v2130 = vadd.f32 %v2128, %v1384
        %v2131 = vadd.f32 %v2130, %v468
        %v2132 = vsel %vm1392, %v2131, -inf
        %2133 = vmax.xlane.f32.xlu0 %v2132
        %v2134 = vpop.xlane.xlu0 %2133
        %vm2135 = vcmp.eq.f32.partialorder %v2131, %v2134
        %v2136 = vsel %vm2135, %v453, 5
        %v2137 = vsel %vm1392, %v2136, 2147483647
        %v2138 = vand.u32 %v2137, 65535
        %v2139 = vshra.s32 %v2137, 16
        %v2140 = vcvt.s32.f32 %v2138
        %v2141 = vcvt.s32.f32 %v2139
        %2142 = vmin.xlane.f32.xlu0 %v2141
        %v2143 = vpop.xlane.xlu0 %2142
        %vm2144 = vcmp.eq.f32.partialorder %v2141, %v2143
        %v2145 = vsel %vm2144, %v2140, inf
        %2146 = vmin.xlane.f32.xlu0 %v2145
        %v2147 = vpop.xlane.xlu0 %2146
        %v2148 = vcvt.f32.s32 %v2147
        %v2149 = vcvt.f32.s32 %v2143
        %v2150 = vshll.u32 %v2149, 16
        %v2151 = vadd.s32 %v2150, %v2148
        %v2152 = vsel %vm457, %v2134, 0.0
        %v2153 = vsel %vm457, %v2151, 0
        %v2154 = vadd.f32 %v2130, %v472
        %v2155 = vsel %vm1392, %v2154, -inf
        %2156 = vmax.xlane.f32.xlu0 %v2155
        %v2157 = vpop.xlane.xlu0 %2156
        %vm2158 = vcmp.eq.f32.partialorder %v2154, %v2157
        %v2159 = vsel %vm2158, %v453, 5
        %v2160 = vsel %vm1392, %v2159, 2147483647
        %v2161 = vand.u32 %v2160, 65535
        %v2162 = vshra.s32 %v2160, 16
        %v2163 = vcvt.s32.f32 %v2161
        %v2164 = vcvt.s32.f32 %v2162
        %2165 = vmin.xlane.f32.xlu0 %v2164
        %v2166 = vpop.xlane.xlu0 %2165
        %vm2167 = vcmp.eq.f32.partialorder %v2164, %v2166
        %v2168 = vsel %vm2167, %v2163, inf
        %2169 = vmin.xlane.f32.xlu0 %v2168
        %v2170 = vpop.xlane.xlu0 %2169
        %v2171 = vcvt.f32.s32 %v2170
        %v2172 = vcvt.f32.s32 %v2166
        %v2173 = vshll.u32 %v2172, 16
        %v2174 = vadd.s32 %v2173, %v2171
        %v2175 = vsel %vm458, %v2157, %v2152
        %v2176 = vsel %vm458, %v2174, %v2153
        %v2177 = vadd.f32 %v2130, %v476
        %v2178 = vsel %vm1392, %v2177, -inf
        %2179 = vmax.xlane.f32.xlu0 %v2178
        %v2180 = vpop.xlane.xlu0 %2179
        %vm2181 = vcmp.eq.f32.partialorder %v2177, %v2180
        %v2182 = vsel %vm2181, %v453, 5
        %v2183 = vsel %vm1392, %v2182, 2147483647
        %v2184 = vand.u32 %v2183, 65535
        %v2185 = vshra.s32 %v2183, 16
        %v2186 = vcvt.s32.f32 %v2184
        %v2187 = vcvt.s32.f32 %v2185
        %2188 = vmin.xlane.f32.xlu0 %v2187
        %v2189 = vpop.xlane.xlu0 %2188
        %vm2190 = vcmp.eq.f32.partialorder %v2187, %v2189
        %v2191 = vsel %vm2190, %v2186, inf
        %2192 = vmin.xlane.f32.xlu0 %v2191
        %v2193 = vpop.xlane.xlu0 %2192
        %v2194 = vcvt.f32.s32 %v2193
        %v2195 = vcvt.f32.s32 %v2189
        %v2196 = vshll.u32 %v2195, 16
        %v2197 = vadd.s32 %v2196, %v2194
        %v2198 = vsel %vm459, %v2180, %v2175
        %v2199 = vsel %vm459, %v2197, %v2176
        %v2200 = vadd.f32 %v2130, %v480
        %v2201 = vsel %vm1392, %v2200, -inf
        %2202 = vmax.xlane.f32.xlu0 %v2201
        %v2203 = vpop.xlane.xlu0 %2202
        %vm2204 = vcmp.eq.f32.partialorder %v2200, %v2203
        %v2205 = vsel %vm2204, %v453, 5
        %v2206 = vsel %vm1392, %v2205, 2147483647
        %v2207 = vand.u32 %v2206, 65535
        %v2208 = vshra.s32 %v2206, 16
        %v2209 = vcvt.s32.f32 %v2207
        %v2210 = vcvt.s32.f32 %v2208
        %2211 = vmin.xlane.f32.xlu0 %v2210
        %v2212 = vpop.xlane.xlu0 %2211
        %vm2213 = vcmp.eq.f32.partialorder %v2210, %v2212
        %v2214 = vsel %vm2213, %v2209, inf
        %2215 = vmin.xlane.f32.xlu0 %v2214
        %v2216 = vpop.xlane.xlu0 %2215
        %v2217 = vcvt.f32.s32 %v2216
        %v2218 = vcvt.f32.s32 %v2212
        %v2219 = vshll.u32 %v2218, 16
        %v2220 = vadd.s32 %v2219, %v2217
        %v2221 = vsel %vm460, %v2203, %v2198
        %v2222 = vsel %vm460, %v2220, %v2199
        %v2223 = vadd.f32 %v2130, %v484
        %v2224 = vsel %vm1392, %v2223, -inf
        %2225 = vmax.xlane.f32.xlu0 %v2224
        %v2226 = vpop.xlane.xlu0 %2225
        %vm2227 = vcmp.eq.f32.partialorder %v2223, %v2226
        %v2228 = vsel %vm2227, %v453, 5
        %v2229 = vsel %vm1392, %v2228, 2147483647
        %v2230 = vand.u32 %v2229, 65535
        %v2231 = vshra.s32 %v2229, 16
        %v2232 = vcvt.s32.f32 %v2230
        %v2233 = vcvt.s32.f32 %v2231
        %2234 = vmin.xlane.f32.xlu0 %v2233
        %v2235 = vpop.xlane.xlu0 %2234
        %vm2236 = vcmp.eq.f32.partialorder %v2233, %v2235
        %v2237 = vsel %vm2236, %v2232, inf
        %2238 = vmin.xlane.f32.xlu0 %v2237
        %v2239 = vpop.xlane.xlu0 %2238
        %v2240 = vcvt.f32.s32 %v2239
        %v2241 = vcvt.f32.s32 %v2235
        %v2242 = vshll.u32 %v2241, 16
        %v2243 = vadd.s32 %v2242, %v2240
        %v2244 = vsel %vm461, %v2226, %v2221
        %v2245 = vsel %vm461, %v2243, %v2222
        %v2246 = vadd.f32 %v2244, %v1389
        %v2248 = vlaneseq
        %v2249 = vshrl.u32 %v2248, 7
        %v2250 = vsub.s32 0, %v2249
        %v2251 = vrot.slane %v451, %v2250
        %v2253 = vadd.f32 %v2246, %v2251
        %v2254 = vsel %vm1392, %v2253, -inf
        %2255 = vmax.xlane.f32.xlu0 %v2254
        %v2256 = vpop.xlane.xlu0 %2255
        %vm2257 = vcmp.eq.f32.partialorder %v2253, %v2256
        %v2258 = vsel %vm2257, %v453, 5
        %v2259 = vsel %vm1392, %v2258, 2147483647
        %v2260 = vand.u32 %v2259, 65535
        %v2261 = vshra.s32 %v2259, 16
        %v2262 = vcvt.s32.f32 %v2260
        %v2263 = vcvt.s32.f32 %v2261
        %2264 = vmin.xlane.f32.xlu0 %v2263
        %v2265 = vpop.xlane.xlu0 %2264
        %vm2266 = vcmp.eq.f32.partialorder %v2263, %v2265
        %v2267 = vsel %vm2266, %v2262, inf
        %2268 = vmin.xlane.f32.xlu0 %v2267
        %v2269 = vpop.xlane.xlu0 %2268
        %v2270 = vcvt.f32.s32 %v2269
        %v2271 = vcvt.f32.s32 %v2265
        %v2272 = vshll.u32 %v2271, 16
        %v2273 = vadd.s32 %v2272, %v2270
        %vm2274 = vcmask 7168
        %2275 = vst.msk [vmem:[%s431] sm:$0xff] %vm2274, %v2256
        %v2276 = vsel %vm464, %v2273, 0
        %vm2277 = vcmp.eq.s32.totalorder %v453, %v2273
        %v2278 = vsel %vm2277, %v2245, 0
        %v2279 = vsel %vm1392, %v2278, 0
        %v2280 = vand.u32 %v2279, 65535
        %v2281 = vshrl.u32 %v2279, 16
        %v2282 = vcvt.s32.f32 %v2280
        %v2283 = vcvt.s32.f32 %v2281
        %2284 = vadd.xlane.f32.xlu0 %v2282
        %v2285 = vpop.xlane.xlu0 %2284
        %2286 = vadd.xlane.f32.xlu0 %v2283
        %v2287 = vpop.xlane.xlu0 %2286
        %v2288 = vcvt.f32.s32 %v2285
        %v2289 = vcvt.f32.s32 %v2287
        %v2290 = vshll.u32 %v2289, 16
        %v2291 = vadd.s32 %v2290, %v2288
        %v2292 = vsel %vm463, %v2291, %v2276
        %vm2293 = vcmp.eq.s32.totalorder %v453, %v2291
        %v2294 = vsel %vm2293, %v2129, 0
        %v2295 = vsel %vm1392, %v2294, 0
        %v2296 = vand.u32 %v2295, 65535
        %v2297 = vshrl.u32 %v2295, 16
        %v2298 = vcvt.s32.f32 %v2296
        %v2299 = vcvt.s32.f32 %v2297
        %2300 = vadd.xlane.f32.xlu0 %v2298
        %v2301 = vpop.xlane.xlu0 %2300
        %2302 = vadd.xlane.f32.xlu0 %v2299
        %v2303 = vpop.xlane.xlu0 %2302
        %v2304 = vcvt.f32.s32 %v2301
        %v2305 = vcvt.f32.s32 %v2303
        %v2306 = vshll.u32 %v2305, 16
        %v2307 = vadd.s32 %v2306, %v2304
        %v2308 = vsel %vm462, %v2307, %v2292
        %vm2309 = vcmp.eq.s32.totalorder %v453, %v2307
        %v2310 = vsel %vm2309, %v2013, 0
        %v2311 = vsel %vm1392, %v2310, 0
        %v2312 = vand.u32 %v2311, 65535
        %v2313 = vshrl.u32 %v2311, 16
        %v2314 = vcvt.s32.f32 %v2312
        %v2315 = vcvt.s32.f32 %v2313
        %2316 = vadd.xlane.f32.xlu0 %v2314
        %v2317 = vpop.xlane.xlu0 %2316
        %2318 = vadd.xlane.f32.xlu0 %v2315
        %v2319 = vpop.xlane.xlu0 %2318
        %v2320 = vcvt.f32.s32 %v2317
        %v2321 = vcvt.f32.s32 %v2319
        %v2322 = vshll.u32 %v2321, 16
        %v2323 = vadd.s32 %v2322, %v2320
        %v2324 = vsel %vm461, %v2323, %v2308
        %vm2325 = vcmp.eq.s32.totalorder %v453, %v2323
        %v2326 = vsel %vm2325, %v1897, 0
        %v2327 = vsel %vm1392, %v2326, 0
        %v2328 = vand.u32 %v2327, 65535
        %v2329 = vshrl.u32 %v2327, 16
        %v2330 = vcvt.s32.f32 %v2328
        %v2331 = vcvt.s32.f32 %v2329
        %2332 = vadd.xlane.f32.xlu0 %v2330
        %v2333 = vpop.xlane.xlu0 %2332
        %2334 = vadd.xlane.f32.xlu0 %v2331
        %v2335 = vpop.xlane.xlu0 %2334
        %v2336 = vcvt.f32.s32 %v2333
        %v2337 = vcvt.f32.s32 %v2335
        %v2338 = vshll.u32 %v2337, 16
        %v2339 = vadd.s32 %v2338, %v2336
        %v2340 = vsel %vm460, %v2339, %v2324
        %vm2341 = vcmp.eq.s32.totalorder %v453, %v2339
        %v2342 = vsel %vm2341, %v1781, 0
        %v2343 = vsel %vm1392, %v2342, 0
        %v2344 = vand.u32 %v2343, 65535
        %v2345 = vshrl.u32 %v2343, 16
        %v2346 = vcvt.s32.f32 %v2344
        %v2347 = vcvt.s32.f32 %v2345
        %2348 = vadd.xlane.f32.xlu0 %v2346
        %v2349 = vpop.xlane.xlu0 %2348
        %2350 = vadd.xlane.f32.xlu0 %v2347
        %v2351 = vpop.xlane.xlu0 %2350
        %v2352 = vcvt.f32.s32 %v2349
        %v2353 = vcvt.f32.s32 %v2351
        %v2354 = vshll.u32 %v2353, 16
        %v2355 = vadd.s32 %v2354, %v2352
        %v2356 = vsel %vm459, %v2355, %v2340
        %vm2357 = vcmp.eq.s32.totalorder %v453, %v2355
        %v2358 = vsel %vm2357, %v1665, 0
        %v2359 = vsel %vm1392, %v2358, 0
        %v2360 = vand.u32 %v2359, 65535
        %v2361 = vshrl.u32 %v2359, 16
        %v2362 = vcvt.s32.f32 %v2360
        %v2363 = vcvt.s32.f32 %v2361
        %2364 = vadd.xlane.f32.xlu0 %v2362
        %v2365 = vpop.xlane.xlu0 %2364
        %2366 = vadd.xlane.f32.xlu0 %v2363
        %v2367 = vpop.xlane.xlu0 %2366
        %v2368 = vcvt.f32.s32 %v2365
        %v2369 = vcvt.f32.s32 %v2367
        %v2370 = vshll.u32 %v2369, 16
        %v2371 = vadd.s32 %v2370, %v2368
        %v2372 = vsel %vm458, %v2371, %v2356
        %vm2373 = vcmp.eq.s32.totalorder %v453, %v2371
        %v2374 = vsel %vm2373, %v1549, 0
        %v2375 = vsel %vm1392, %v2374, 0
        %v2376 = vand.u32 %v2375, 65535
        %v2377 = vshrl.u32 %v2375, 16
        %v2378 = vcvt.s32.f32 %v2376
        %v2379 = vcvt.s32.f32 %v2377
        %2380 = vadd.xlane.f32.xlu0 %v2378
        %v2381 = vpop.xlane.xlu0 %2380
        %2382 = vadd.xlane.f32.xlu0 %v2379
        %v2383 = vpop.xlane.xlu0 %2382
        %v2384 = vcvt.f32.s32 %v2381
        %v2385 = vcvt.f32.s32 %v2383
        %v2386 = vshll.u32 %v2385, 16
        %v2387 = vadd.s32 %v2386, %v2384
        %v2388 = vsel %vm457, %v2387, %v2372
        %vm2389 = vcmask 64512
        %2390 = vst.msk [vmem:[%s435] sm:$0xff] %vm2389, %v2388
        %s2391 = sand.u32 %s229, 1
        %s2392 = sand.u32 %s229, 1
        %s2393 = smul.addr %s2392, 64
        %s2394 = scalar_lea.vmem [#allocation6], %s2393
        %p2395 = scmp.lt.s32.totalorder %s27, 1
        %s2396 = scalar_select %p2395, %s27, 1
        %s2397 = smul.addr %s2396, 8
        %s2398 = scalar_lea.vmem %s10, %s2397
        %p2399 = scmp.lt.s32.totalorder %s27, 1
        %s2400 = scalar_select %p2399, %s27, 1
        %s2401 = smul.addr %s2400, 8
        %s2402 = scalar_lea.vmem %s11, %s2401
        // Predicated region
        $region65: #{tpu_custom_call.1} parent=55 // pred_check
          %p2403 = pneg %p239
        $region66: #{tpu_custom_call.1} parent=55 // pred_check_branch
          %2405 = sbr.rel (%p2403) target = $region68
        $region67: #{tpu_custom_call.1} parent=55 // pred_region
          %s2406 = smul.addr %s27, 8
          %s2407 = scalar_lea.vmem %s9, %s2406
          // Predicated region
          $region69: #{tpu_custom_call.1} parent=67 // pred_check
            _
          $region70: #{tpu_custom_call.1} parent=67 // pred_check_branch
            %2409 = sbr.rel (0) target = $region72
          $region71: #{tpu_custom_call.1} parent=67 // pred_region
            // Predicated region
            $region73: #{tpu_custom_call.1} parent=71 // pred_check
              _
            $region74: #{tpu_custom_call.1} parent=71 // pred_check_branch
              %2411 = sbr.rel (0) target = $region76
            $region75: #{tpu_custom_call.1} parent=71 // pred_region
              // Predicated region
              $region88: #{tpu_custom_call.1} parent=75 // pred_check
                _
              $region89: #{tpu_custom_call.1} parent=75 // pred_check_branch
                %2440 = sbr.rel (0) target = $region91
              $region90: #{tpu_custom_call.1} parent=75 // pred_region
                loop: start=0, step=1, limit=1
                $region92: #{tpu_custom_call.1} parent=90 // loop_pre_header
                  _
                $region93: #{tpu_custom_call.1} parent=90 // loop_header
                  %s2442 = sphi 0, %s2446
                  %p2443 = scmp.ge.s32.totalorder %s2442, 1
                  %s2447 = sphi %s2394, %s2394
                  %s2448 = sphi %s2407, %s2407
                $region94: #{tpu_custom_call.1} parent=90 // loop_header_branch
                  %2445 = sbr.rel (%p2443) target = $region98
                $region95: #{tpu_custom_call.1} parent=90 // loop_body
                  %v2449 = vld [vmem:[%s2447] sm:$0xff]
                  %2450 = vst [vmem:[%s2448] sm:$0xff] %v2449
                  %v2451 = vld [vmem:[%s2447 + $0x8] sm:$0xff]
                  %2452 = vst [vmem:[%s2448 + $0x10] sm:$0xff] %v2451
                  %v2453 = vld [vmem:[%s2447 + $0x10] sm:$0xff]
                  %2454 = vst [vmem:[%s2448 + $0x20] sm:$0xff] %v2453
                  %v2455 = vld [vmem:[%s2447 + $0x18] sm:$0xff]
                  %2456 = vst [vmem:[%s2448 + $0x30] sm:$0xff] %v2455
                  %v2457 = vld [vmem:[%s2447 + $0x20] sm:$0xff]
                  %2458 = vst [vmem:[%s2448 + $0x40] sm:$0xff] %v2457
                  %v2459 = vld [vmem:[%s2447 + $0x28] sm:$0xff]
                  %2460 = vst [vmem:[%s2448 + $0x50] sm:$0xff] %v2459
                  %v2461 = vld [vmem:[%s2447 + $0x30] sm:$0xff]
                  %2462 = vst [vmem:[%s2448 + $0x60] sm:$0xff] %v2461
                  %v2463 = vld [vmem:[%s2447 + $0x38] sm:$0xff]
                  %2464 = vst [vmem:[%s2448 + $0x70] sm:$0xff] %v2463
                $region96: #{tpu_custom_call.1} parent=90 // loop_footer
                  %s2446 = sadd.s32 1, %s2442
                $region97: #{tpu_custom_call.1} parent=90 // loop_footer_branch
                  %2441 = sbr.rel target = $region93
                $region98: #{tpu_custom_call.1} parent=90 // loop_exit
                  _
              $region91: #{tpu_custom_call.1} parent=75 // pred_fallthru
                _
              // Predicated region
              $region99: #{tpu_custom_call.1} parent=75 // pred_check
                _
              $region100: #{tpu_custom_call.1} parent=75 // pred_check_branch
                %2466 = sbr.rel target = $region102
              $region101: #{tpu_custom_call.1} parent=75 // pred_region
                _
              $region102: #{tpu_custom_call.1} parent=75 // pred_fallthru
                _
            $region76: #{tpu_custom_call.1} parent=71 // pred_fallthru
              _
            // Predicated region
            $region77: #{tpu_custom_call.1} parent=71 // pred_check
              _
            $region78: #{tpu_custom_call.1} parent=71 // pred_check_branch
              %2413 = sbr.rel target = $region80
            $region79: #{tpu_custom_call.1} parent=71 // pred_region
              loop: start=0, step=1, limit=1
              $region81: #{tpu_custom_call.1} parent=79 // loop_pre_header
                _
              $region82: #{tpu_custom_call.1} parent=79 // loop_header
                %s2416 = sphi 0, %s2420
                %p2417 = scmp.ge.s32.totalorder %s2416, 1
                %s2421 = sphi %s2394, %s2394
                %s2422 = sphi %s2407, %s2407
              $region83: #{tpu_custom_call.1} parent=79 // loop_header_branch
                %2419 = sbr.rel (%p2417) target = $region87
              $region84: #{tpu_custom_call.1} parent=79 // loop_body
                %v2423 = vld [vmem:[%s2421] sm:$0xff]
                %2424 = vst [vmem:[%s2422] sm:$0xff] %v2423
                %v2425 = vld [vmem:[%s2421 + $0x8] sm:$0xff]
                %2426 = vst [vmem:[%s2422 + $0x10] sm:$0xff] %v2425
                %v2427 = vld [vmem:[%s2421 + $0x10] sm:$0xff]
                %2428 = vst [vmem:[%s2422 + $0x20] sm:$0xff] %v2427
                %v2429 = vld [vmem:[%s2421 + $0x18] sm:$0xff]
                %2430 = vst [vmem:[%s2422 + $0x30] sm:$0xff] %v2429
                %v2431 = vld [vmem:[%s2421 + $0x20] sm:$0xff]
                %2432 = vst [vmem:[%s2422 + $0x40] sm:$0xff] %v2431
                %v2433 = vld [vmem:[%s2421 + $0x28] sm:$0xff]
                %2434 = vst [vmem:[%s2422 + $0x50] sm:$0xff] %v2433
                %v2435 = vld [vmem:[%s2421 + $0x30] sm:$0xff]
                %2436 = vst [vmem:[%s2422 + $0x60] sm:$0xff] %v2435
                %v2437 = vld [vmem:[%s2421 + $0x38] sm:$0xff]
                %2438 = vst [vmem:[%s2422 + $0x70] sm:$0xff] %v2437
              $region85: #{tpu_custom_call.1} parent=79 // loop_footer
                %s2420 = sadd.s32 1, %s2416
              $region86: #{tpu_custom_call.1} parent=79 // loop_footer_branch
                %2415 = sbr.rel target = $region82
              $region87: #{tpu_custom_call.1} parent=79 // loop_exit
                _
            $region80: #{tpu_custom_call.1} parent=71 // pred_fallthru
              _
          $region72: #{tpu_custom_call.1} parent=67 // pred_fallthru
            _
          %2467 = vnop
        $region68: #{tpu_custom_call.1} parent=55 // pred_fallthru
          _
        // Predicated region
        $region103: #{tpu_custom_call.1} parent=55 // pred_check
          %p2468 = pneg %p265
        $region104: #{tpu_custom_call.1} parent=55 // pred_check_branch
          %2470 = sbr.rel (%p2468) target = $region106
        $region105: #{tpu_custom_call.1} parent=55 // pred_region
          _
        $region106: #{tpu_custom_call.1} parent=55 // pred_fallthru
          _
        // Predicated region
        $region107: #{tpu_custom_call.1} parent=55 // pred_check
          %p2471 = pneg %p291
        $region108: #{tpu_custom_call.1} parent=55 // pred_check_branch
          %2473 = sbr.rel (%p2471) target = $region110
        $region109: #{tpu_custom_call.1} parent=55 // pred_region
          _
        $region110: #{tpu_custom_call.1} parent=55 // pred_fallthru
          _
      $region56: #{tpu_custom_call.1} parent=5 // pred_fallthru
        _
      %p2474 = scmp.le.s32.totalorder 2, %s22
      // Predicated region
      $region111: #{tpu_custom_call.1} parent=5 // pred_check
        %p2475 = pneg %p2474
      $region112: #{tpu_custom_call.1} parent=5 // pred_check_branch
        %2477 = sbr.rel (%p2475) target = $region114
      $region113: #{tpu_custom_call.1} parent=5 // pred_region
        %s2478 = ssub.s32 %s22, 2
        // Predicated region
        $region115: #{tpu_custom_call.1} parent=113 // pred_check
          %p2479 = pneg %p245
        $region116: #{tpu_custom_call.1} parent=113 // pred_check_branch
          %2481 = sbr.rel (%p2479) target = $region118
        $region117: #{tpu_custom_call.1} parent=113 // pred_region
          %s2482 = sand.u32 %s230, 1
          %s2483 = sand.u32 %s230, 1
          %s2484 = smul.addr %s2483, 64
          %s2485 = scalar_lea.vmem [#allocation6], %s2484
        $region118: #{tpu_custom_call.1} parent=113 // pred_fallthru
          _
        // Predicated region
        $region119: #{tpu_custom_call.1} parent=113 // pred_check
          %p2486 = pneg %p271
        $region120: #{tpu_custom_call.1} parent=113 // pred_check_branch
          %2488 = sbr.rel (%p2486) target = $region122
        $region121: #{tpu_custom_call.1} parent=113 // pred_region
          %p2489 = scmp.lt.s32.totalorder %s28, 1
          %s2490 = scalar_select %p2489, %s28, 1
          %s2491 = smul.addr %s2490, 8
          %s2492 = scalar_lea.vmem %s10, %s2491
        $region122: #{tpu_custom_call.1} parent=113 // pred_fallthru
          _
        // Predicated region
        $region123: #{tpu_custom_call.1} parent=113 // pred_check
          %p2493 = pneg %p297
        $region124: #{tpu_custom_call.1} parent=113 // pred_check_branch
          %2495 = sbr.rel (%p2493) target = $region126
        $region125: #{tpu_custom_call.1} parent=113 // pred_region
          %p2496 = scmp.lt.s32.totalorder %s28, 1
          %s2497 = scalar_select %p2496, %s28, 1
          %s2498 = smul.addr %s2497, 8
          %s2499 = scalar_lea.vmem %s11, %s2498
        $region126: #{tpu_custom_call.1} parent=113 // pred_fallthru
          _
      $region114: #{tpu_custom_call.1} parent=5 // pred_fallthru
        _
    $region6: #{tpu_custom_call.1} parent=1 // loop_footer
      %s26 = sadd.s32 1, %s22
    $region7: #{tpu_custom_call.1} parent=1 // loop_footer_branch
      %21 = sbr.rel target = $region3
    $region8: #{tpu_custom_call.1} parent=1 // loop_exit
      _
    %2500 = vsyncpa [#allocation3], 1
    %s2501 = scalar_lea.sflag [#allocation3], 1
    %2502 = vsyncpa %s2501, 1
    %2503 = vsyncpa [#allocation5], 1

</llo_original>
